<compile_context>
chip_gen: v5e
topology: v5e:2x2
jax: 0.10.0
libtpu: 0.0.40
codegen_flags: <defaults>
</compile_context>

<pallas_src>
import functools
import numpy as np
import jax
import jax.numpy as jnp
from jax.experimental import pallas as pl
from jax.experimental.pallas import tpu as pltpu

LANES = 128     # MXU / lane width granularity for the Cout padding
ROW_TILE = 512  # target conv-output rows (Ho_tile * Wo) computed per grid step
TM_BN = 1024    # row tile for the streaming BN+ReLU pass (memory-bound -> big tiles)


def _round_up(x, m):
    return (x + m - 1) // m * m


def _triple(v):
    if isinstance(v, (tuple, list)):
        assert len(v) == 3
        return tuple(int(i) for i in v)
    return (int(v),) * 3


def _ds(start, size, stride):
    return pl.ds(start, size) if stride == 1 else pl.ds(start, size, stride)


def _conv_vmem_limit():
    """vmem_limit_bytes sized from the chip's VMEM capacity (review item 4)."""
    cap = 64 * 2**20
    try:
        cap = int(pltpu.get_tpu_info().vmem_capacity_bytes)
    except Exception:
        pass
    return int(min(100 * 2**20, int(0.85 * cap)))


# ---------------- Pallas kernels ----------------

def _conv_stats_kernel(x_ref, w_ref, y_ref, stats_ref, patch_ref, *,
                       kd, kh, kw, sd, sh, sw, TH, Wo, Cin, Cout, Coutp):
    # x_ref:     (1, Dp, Hp_pad, Wp, Cin)  bf16 — full padded sample, resident across
    #                                            the Do and Ho-tile grid axes.
    # w_ref:     (kd*kh*kw*Cin, Coutp)     bf16 — resident across the whole grid.
    # y_ref:     (1, 1, 1, TH*Wo, Cout)    bf16 — conv output block for (n, do, ht).
    # stats_ref: (1, 1, 1, 2, Coutp)       f32  — per-block [sum; sum_sq] partials.
    # patch_ref: (TH*Wo, kd*kh*kw*Cin)     f32  — in-VMEM im2col patch (scratch).
    do = pl.program_id(1)
    ht = pl.program_id(2)
    THW = TH * Wo

    # ---- assemble the im2col patch in VMEM: one load + one narrow store per tap ----
    for i in range(kd):
        d = do * sd + i
        for j in range(kh):
            h0 = ht * (TH * sh) + j
            for l in range(kw):
                kidx = (i * kh + j) * kw + l
                piece = x_ref[0, pl.ds(d, 1), _ds(h0, TH, sh), _ds(l, Wo, sw), :]
                piece = piece.reshape(THW, Cin).astype(jnp.float32)
                patch_ref[:, kidx * Cin:(kidx + 1) * Cin] = piece

    # ---- single MXU matmul with the taps folded into the contraction dimension ----
    patch = patch_ref[...].astype(jnp.bfloat16)                       # (THW, KK)
    acc = jnp.dot(patch, w_ref[...], preferred_element_type=jnp.float32)  # (THW, Coutp)

    # ---- outputs: bf16 y (only the real Cout lanes) + f32 per-block channel stats ----
    y_ref[...] = acc[:, :Cout].astype(y_ref.dtype).reshape(1, 1, 1, THW, Cout)
    s1 = jnp.sum(acc, axis=0, keepdims=True)                          # (1, Coutp)
    s2 = jnp.sum(acc * acc, axis=0, keepdims=True)                    # (1, Coutp)
    stats_ref[...] = jnp.concatenate([s1, s2], axis=0).reshape(1, 1, 1, 2, Coutp)


def _bn_relu_kernel(y_ref, scale_ref, shift_ref, o_ref):
    # y * (gamma * invstd) + (beta - mean * gamma * invstd), then ReLU.
    o_ref[...] = jnp.maximum(
        y_ref[...].astype(jnp.float32) * scale_ref[...] + shift_ref[...], 0.0)


# ---------------- wrapper ----------------

def conv3d_bn_relu(x, w, b, gamma, beta, *, stride, padding, eps=1e-5):
    """x: (N, Cin, D, H, W) NCDHW.  w: (Cout, Cin, kd, kh, kw).  Returns NCDHW f32.

    Conv3d + BatchNorm3d (training-mode batch stats) + ReLU.  The conv bias is ignored:
    it cancels exactly against BN's mean subtraction (verified against the reference).
    """
    del b  # cancels with train-mode BatchNorm
    N, Cin, D, H, W = x.shape
    Cout, _, kd, kh, kw = w.shape
    sd, sh, sw = _triple(stride)
    pd, ph, pw = _triple(padding)

    Dp, Hp, Wp = D + 2 * pd, H + 2 * ph, W + 2 * pw
    Do = (Dp - kd) // sd + 1
    Ho = (Hp - kh) // sh + 1
    Wo = (Wp - kw) // sw + 1

    # MXU output width: 128 (full 128-wide MXU on v5e); multiples of 256 above that
    # to fill the 256-wide MXU on v6e/v7x (review items 9, 10).
    Coutp = 128 if Cout <= 128 else _round_up(Cout, 256)

    # Ho tiling keeps the f32 result block / im2col patch bounded (review item 5).
    TH = min(Ho, max(1, ROW_TILE // Wo))
    NH = -(-Ho // TH)                # cdiv
    THW = TH * Wo
    Ho_pad = NH * TH
    Hp_pad = max(Hp, (Ho_pad - 1) * sh + kh)   # extra zero rows so padded tiles stay in-bounds
    KK = kd * kh * kw * Cin

    # NCDHW -> NDHWC once, zero-pad spatially, cast to bf16 (halves DMA + VMEM slab).
    x_cl = jnp.transpose(x, (0, 2, 3, 4, 1))
    x_cl = jnp.pad(x_cl, ((0, 0), (pd, pd), (ph, Hp_pad - H - ph),
                          (pw, pw), (0, 0))).astype(jnp.bfloat16)

    # (Cout, Cin, kd, kh, kw) -> (kd*kh*kw*Cin, Coutp), bf16, zero-pad the Cout lanes.
    w_t = jnp.transpose(w, (2, 3, 4, 1, 0)).reshape(KK, Cout)
    w_t = jnp.pad(w_t, ((0, 0), (0, Coutp - Cout))).astype(jnp.bfloat16)

    kern = functools.partial(_conv_stats_kernel, kd=kd, kh=kh, kw=kw,
                             sd=sd, sh=sh, sw=sw, TH=TH, Wo=Wo,
                             Cin=Cin, Cout=Cout, Coutp=Coutp)

    # 1) fused conv (+ per-block channel statistics).  Grid = (N, Do, NH); the padded
    #    sample block is constant along the Do/NH axes -> DMA'd once per sample.
    y, stats = pl.pallas_call(
        kern,
        out_shape=(jax.ShapeDtypeStruct((N, Do, NH, THW, Cout), jnp.bfloat16),
                   jax.ShapeDtypeStruct((N, Do, NH, 2, Coutp), jnp.float32)),
        grid=(N, Do, NH),
        in_specs=[
            pl.BlockSpec((1, Dp, Hp_pad, Wp, Cin), lambda n, d, h: (n, 0, 0, 0, 0)),
            pl.BlockSpec((KK, Coutp), lambda n, d, h: (0, 0)),
        ],
        out_specs=(
            pl.BlockSpec((1, 1, 1, THW, Cout), lambda n, d, h: (n, d, h, 0, 0)),
            pl.BlockSpec((1, 1, 1, 2, Coutp), lambda n, d, h: (n, d, h, 0, 0)),
        ),
        scratch_shapes=[pltpu.VMEM((THW, KK), jnp.float32)],
        compiler_params=pltpu.CompilerParams(
            # shard only the batch axis across cores (review item 8)
            dimension_semantics=("parallel", "arbitrary", "arbitrary"),
            vmem_limit_bytes=_conv_vmem_limit()),
    )(x_cl, w_t)

    # 2) scalar BN math (tiny, plain JAX).  Padded Ho rows contribute exactly 0 to the
    #    sums (zero input rows, no bias), so dividing by the true count M is exact.
    #    NOTE: E[y^2]-E[y]^2 in f32 can lose precision when |mean| >> std at very large M;
    #    dropping the conv bias (above) keeps the mean small, which helps conditioning.
    M = N * Do * Ho * Wo
    ssum = jnp.sum(stats, axis=(0, 1, 2))                    # (2, Coutp)
    mean = ssum[0, :Cout] / M
    var = jnp.maximum(ssum[1, :Cout] / M - mean * mean, 0.0)  # biased variance (BN norm)
    inv = gamma.astype(jnp.float32) * jax.lax.rsqrt(var + eps)
    scale_c = inv                                             # (Cout,)
    shift_c = beta.astype(jnp.float32) - mean * inv           # (Cout,)

    # 3) normalize + affine + ReLU.  Pack f = 128//Cout output positions per lane row so
    #    the tiles are lane-dense even for tiny Cout (pure metadata reshape in XLA).
    f = max(1, LANES // Cout)
    LW = f * Cout
    L = N * Do * NH * THW * Cout
    rows = -(-L // LW)
    TMb = min(TM_BN, _round_up(rows, 8))
    rows_p = _round_up(rows, TMb)
    y_flat = jnp.pad(y.reshape(-1), (0, rows_p * LW - L)).reshape(rows_p, LW)
    scale_r = jnp.tile(scale_c, f).reshape(1, LW)
    shift_r = jnp.tile(shift_c, f).reshape(1, LW)

    out = pl.pallas_call(
        _bn_relu_kernel,
        out_shape=jax.ShapeDtypeStruct((rows_p, LW), jnp.float32),
        grid=(rows_p // TMb,),
        in_specs=[pl.BlockSpec((TMb, LW), lambda i: (i, 0)),
                  pl.BlockSpec((1, LW), lambda i: (0, 0)),
                  pl.BlockSpec((1, LW), lambda i: (0, 0))],
        out_specs=pl.BlockSpec((TMb, LW), lambda i: (i, 0)),
        compiler_params=pltpu.CompilerParams(dimension_semantics=("parallel",)),
    )(y_flat, scale_r, shift_r)

    out = out.reshape(-1)[:L].reshape(N, Do, NH * TH, Wo, Cout)[:, :, :Ho]
    return jnp.transpose(out, (0, 4, 1, 2, 3))                # back to NCDHW


# ---------------- pure-JAX reference (for correctness check) ----------------

def _reference(x, w, b, gamma, beta, *, stride, padding, eps=1e-5):
    s, p = _triple(stride), _triple(padding)
    y = jax.lax.conv_general_dilated(
        x, w, window_strides=s, padding=[(p[0], p[0]), (p[1], p[1]), (p[2], p[2])],
        dimension_numbers=("NCDHW", "OIDHW", "NCDHW"))
    y = y + b.reshape(1, -1, 1, 1, 1)
    mean = jnp.mean(y, axis=(0, 2, 3, 4), keepdims=True)
    var = jnp.mean((y - mean) ** 2, axis=(0, 2, 3, 4), keepdims=True)
    y = (y - mean) / jnp.sqrt(var + eps)
    y = y * gamma.reshape(1, -1, 1, 1, 1) + beta.reshape(1, -1, 1, 1, 1)
    return jnp.maximum(y, 0.0)


if __name__ == "__main__":
    # small shapes consistent with the module: NCDHW input, k=3, s=1, p=1
    N, Cin, Cout, D, H, W = 2, 4, 8, 8, 8, 8
    k, s, p = 3, 1, 1

    key = jax.random.PRNGKey(0)
    kx, kw_, kb = jax.random.split(key, 3)
    x = jax.random.normal(kx, (N, Cin, D, H, W), dtype=jnp.float32)
    w = jax.random.normal(kw_, (Cout, Cin, k, k, k), dtype=jnp.float32) * 0.05
    b = jax.random.normal(kb, (Cout,), dtype=jnp.float32) * 0.05
    gamma = jnp.ones((Cout,), dtype=jnp.float32)   # BatchNorm3d default init
    beta = jnp.zeros((Cout,), dtype=jnp.float32)

    fn = jax.jit(functools.partial(conv3d_bn_relu, stride=s, padding=p))
    out = jax.block_until_ready(fn(x, w, b, gamma, beta))

    ref = _reference(x, w, b, gamma, beta, stride=s, padding=p)
    np.testing.assert_allclose(np.asarray(out), np.asarray(ref), rtol=5e-2, atol=5e-2)

    print("KERNEL_OK")
</pallas_src>

<mosaic_0001>
module attributes {stable_mosaic.version = 11 : i64} {
  func.func @_conv_stats_kernel(%arg0: i32, %arg1: i32, %arg2: i32, %arg3: memref<1x10x10x10x4xbf16, #tpu.memory_space<vmem>>, %arg4: memref<108x128xbf16, #tpu.memory_space<vmem>>, %arg5: memref<1x1x1x64x8xbf16, #tpu.memory_space<vmem>>, %arg6: memref<1x1x1x2x128xf32, #tpu.memory_space<vmem>>, %arg7: memref<64x108xf32, #tpu.memory_space<vmem>>) attributes {dimension_semantics = [#tpu.dimension_semantics<parallel>, #tpu.dimension_semantics<arbitrary>, #tpu.dimension_semantics<arbitrary>], iteration_bounds = array<i64: 2, 8, 1>, scalar_prefetch = 0 : i64, scratch_operands = 1 : i64, tpu.core_type = #tpu.core_type<tc>, window_params = [{transform_indices = @transform_0, window_bounds = array<i64: 1, 10, 10, 10, 4>}, {pipeline_mode = #tpu.pipeline_mode<synchronous>, transform_indices = @transform_1, window_bounds = array<i64: 108, 128>}, {transform_indices = @transform_2, window_bounds = array<i64: 1, 1, 1, 64, 8>}, {transform_indices = @transform_3, window_bounds = array<i64: 1, 1, 1, 2, 128>}]} {
    %c1_i32 = arith.constant 1 : i32
    %0 = arith.muli %arg1, %c1_i32 : i32
    %c0_i32 = arith.constant 0 : i32
    %1 = arith.addi %0, %c0_i32 : i32
    %c8_i32 = arith.constant 8 : i32
    %2 = arith.muli %arg2, %c8_i32 : i32
    %c0_i32_0 = arith.constant 0 : i32
    %3 = arith.addi %2, %c0_i32_0 : i32
    %c0 = arith.constant 0 : index
    %4 = arith.index_cast %1 : i32 to index
    %5 = arith.index_cast %3 : i32 to index
    %c0_1 = arith.constant 0 : index
    %c0_2 = arith.constant 0 : index
    %6 = vector.load %arg3[%c0, %4, %5, %c0_1, %c0_2] : memref<1x10x10x10x4xbf16, #tpu.memory_space<vmem>>, vector<1x1x8x8x4xbf16>
    %7 = vector.shape_cast %6 : vector<1x1x8x8x4xbf16> to vector<1x8x8x4xbf16>
    %8 = vector.shape_cast %7 : vector<1x8x8x4xbf16> to vector<64x4xbf16>
    %9 = arith.extf %8 : vector<64x4xbf16> to vector<64x4xf32>
    %c0_3 = arith.constant 0 : index
    %c0_4 = arith.constant 0 : index
    %10 = vector.load %arg7[%c0_3, %c0_4] : memref<64x108xf32, #tpu.memory_space<vmem>>, vector<64x4xf32>
    tpu.vector_store %arg7[%c0_3, %c0_4], %9 {strides = array<i32>} : memref<64x108xf32, #tpu.memory_space<vmem>>, vector<64x4xf32>,
    %c0_5 = arith.constant 0 : index
    %11 = arith.index_cast %1 : i32 to index
    %12 = arith.index_cast %3 : i32 to index
    %c1 = arith.constant 1 : index
    %c0_6 = arith.constant 0 : index
    %13 = vector.load %arg3[%c0_5, %11, %12, %c1, %c0_6] : memref<1x10x10x10x4xbf16, #tpu.memory_space<vmem>>, vector<1x1x8x8x4xbf16>
    %14 = vector.shape_cast %13 : vector<1x1x8x8x4xbf16> to vector<1x8x8x4xbf16>
    %15 = vector.shape_cast %14 : vector<1x8x8x4xbf16> to vector<64x4xbf16>
    %16 = arith.extf %15 : vector<64x4xbf16> to vector<64x4xf32>
    %c0_7 = arith.constant 0 : index
    %c4 = arith.constant 4 : index
    %17 = vector.load %arg7[%c0_7, %c4] : memref<64x108xf32, #tpu.memory_space<vmem>>, vector<64x4xf32>
    tpu.vector_store %arg7[%c0_7, %c4], %16 {strides = array<i32>} : memref<64x108xf32, #tpu.memory_space<vmem>>, vector<64x4xf32>,
    %c0_8 = arith.constant 0 : index
    %18 = arith.index_cast %1 : i32 to index
    %19 = arith.index_cast %3 : i32 to index
    %c2 = arith.constant 2 : index
    %c0_9 = arith.constant 0 : index
    %20 = vector.load %arg3[%c0_8, %18, %19, %c2, %c0_9] : memref<1x10x10x10x4xbf16, #tpu.memory_space<vmem>>, vector<1x1x8x8x4xbf16>
    %21 = vector.shape_cast %20 : vector<1x1x8x8x4xbf16> to vector<1x8x8x4xbf16>
    %22 = vector.shape_cast %21 : vector<1x8x8x4xbf16> to vector<64x4xbf16>
    %23 = arith.extf %22 : vector<64x4xbf16> to vector<64x4xf32>
    %c0_10 = arith.constant 0 : index
    %c8 = arith.constant 8 : index
    %24 = vector.load %arg7[%c0_10, %c8] : memref<64x108xf32, #tpu.memory_space<vmem>>, vector<64x4xf32>
    tpu.vector_store %arg7[%c0_10, %c8], %23 {strides = array<i32>} : memref<64x108xf32, #tpu.memory_space<vmem>>, vector<64x4xf32>,
    %c8_i32_11 = arith.constant 8 : i32
    %25 = arith.muli %arg2, %c8_i32_11 : i32
    %c1_i32_12 = arith.constant 1 : i32
    %26 = arith.addi %25, %c1_i32_12 : i32
    %c0_13 = arith.constant 0 : index
    %27 = arith.index_cast %1 : i32 to index
    %28 = arith.index_cast %26 : i32 to index
    %c0_14 = arith.constant 0 : index
    %c0_15 = arith.constant 0 : index
    %29 = vector.load %arg3[%c0_13, %27, %28, %c0_14, %c0_15] : memref<1x10x10x10x4xbf16, #tpu.memory_space<vmem>>, vector<1x1x8x8x4xbf16>
    %30 = vector.shape_cast %29 : vector<1x1x8x8x4xbf16> to vector<1x8x8x4xbf16>
    %31 = vector.shape_cast %30 : vector<1x8x8x4xbf16> to vector<64x4xbf16>
    %32 = arith.extf %31 : vector<64x4xbf16> to vector<64x4xf32>
    %c0_16 = arith.constant 0 : index
    %c12 = arith.constant 12 : index
    %33 = vector.load %arg7[%c0_16, %c12] : memref<64x108xf32, #tpu.memory_space<vmem>>, vector<64x4xf32>
    tpu.vector_store %arg7[%c0_16, %c12], %32 {strides = array<i32>} : memref<64x108xf32, #tpu.memory_space<vmem>>, vector<64x4xf32>,
    %c0_17 = arith.constant 0 : index
    %34 = arith.index_cast %1 : i32 to index
    %35 = arith.index_cast %26 : i32 to index
    %c1_18 = arith.constant 1 : index
    %c0_19 = arith.constant 0 : index
    %36 = vector.load %arg3[%c0_17, %34, %35, %c1_18, %c0_19] : memref<1x10x10x10x4xbf16, #tpu.memory_space<vmem>>, vector<1x1x8x8x4xbf16>
    %37 = vector.shape_cast %36 : vector<1x1x8x8x4xbf16> to vector<1x8x8x4xbf16>
    %38 = vector.shape_cast %37 : vector<1x8x8x4xbf16> to vector<64x4xbf16>
    %39 = arith.extf %38 : vector<64x4xbf16> to vector<64x4xf32>
    %c0_20 = arith.constant 0 : index
    %c16 = arith.constant 16 : index
    %40 = vector.load %arg7[%c0_20, %c16] : memref<64x108xf32, #tpu.memory_space<vmem>>, vector<64x4xf32>
    tpu.vector_store %arg7[%c0_20, %c16], %39 {strides = array<i32>} : memref<64x108xf32, #tpu.memory_space<vmem>>, vector<64x4xf32>,
    %c0_21 = arith.constant 0 : index
    %41 = arith.index_cast %1 : i32 to index
    %42 = arith.index_cast %26 : i32 to index
    %c2_22 = arith.constant 2 : index
    %c0_23 = arith.constant 0 : index
    %43 = vector.load %arg3[%c0_21, %41, %42, %c2_22, %c0_23] : memref<1x10x10x10x4xbf16, #tpu.memory_space<vmem>>, vector<1x1x8x8x4xbf16>
    %44 = vector.shape_cast %43 : vector<1x1x8x8x4xbf16> to vector<1x8x8x4xbf16>
    %45 = vector.shape_cast %44 : vector<1x8x8x4xbf16> to vector<64x4xbf16>
    %46 = arith.extf %45 : vector<64x4xbf16> to vector<64x4xf32>
    %c0_24 = arith.constant 0 : index
    %c20 = arith.constant 20 : index
    %47 = vector.load %arg7[%c0_24, %c20] : memref<64x108xf32, #tpu.memory_space<vmem>>, vector<64x4xf32>
    tpu.vector_store %arg7[%c0_24, %c20], %46 {strides = array<i32>} : memref<64x108xf32, #tpu.memory_space<vmem>>, vector<64x4xf32>,
    %c8_i32_25 = arith.constant 8 : i32
    %48 = arith.muli %arg2, %c8_i32_25 : i32
    %c2_i32 = arith.constant 2 : i32
    %49 = arith.addi %48, %c2_i32 : i32
    %c0_26 = arith.constant 0 : index
    %50 = arith.index_cast %1 : i32 to index
    %51 = arith.index_cast %49 : i32 to index
    %c0_27 = arith.constant 0 : index
    %c0_28 = arith.constant 0 : index
    %52 = vector.load %arg3[%c0_26, %50, %51, %c0_27, %c0_28] : memref<1x10x10x10x4xbf16, #tpu.memory_space<vmem>>, vector<1x1x8x8x4xbf16>
    %53 = vector.shape_cast %52 : vector<1x1x8x8x4xbf16> to vector<1x8x8x4xbf16>
    %54 = vector.shape_cast %53 : vector<1x8x8x4xbf16> to vector<64x4xbf16>
    %55 = arith.extf %54 : vector<64x4xbf16> to vector<64x4xf32>
    %c0_29 = arith.constant 0 : index
    %c24 = arith.constant 24 : index
    %56 = vector.load %arg7[%c0_29, %c24] : memref<64x108xf32, #tpu.memory_space<vmem>>, vector<64x4xf32>
    tpu.vector_store %arg7[%c0_29, %c24], %55 {strides = array<i32>} : memref<64x108xf32, #tpu.memory_space<vmem>>, vector<64x4xf32>,
    %c0_30 = arith.constant 0 : index
    %57 = arith.index_cast %1 : i32 to index
    %58 = arith.index_cast %49 : i32 to index
    %c1_31 = arith.constant 1 : index
    %c0_32 = arith.constant 0 : index
    %59 = vector.load %arg3[%c0_30, %57, %58, %c1_31, %c0_32] : memref<1x10x10x10x4xbf16, #tpu.memory_space<vmem>>, vector<1x1x8x8x4xbf16>
    %60 = vector.shape_cast %59 : vector<1x1x8x8x4xbf16> to vector<1x8x8x4xbf16>
    %61 = vector.shape_cast %60 : vector<1x8x8x4xbf16> to vector<64x4xbf16>
    %62 = arith.extf %61 : vector<64x4xbf16> to vector<64x4xf32>
    %c0_33 = arith.constant 0 : index
    %c28 = arith.constant 28 : index
    %63 = vector.load %arg7[%c0_33, %c28] : memref<64x108xf32, #tpu.memory_space<vmem>>, vector<64x4xf32>
    tpu.vector_store %arg7[%c0_33, %c28], %62 {strides = array<i32>} : memref<64x108xf32, #tpu.memory_space<vmem>>, vector<64x4xf32>,
    %c0_34 = arith.constant 0 : index
    %64 = arith.index_cast %1 : i32 to index
    %65 = arith.index_cast %49 : i32 to index
    %c2_35 = arith.constant 2 : index
    %c0_36 = arith.constant 0 : index
    %66 = vector.load %arg3[%c0_34, %64, %65, %c2_35, %c0_36] : memref<1x10x10x10x4xbf16, #tpu.memory_space<vmem>>, vector<1x1x8x8x4xbf16>
    %67 = vector.shape_cast %66 : vector<1x1x8x8x4xbf16> to vector<1x8x8x4xbf16>
    %68 = vector.shape_cast %67 : vector<1x8x8x4xbf16> to vector<64x4xbf16>
    %69 = arith.extf %68 : vector<64x4xbf16> to vector<64x4xf32>
    %c0_37 = arith.constant 0 : index
    %c32 = arith.constant 32 : index
    %70 = vector.load %arg7[%c0_37, %c32] : memref<64x108xf32, #tpu.memory_space<vmem>>, vector<64x4xf32>
    tpu.vector_store %arg7[%c0_37, %c32], %69 {strides = array<i32>} : memref<64x108xf32, #tpu.memory_space<vmem>>, vector<64x4xf32>,
    %c1_i32_38 = arith.constant 1 : i32
    %71 = arith.muli %arg1, %c1_i32_38 : i32
    %c1_i32_39 = arith.constant 1 : i32
    %72 = arith.addi %71, %c1_i32_39 : i32
    %c8_i32_40 = arith.constant 8 : i32
    %73 = arith.muli %arg2, %c8_i32_40 : i32
    %c0_i32_41 = arith.constant 0 : i32
    %74 = arith.addi %73, %c0_i32_41 : i32
    %c0_42 = arith.constant 0 : index
    %75 = arith.index_cast %72 : i32 to index
    %76 = arith.index_cast %74 : i32 to index
    %c0_43 = arith.constant 0 : index
    %c0_44 = arith.constant 0 : index
    %77 = vector.load %arg3[%c0_42, %75, %76, %c0_43, %c0_44] : memref<1x10x10x10x4xbf16, #tpu.memory_space<vmem>>, vector<1x1x8x8x4xbf16>
    %78 = vector.shape_cast %77 : vector<1x1x8x8x4xbf16> to vector<1x8x8x4xbf16>
    %79 = vector.shape_cast %78 : vector<1x8x8x4xbf16> to vector<64x4xbf16>
    %80 = arith.extf %79 : vector<64x4xbf16> to vector<64x4xf32>
    %c0_45 = arith.constant 0 : index
    %c36 = arith.constant 36 : index
    %81 = vector.load %arg7[%c0_45, %c36] : memref<64x108xf32, #tpu.memory_space<vmem>>, vector<64x4xf32>
    tpu.vector_store %arg7[%c0_45, %c36], %80 {strides = array<i32>} : memref<64x108xf32, #tpu.memory_space<vmem>>, vector<64x4xf32>,
    %c0_46 = arith.constant 0 : index
    %82 = arith.index_cast %72 : i32 to index
    %83 = arith.index_cast %74 : i32 to index
    %c1_47 = arith.constant 1 : index
    %c0_48 = arith.constant 0 : index
    %84 = vector.load %arg3[%c0_46, %82, %83, %c1_47, %c0_48] : memref<1x10x10x10x4xbf16, #tpu.memory_space<vmem>>, vector<1x1x8x8x4xbf16>
    %85 = vector.shape_cast %84 : vector<1x1x8x8x4xbf16> to vector<1x8x8x4xbf16>
    %86 = vector.shape_cast %85 : vector<1x8x8x4xbf16> to vector<64x4xbf16>
    %87 = arith.extf %86 : vector<64x4xbf16> to vector<64x4xf32>
    %c0_49 = arith.constant 0 : index
    %c40 = arith.constant 40 : index
    %88 = vector.load %arg7[%c0_49, %c40] : memref<64x108xf32, #tpu.memory_space<vmem>>, vector<64x4xf32>
    tpu.vector_store %arg7[%c0_49, %c40], %87 {strides = array<i32>} : memref<64x108xf32, #tpu.memory_space<vmem>>, vector<64x4xf32>,
    %c0_50 = arith.constant 0 : index
    %89 = arith.index_cast %72 : i32 to index
    %90 = arith.index_cast %74 : i32 to index
    %c2_51 = arith.constant 2 : index
    %c0_52 = arith.constant 0 : index
    %91 = vector.load %arg3[%c0_50, %89, %90, %c2_51, %c0_52] : memref<1x10x10x10x4xbf16, #tpu.memory_space<vmem>>, vector<1x1x8x8x4xbf16>
    %92 = vector.shape_cast %91 : vector<1x1x8x8x4xbf16> to vector<1x8x8x4xbf16>
    %93 = vector.shape_cast %92 : vector<1x8x8x4xbf16> to vector<64x4xbf16>
    %94 = arith.extf %93 : vector<64x4xbf16> to vector<64x4xf32>
    %c0_53 = arith.constant 0 : index
    %c44 = arith.constant 44 : index
    %95 = vector.load %arg7[%c0_53, %c44] : memref<64x108xf32, #tpu.memory_space<vmem>>, vector<64x4xf32>
    tpu.vector_store %arg7[%c0_53, %c44], %94 {strides = array<i32>} : memref<64x108xf32, #tpu.memory_space<vmem>>, vector<64x4xf32>,
    %c8_i32_54 = arith.constant 8 : i32
    %96 = arith.muli %arg2, %c8_i32_54 : i32
    %c1_i32_55 = arith.constant 1 : i32
    %97 = arith.addi %96, %c1_i32_55 : i32
    %c0_56 = arith.constant 0 : index
    %98 = arith.index_cast %72 : i32 to index
    %99 = arith.index_cast %97 : i32 to index
    %c0_57 = arith.constant 0 : index
    %c0_58 = arith.constant 0 : index
    %100 = vector.load %arg3[%c0_56, %98, %99, %c0_57, %c0_58] : memref<1x10x10x10x4xbf16, #tpu.memory_space<vmem>>, vector<1x1x8x8x4xbf16>
    %101 = vector.shape_cast %100 : vector<1x1x8x8x4xbf16> to vector<1x8x8x4xbf16>
    %102 = vector.shape_cast %101 : vector<1x8x8x4xbf16> to vector<64x4xbf16>
    %103 = arith.extf %102 : vector<64x4xbf16> to vector<64x4xf32>
    %c0_59 = arith.constant 0 : index
    %c48 = arith.constant 48 : index
    %104 = vector.load %arg7[%c0_59, %c48] : memref<64x108xf32, #tpu.memory_space<vmem>>, vector<64x4xf32>
    tpu.vector_store %arg7[%c0_59, %c48], %103 {strides = array<i32>} : memref<64x108xf32, #tpu.memory_space<vmem>>, vector<64x4xf32>,
    %c0_60 = arith.constant 0 : index
    %105 = arith.index_cast %72 : i32 to index
    %106 = arith.index_cast %97 : i32 to index
    %c1_61 = arith.constant 1 : index
    %c0_62 = arith.constant 0 : index
    %107 = vector.load %arg3[%c0_60, %105, %106, %c1_61, %c0_62] : memref<1x10x10x10x4xbf16, #tpu.memory_space<vmem>>, vector<1x1x8x8x4xbf16>
    %108 = vector.shape_cast %107 : vector<1x1x8x8x4xbf16> to vector<1x8x8x4xbf16>
    %109 = vector.shape_cast %108 : vector<1x8x8x4xbf16> to vector<64x4xbf16>
    %110 = arith.extf %109 : vector<64x4xbf16> to vector<64x4xf32>
    %c0_63 = arith.constant 0 : index
    %c52 = arith.constant 52 : index
    %111 = vector.load %arg7[%c0_63, %c52] : memref<64x108xf32, #tpu.memory_space<vmem>>, vector<64x4xf32>
    tpu.vector_store %arg7[%c0_63, %c52], %110 {strides = array<i32>} : memref<64x108xf32, #tpu.memory_space<vmem>>, vector<64x4xf32>,
    %c0_64 = arith.constant 0 : index
    %112 = arith.index_cast %72 : i32 to index
    %113 = arith.index_cast %97 : i32 to index
    %c2_65 = arith.constant 2 : index
    %c0_66 = arith.constant 0 : index
    %114 = vector.load %arg3[%c0_64, %112, %113, %c2_65, %c0_66] : memref<1x10x10x10x4xbf16, #tpu.memory_space<vmem>>, vector<1x1x8x8x4xbf16>
    %115 = vector.shape_cast %114 : vector<1x1x8x8x4xbf16> to vector<1x8x8x4xbf16>
    %116 = vector.shape_cast %115 : vector<1x8x8x4xbf16> to vector<64x4xbf16>
    %117 = arith.extf %116 : vector<64x4xbf16> to vector<64x4xf32>
    %c0_67 = arith.constant 0 : index
    %c56 = arith.constant 56 : index
    %118 = vector.load %arg7[%c0_67, %c56] : memref<64x108xf32, #tpu.memory_space<vmem>>, vector<64x4xf32>
    tpu.vector_store %arg7[%c0_67, %c56], %117 {strides = array<i32>} : memref<64x108xf32, #tpu.memory_space<vmem>>, vector<64x4xf32>,
    %c8_i32_68 = arith.constant 8 : i32
    %119 = arith.muli %arg2, %c8_i32_68 : i32
    %c2_i32_69 = arith.constant 2 : i32
    %120 = arith.addi %119, %c2_i32_69 : i32
    %c0_70 = arith.constant 0 : index
    %121 = arith.index_cast %72 : i32 to index
    %122 = arith.index_cast %120 : i32 to index
    %c0_71 = arith.constant 0 : index
    %c0_72 = arith.constant 0 : index
    %123 = vector.load %arg3[%c0_70, %121, %122, %c0_71, %c0_72] : memref<1x10x10x10x4xbf16, #tpu.memory_space<vmem>>, vector<1x1x8x8x4xbf16>
    %124 = vector.shape_cast %123 : vector<1x1x8x8x4xbf16> to vector<1x8x8x4xbf16>
    %125 = vector.shape_cast %124 : vector<1x8x8x4xbf16> to vector<64x4xbf16>
    %126 = arith.extf %125 : vector<64x4xbf16> to vector<64x4xf32>
    %c0_73 = arith.constant 0 : index
    %c60 = arith.constant 60 : index
    %127 = vector.load %arg7[%c0_73, %c60] : memref<64x108xf32, #tpu.memory_space<vmem>>, vector<64x4xf32>
    tpu.vector_store %arg7[%c0_73, %c60], %126 {strides = array<i32>} : memref<64x108xf32, #tpu.memory_space<vmem>>, vector<64x4xf32>,
    %c0_74 = arith.constant 0 : index
    %128 = arith.index_cast %72 : i32 to index
    %129 = arith.index_cast %120 : i32 to index
    %c1_75 = arith.constant 1 : index
    %c0_76 = arith.constant 0 : index
    %130 = vector.load %arg3[%c0_74, %128, %129, %c1_75, %c0_76] : memref<1x10x10x10x4xbf16, #tpu.memory_space<vmem>>, vector<1x1x8x8x4xbf16>
    %131 = vector.shape_cast %130 : vector<1x1x8x8x4xbf16> to vector<1x8x8x4xbf16>
    %132 = vector.shape_cast %131 : vector<1x8x8x4xbf16> to vector<64x4xbf16>
    %133 = arith.extf %132 : vector<64x4xbf16> to vector<64x4xf32>
    %c0_77 = arith.constant 0 : index
    %c64 = arith.constant 64 : index
    %134 = vector.load %arg7[%c0_77, %c64] : memref<64x108xf32, #tpu.memory_space<vmem>>, vector<64x4xf32>
    tpu.vector_store %arg7[%c0_77, %c64], %133 {strides = array<i32>} : memref<64x108xf32, #tpu.memory_space<vmem>>, vector<64x4xf32>,
    %c0_78 = arith.constant 0 : index
    %135 = arith.index_cast %72 : i32 to index
    %136 = arith.index_cast %120 : i32 to index
    %c2_79 = arith.constant 2 : index
    %c0_80 = arith.constant 0 : index
    %137 = vector.load %arg3[%c0_78, %135, %136, %c2_79, %c0_80] : memref<1x10x10x10x4xbf16, #tpu.memory_space<vmem>>, vector<1x1x8x8x4xbf16>
    %138 = vector.shape_cast %137 : vector<1x1x8x8x4xbf16> to vector<1x8x8x4xbf16>
    %139 = vector.shape_cast %138 : vector<1x8x8x4xbf16> to vector<64x4xbf16>
    %140 = arith.extf %139 : vector<64x4xbf16> to vector<64x4xf32>
    %c0_81 = arith.constant 0 : index
    %c68 = arith.constant 68 : index
    %141 = vector.load %arg7[%c0_81, %c68] : memref<64x108xf32, #tpu.memory_space<vmem>>, vector<64x4xf32>
    tpu.vector_store %arg7[%c0_81, %c68], %140 {strides = array<i32>} : memref<64x108xf32, #tpu.memory_space<vmem>>, vector<64x4xf32>,
    %c1_i32_82 = arith.constant 1 : i32
    %142 = arith.muli %arg1, %c1_i32_82 : i32
    %c2_i32_83 = arith.constant 2 : i32
    %143 = arith.addi %142, %c2_i32_83 : i32
    %c8_i32_84 = arith.constant 8 : i32
    %144 = arith.muli %arg2, %c8_i32_84 : i32
    %c0_i32_85 = arith.constant 0 : i32
    %145 = arith.addi %144, %c0_i32_85 : i32
    %c0_86 = arith.constant 0 : index
    %146 = arith.index_cast %143 : i32 to index
    %147 = arith.index_cast %145 : i32 to index
    %c0_87 = arith.constant 0 : index
    %c0_88 = arith.constant 0 : index
    %148 = vector.load %arg3[%c0_86, %146, %147, %c0_87, %c0_88] : memref<1x10x10x10x4xbf16, #tpu.memory_space<vmem>>, vector<1x1x8x8x4xbf16>
    %149 = vector.shape_cast %148 : vector<1x1x8x8x4xbf16> to vector<1x8x8x4xbf16>
    %150 = vector.shape_cast %149 : vector<1x8x8x4xbf16> to vector<64x4xbf16>
    %151 = arith.extf %150 : vector<64x4xbf16> to vector<64x4xf32>
    %c0_89 = arith.constant 0 : index
    %c72 = arith.constant 72 : index
    %152 = vector.load %arg7[%c0_89, %c72] : memref<64x108xf32, #tpu.memory_space<vmem>>, vector<64x4xf32>
    tpu.vector_store %arg7[%c0_89, %c72], %151 {strides = array<i32>} : memref<64x108xf32, #tpu.memory_space<vmem>>, vector<64x4xf32>,
    %c0_90 = arith.constant 0 : index
    %153 = arith.index_cast %143 : i32 to index
    %154 = arith.index_cast %145 : i32 to index
    %c1_91 = arith.constant 1 : index
    %c0_92 = arith.constant 0 : index
    %155 = vector.load %arg3[%c0_90, %153, %154, %c1_91, %c0_92] : memref<1x10x10x10x4xbf16, #tpu.memory_space<vmem>>, vector<1x1x8x8x4xbf16>
    %156 = vector.shape_cast %155 : vector<1x1x8x8x4xbf16> to vector<1x8x8x4xbf16>
    %157 = vector.shape_cast %156 : vector<1x8x8x4xbf16> to vector<64x4xbf16>
    %158 = arith.extf %157 : vector<64x4xbf16> to vector<64x4xf32>
    %c0_93 = arith.constant 0 : index
    %c76 = arith.constant 76 : index
    %159 = vector.load %arg7[%c0_93, %c76] : memref<64x108xf32, #tpu.memory_space<vmem>>, vector<64x4xf32>
    tpu.vector_store %arg7[%c0_93, %c76], %158 {strides = array<i32>} : memref<64x108xf32, #tpu.memory_space<vmem>>, vector<64x4xf32>,
    %c0_94 = arith.constant 0 : index
    %160 = arith.index_cast %143 : i32 to index
    %161 = arith.index_cast %145 : i32 to index
    %c2_95 = arith.constant 2 : index
    %c0_96 = arith.constant 0 : index
    %162 = vector.load %arg3[%c0_94, %160, %161, %c2_95, %c0_96] : memref<1x10x10x10x4xbf16, #tpu.memory_space<vmem>>, vector<1x1x8x8x4xbf16>
    %163 = vector.shape_cast %162 : vector<1x1x8x8x4xbf16> to vector<1x8x8x4xbf16>
    %164 = vector.shape_cast %163 : vector<1x8x8x4xbf16> to vector<64x4xbf16>
    %165 = arith.extf %164 : vector<64x4xbf16> to vector<64x4xf32>
    %c0_97 = arith.constant 0 : index
    %c80 = arith.constant 80 : index
    %166 = vector.load %arg7[%c0_97, %c80] : memref<64x108xf32, #tpu.memory_space<vmem>>, vector<64x4xf32>
    tpu.vector_store %arg7[%c0_97, %c80], %165 {strides = array<i32>} : memref<64x108xf32, #tpu.memory_space<vmem>>, vector<64x4xf32>,
    %c8_i32_98 = arith.constant 8 : i32
    %167 = arith.muli %arg2, %c8_i32_98 : i32
    %c1_i32_99 = arith.constant 1 : i32
    %168 = arith.addi %167, %c1_i32_99 : i32
    %c0_100 = arith.constant 0 : index
    %169 = arith.index_cast %143 : i32 to index
    %170 = arith.index_cast %168 : i32 to index
    %c0_101 = arith.constant 0 : index
    %c0_102 = arith.constant 0 : index
    %171 = vector.load %arg3[%c0_100, %169, %170, %c0_101, %c0_102] : memref<1x10x10x10x4xbf16, #tpu.memory_space<vmem>>, vector<1x1x8x8x4xbf16>
    %172 = vector.shape_cast %171 : vector<1x1x8x8x4xbf16> to vector<1x8x8x4xbf16>
    %173 = vector.shape_cast %172 : vector<1x8x8x4xbf16> to vector<64x4xbf16>
    %174 = arith.extf %173 : vector<64x4xbf16> to vector<64x4xf32>
    %c0_103 = arith.constant 0 : index
    %c84 = arith.constant 84 : index
    %175 = vector.load %arg7[%c0_103, %c84] : memref<64x108xf32, #tpu.memory_space<vmem>>, vector<64x4xf32>
    tpu.vector_store %arg7[%c0_103, %c84], %174 {strides = array<i32>} : memref<64x108xf32, #tpu.memory_space<vmem>>, vector<64x4xf32>,
    %c0_104 = arith.constant 0 : index
    %176 = arith.index_cast %143 : i32 to index
    %177 = arith.index_cast %168 : i32 to index
    %c1_105 = arith.constant 1 : index
    %c0_106 = arith.constant 0 : index
    %178 = vector.load %arg3[%c0_104, %176, %177, %c1_105, %c0_106] : memref<1x10x10x10x4xbf16, #tpu.memory_space<vmem>>, vector<1x1x8x8x4xbf16>
    %179 = vector.shape_cast %178 : vector<1x1x8x8x4xbf16> to vector<1x8x8x4xbf16>
    %180 = vector.shape_cast %179 : vector<1x8x8x4xbf16> to vector<64x4xbf16>
    %181 = arith.extf %180 : vector<64x4xbf16> to vector<64x4xf32>
    %c0_107 = arith.constant 0 : index
    %c88 = arith.constant 88 : index
    %182 = vector.load %arg7[%c0_107, %c88] : memref<64x108xf32, #tpu.memory_space<vmem>>, vector<64x4xf32>
    tpu.vector_store %arg7[%c0_107, %c88], %181 {strides = array<i32>} : memref<64x108xf32, #tpu.memory_space<vmem>>, vector<64x4xf32>,
    %c0_108 = arith.constant 0 : index
    %183 = arith.index_cast %143 : i32 to index
    %184 = arith.index_cast %168 : i32 to index
    %c2_109 = arith.constant 2 : index
    %c0_110 = arith.constant 0 : index
    %185 = vector.load %arg3[%c0_108, %183, %184, %c2_109, %c0_110] : memref<1x10x10x10x4xbf16, #tpu.memory_space<vmem>>, vector<1x1x8x8x4xbf16>
    %186 = vector.shape_cast %185 : vector<1x1x8x8x4xbf16> to vector<1x8x8x4xbf16>
    %187 = vector.shape_cast %186 : vector<1x8x8x4xbf16> to vector<64x4xbf16>
    %188 = arith.extf %187 : vector<64x4xbf16> to vector<64x4xf32>
    %c0_111 = arith.constant 0 : index
    %c92 = arith.constant 92 : index
    %189 = vector.load %arg7[%c0_111, %c92] : memref<64x108xf32, #tpu.memory_space<vmem>>, vector<64x4xf32>
    tpu.vector_store %arg7[%c0_111, %c92], %188 {strides = array<i32>} : memref<64x108xf32, #tpu.memory_space<vmem>>, vector<64x4xf32>,
    %c8_i32_112 = arith.constant 8 : i32
    %190 = arith.muli %arg2, %c8_i32_112 : i32
    %c2_i32_113 = arith.constant 2 : i32
    %191 = arith.addi %190, %c2_i32_113 : i32
    %c0_114 = arith.constant 0 : index
    %192 = arith.index_cast %143 : i32 to index
    %193 = arith.index_cast %191 : i32 to index
    %c0_115 = arith.constant 0 : index
    %c0_116 = arith.constant 0 : index
    %194 = vector.load %arg3[%c0_114, %192, %193, %c0_115, %c0_116] : memref<1x10x10x10x4xbf16, #tpu.memory_space<vmem>>, vector<1x1x8x8x4xbf16>
    %195 = vector.shape_cast %194 : vector<1x1x8x8x4xbf16> to vector<1x8x8x4xbf16>
    %196 = vector.shape_cast %195 : vector<1x8x8x4xbf16> to vector<64x4xbf16>
    %197 = arith.extf %196 : vector<64x4xbf16> to vector<64x4xf32>
    %c0_117 = arith.constant 0 : index
    %c96 = arith.constant 96 : index
    %198 = vector.load %arg7[%c0_117, %c96] : memref<64x108xf32, #tpu.memory_space<vmem>>, vector<64x4xf32>
    tpu.vector_store %arg7[%c0_117, %c96], %197 {strides = array<i32>} : memref<64x108xf32, #tpu.memory_space<vmem>>, vector<64x4xf32>,
    %c0_118 = arith.constant 0 : index
    %199 = arith.index_cast %143 : i32 to index
    %200 = arith.index_cast %191 : i32 to index
    %c1_119 = arith.constant 1 : index
    %c0_120 = arith.constant 0 : index
    %201 = vector.load %arg3[%c0_118, %199, %200, %c1_119, %c0_120] : memref<1x10x10x10x4xbf16, #tpu.memory_space<vmem>>, vector<1x1x8x8x4xbf16>
    %202 = vector.shape_cast %201 : vector<1x1x8x8x4xbf16> to vector<1x8x8x4xbf16>
    %203 = vector.shape_cast %202 : vector<1x8x8x4xbf16> to vector<64x4xbf16>
    %204 = arith.extf %203 : vector<64x4xbf16> to vector<64x4xf32>
    %c0_121 = arith.constant 0 : index
    %c100 = arith.constant 100 : index
    %205 = vector.load %arg7[%c0_121, %c100] : memref<64x108xf32, #tpu.memory_space<vmem>>, vector<64x4xf32>
    tpu.vector_store %arg7[%c0_121, %c100], %204 {strides = array<i32>} : memref<64x108xf32, #tpu.memory_space<vmem>>, vector<64x4xf32>,
    %c0_122 = arith.constant 0 : index
    %206 = arith.index_cast %143 : i32 to index
    %207 = arith.index_cast %191 : i32 to index
    %c2_123 = arith.constant 2 : index
    %c0_124 = arith.constant 0 : index
    %208 = vector.load %arg3[%c0_122, %206, %207, %c2_123, %c0_124] : memref<1x10x10x10x4xbf16, #tpu.memory_space<vmem>>, vector<1x1x8x8x4xbf16>
    %209 = vector.shape_cast %208 : vector<1x1x8x8x4xbf16> to vector<1x8x8x4xbf16>
    %210 = vector.shape_cast %209 : vector<1x8x8x4xbf16> to vector<64x4xbf16>
    %211 = arith.extf %210 : vector<64x4xbf16> to vector<64x4xf32>
    %c0_125 = arith.constant 0 : index
    %c104 = arith.constant 104 : index
    %212 = vector.load %arg7[%c0_125, %c104] : memref<64x108xf32, #tpu.memory_space<vmem>>, vector<64x4xf32>
    tpu.vector_store %arg7[%c0_125, %c104], %211 {strides = array<i32>} : memref<64x108xf32, #tpu.memory_space<vmem>>, vector<64x4xf32>,
    %c0_126 = arith.constant 0 : index
    %c0_127 = arith.constant 0 : index
    %213 = vector.load %arg7[%c0_126, %c0_127] : memref<64x108xf32, #tpu.memory_space<vmem>>, vector<64x108xf32>
    %214 = arith.truncf %213 : vector<64x108xf32> to vector<64x108xbf16>
    %c0_128 = arith.constant 0 : index
    %c0_129 = arith.constant 0 : index
    %215 = vector.load %arg4[%c0_128, %c0_129] : memref<108x128xbf16, #tpu.memory_space<vmem>>, vector<108x128xbf16>
    %cst = arith.constant dense<0.000000e+00> : vector<64x128xf32>
    %216 = tpu.matmul %214, %215, %cst {dimension_numbers = #tpu.dot_dimension_numbers<[1], [0], [0], [1], [0, 0, 1, 1], [], []>} : vector<64x108xbf16>, vector<108x128xbf16>, vector<64x128xf32> -> vector<64x128xf32>
    %217 = vector.extract_strided_slice %216 {offsets = [0, 0], sizes = [64, 8], strides = [1, 1]} : vector<64x128xf32> to vector<64x8xf32>
    %218 = arith.truncf %217 : vector<64x8xf32> to vector<64x8xbf16>
    %219 = vector.shape_cast %218 : vector<64x8xbf16> to vector<1x1x1x64x8xbf16>
    %c0_130 = arith.constant 0 : index
    %c0_131 = arith.constant 0 : index
    %c0_132 = arith.constant 0 : index
    %c0_133 = arith.constant 0 : index
    %c0_134 = arith.constant 0 : index
    %220 = vector.load %arg5[%c0_130, %c0_131, %c0_132, %c0_133, %c0_134] : memref<1x1x1x64x8xbf16, #tpu.memory_space<vmem>>, vector<1x1x1x64x8xbf16>
    tpu.vector_store %arg5[%c0_130, %c0_131, %c0_132, %c0_133, %c0_134], %219 {strides = array<i32>} : memref<1x1x1x64x8xbf16, #tpu.memory_space<vmem>>, vector<1x1x1x64x8xbf16>,
    %cst_135 = arith.constant dense<0.000000e+00> : vector<128xf32>
    %221 = vector.multi_reduction <add>, %216, %cst_135 [0] : vector<64x128xf32> to vector<128xf32>
    %222 = vector.shape_cast %221 : vector<128xf32> to vector<1x128xf32>
    %223 = arith.mulf %216, %216 : vector<64x128xf32>
    %cst_136 = arith.constant dense<0.000000e+00> : vector<128xf32>
    %224 = vector.multi_reduction <add>, %223, %cst_136 [0] : vector<64x128xf32> to vector<128xf32>
    %225 = vector.shape_cast %224 : vector<128xf32> to vector<1x128xf32>
    %226 = tpu.concatenate %222, %225 in 0 : vector<1x128xf32>, vector<1x128xf32> -> vector<2x128xf32>
    %227 = vector.shape_cast %226 : vector<2x128xf32> to vector<1x1x1x2x128xf32>
    %c0_137 = arith.constant 0 : index
    %c0_138 = arith.constant 0 : index
    %c0_139 = arith.constant 0 : index
    %c0_140 = arith.constant 0 : index
    %c0_141 = arith.constant 0 : index
    %228 = vector.load %arg6[%c0_137, %c0_138, %c0_139, %c0_140, %c0_141] : memref<1x1x1x2x128xf32, #tpu.memory_space<vmem>>, vector<1x1x1x2x128xf32>
    tpu.vector_store %arg6[%c0_137, %c0_138, %c0_139, %c0_140, %c0_141], %227 {strides = array<i32>} : memref<1x1x1x2x128xf32, #tpu.memory_space<vmem>>, vector<1x1x1x2x128xf32>,
    return
  }
  func.func @transform_0(%arg0: i32, %arg1: i32, %arg2: i32) -> (i32, i32, i32, i32, i32) {
    %c0_i32 = arith.constant 0 : i32
    %c0_i32_0 = arith.constant 0 : i32
    %c0_i32_1 = arith.constant 0 : i32
    %c0_i32_2 = arith.constant 0 : i32
    %c0_i32_3 = arith.constant 0 : i32
    return %arg0, %c0_i32, %c0_i32_0, %c0_i32_1, %c0_i32_2 : i32, i32, i32, i32, i32
  }
  func.func @transform_1(%arg0: i32, %arg1: i32, %arg2: i32) -> (i32, i32) {
    %c0_i32 = arith.constant 0 : i32
    %c0_i32_0 = arith.constant 0 : i32
    %c0_i32_1 = arith.constant 0 : i32
    return %c0_i32, %c0_i32_0 : i32, i32
  }
  func.func @transform_2(%arg0: i32, %arg1: i32, %arg2: i32) -> (i32, i32, i32, i32, i32) {
    %c0_i32 = arith.constant 0 : i32
    %c0_i32_0 = arith.constant 0 : i32
    %c0_i32_1 = arith.constant 0 : i32
    return %arg0, %arg1, %arg2, %c0_i32, %c0_i32_0 : i32, i32, i32, i32, i32
  }
  func.func @transform_3(%arg0: i32, %arg1: i32, %arg2: i32) -> (i32, i32, i32, i32, i32) {
    %c0_i32 = arith.constant 0 : i32
    %c0_i32_0 = arith.constant 0 : i32
    %c0_i32_1 = arith.constant 0 : i32
    return %arg0, %arg1, %arg2, %c0_i32, %c0_i32_0 : i32, i32, i32, i32, i32
  }
}

module attributes {stable_mosaic.version = 11 : i64} {
  func.func @_bn_relu_kernel(%arg0: i32, %arg1: memref<64x128xbf16, #tpu.memory_space<vmem>>, %arg2: memref<1x128xf32, #tpu.memory_space<vmem>>, %arg3: memref<1x128xf32, #tpu.memory_space<vmem>>, %arg4: memref<64x128xf32, #tpu.memory_space<vmem>>) attributes {dimension_semantics = [#tpu.dimension_semantics<parallel>], iteration_bounds = array<i64: 1>, scalar_prefetch = 0 : i64, scratch_operands = 0 : i64, tpu.core_type = #tpu.core_type<tc>, window_params = [{transform_indices = @transform_0, window_bounds = array<i64: 64, 128>}, {pipeline_mode = #tpu.pipeline_mode<synchronous>, transform_indices = @transform_1, window_bounds = array<i64: 1, 128>}, {pipeline_mode = #tpu.pipeline_mode<synchronous>, transform_indices = @transform_2, window_bounds = array<i64: 1, 128>}, {transform_indices = @transform_3, window_bounds = array<i64: 64, 128>}]} {
    %c0 = arith.constant 0 : index
    %c0_0 = arith.constant 0 : index
    %0 = vector.load %arg1[%c0, %c0_0] : memref<64x128xbf16, #tpu.memory_space<vmem>>, vector<64x128xbf16>
    %1 = arith.extf %0 : vector<64x128xbf16> to vector<64x128xf32>
    %c0_1 = arith.constant 0 : index
    %c0_2 = arith.constant 0 : index
    %2 = vector.load %arg2[%c0_1, %c0_2] : memref<1x128xf32, #tpu.memory_space<vmem>>, vector<1x128xf32>
    %3 = vector.broadcast %2 : vector<1x128xf32> to vector<64x128xf32>
    %4 = arith.mulf %1, %3 : vector<64x128xf32>
    %c0_3 = arith.constant 0 : index
    %c0_4 = arith.constant 0 : index
    %5 = vector.load %arg3[%c0_3, %c0_4] : memref<1x128xf32, #tpu.memory_space<vmem>>, vector<1x128xf32>
    %6 = vector.broadcast %5 : vector<1x128xf32> to vector<64x128xf32>
    %7 = arith.addf %4, %6 : vector<64x128xf32>
    %cst = arith.constant 0.000000e+00 : f32
    %8 = vector.broadcast %cst : f32 to vector<64x128xf32>
    %9 = arith.maximumf %7, %8 : vector<64x128xf32>
    %c0_5 = arith.constant 0 : index
    %c0_6 = arith.constant 0 : index
    %10 = vector.load %arg4[%c0_5, %c0_6] : memref<64x128xf32, #tpu.memory_space<vmem>>, vector<64x128xf32>
    tpu.vector_store %arg4[%c0_5, %c0_6], %9 {strides = array<i32>} : memref<64x128xf32, #tpu.memory_space<vmem>>, vector<64x128xf32>,
    return
  }
  func.func @transform_0(%arg0: i32) -> (i32, i32) {
    %c0_i32 = arith.constant 0 : i32
    %c0_i32_0 = arith.constant 0 : i32
    return %arg0, %c0_i32 : i32, i32
  }
  func.func @transform_1(%arg0: i32) -> (i32, i32) {
    %c0_i32 = arith.constant 0 : i32
    %c0_i32_0 = arith.constant 0 : i32
    %c0_i32_1 = arith.constant 0 : i32
    return %c0_i32, %c0_i32_0 : i32, i32
  }
  func.func @transform_2(%arg0: i32) -> (i32, i32) {
    %c0_i32 = arith.constant 0 : i32
    %c0_i32_0 = arith.constant 0 : i32
    %c0_i32_1 = arith.constant 0 : i32
    return %c0_i32, %c0_i32_0 : i32, i32
  }
  func.func @transform_3(%arg0: i32) -> (i32, i32) {
    %c0_i32 = arith.constant 0 : i32
    %c0_i32_0 = arith.constant 0 : i32
    return %arg0, %c0_i32 : i32, i32
  }
}

</mosaic_0001>

<llo_original>
// kernel: tile.18
$region0: #{tile.18}
  #allocation0 [shape = 's32[1]{0}', space=sflag, size = 0x4, scoped, tag = 'scoped memory for tile.18']
  %s0 = inlined_call_operand.vmem [shape: f32[8], index: 0, kind: input, shape index: {}]
  %s1 = inlined_call_operand.vmem [shape: f32[16,8], index: 1, kind: output, shape index: {}]
  // Predicated region
  $region2: #{tile.18} parent=0 // pred_check
    _
  $region3: #{tile.18} parent=0 // pred_check_branch
    %3 = sbr.rel (0) target = $region5
  $region4: #{tile.18} parent=0 // pred_region
    _
  $region5: #{tile.18} parent=0 // pred_fallthru
    _
  %v4 = vld [vmem:[%s0] ss:$0 sm:$0xff]
  %5 = vst [vmem:[%s1] sm:$0xff] %v4
  %s6 = scalar_lea.vmem %s1, 8
  %7 = vst [vmem:[%s6] sm:$0xff] %v4

// kernel: tile.19
$region0: #{tile.19}
  %s0 = inlined_call_operand.vmem [shape: f32[16,8], index: 0, kind: input, shape index: {}]
  %s1 = inlined_call_operand.vmem [shape: f32[1,128], index: 1, kind: output, shape index: {}]
  $region1: #{tile.19} parent=0
    #allocation0 [shape = 'u8[4096]{0}', space=vmem, size = 0x1000, scoped, tag = 'scoped mem for output reshape']
    %v2 = vld [vmem:[%s0] sm:$0x1]
    %vm3 = vcmask 64512
    %4 = vst.msk [vmem:[#allocation0] sm:$0x1] %vm3, %v2
    %s5 = scalar_lea.vmem %s0, 15
    %v6 = vld [vmem:[%s5] sm:$0x1]
    %7 = vrot.lane.b32.xlu0 %v6, 120
    %v8 = vpop.permute.xlu0 %7
    %vm9 = vcmask 1048512
    %10 = vst.msk [vmem:[#allocation0] sm:$0x1] %vm9, %v8
    %s11 = scalar_lea.vmem %s0, 14
    %v12 = vld [vmem:[%s11] sm:$0x1]
    %13 = vrot.lane.b32.xlu0 %v12, 112
    %v14 = vpop.permute.xlu0 %13
    %vm15 = vcmask 982912
    %16 = vst.msk [vmem:[#allocation0] sm:$0x1] %vm15, %v14
    %s17 = scalar_lea.vmem %s0, 13
    %v18 = vld [vmem:[%s17] sm:$0x1]
    %19 = vrot.lane.b32.xlu0 %v18, 104
    %v20 = vpop.permute.xlu0 %19
    %vm21 = vcmask 917312
    %22 = vst.msk [vmem:[#allocation0] sm:$0x1] %vm21, %v20
    %s23 = scalar_lea.vmem %s0, 12
    %v24 = vld [vmem:[%s23] sm:$0x1]
    %25 = vrot.lane.b32.xlu0 %v24, 96
    %v26 = vpop.permute.xlu0 %25
    %vm27 = vcmask 851712
    %28 = vst.msk [vmem:[#allocation0] sm:$0x1] %vm27, %v26
    %s29 = scalar_lea.vmem %s0, 11
    %v30 = vld [vmem:[%s29] sm:$0x1]
    %31 = vrot.lane.b32.xlu0 %v30, 88
    %v32 = vpop.permute.xlu0 %31
    %vm33 = vcmask 786112
    %34 = vst.msk [vmem:[#allocation0] sm:$0x1] %vm33, %v32
    %s35 = scalar_lea.vmem %s0, 10
    %v36 = vld [vmem:[%s35] sm:$0x1]
    %37 = vrot.lane.b32.xlu0 %v36, 80
    %v38 = vpop.permute.xlu0 %37
    %vm39 = vcmask 720512
    %40 = vst.msk [vmem:[#allocation0] sm:$0x1] %vm39, %v38
    %s41 = scalar_lea.vmem %s0, 9
    %v42 = vld [vmem:[%s41] sm:$0x1]
    %43 = vrot.lane.b32.xlu0 %v42, 72
    %v44 = vpop.permute.xlu0 %43
    %vm45 = vcmask 654912
    %46 = vst.msk [vmem:[#allocation0] sm:$0x1] %vm45, %v44
    %s47 = scalar_lea.vmem %s0, 8
    %v48 = vld [vmem:[%s47] sm:$0x1]
    %49 = vrot.lane.b32.xlu0 %v48, 64
    %v50 = vpop.permute.xlu0 %49
    %vm51 = vcmask 589312
    %52 = vst.msk [vmem:[#allocation0] sm:$0x1] %vm51, %v50
    %s53 = scalar_lea.vmem %s0, 7
    %v54 = vld [vmem:[%s53] sm:$0x1]
    %55 = vrot.lane.b32.xlu0 %v54, 56
    %v56 = vpop.permute.xlu0 %55
    %vm57 = vcmask 523712
    %58 = vst.msk [vmem:[#allocation0] sm:$0x1] %vm57, %v56
    %s59 = scalar_lea.vmem %s0, 6
    %v60 = vld [vmem:[%s59] sm:$0x1]
    %61 = vrot.lane.b32.xlu0 %v60, 48
    %v62 = vpop.permute.xlu0 %61
    %vm63 = vcmask 458112
    %64 = vst.msk [vmem:[#allocation0] sm:$0x1] %vm63, %v62
    %s65 = scalar_lea.vmem %s0, 5
    %v66 = vld [vmem:[%s65] sm:$0x1]
    %67 = vrot.lane.b32.xlu0 %v66, 40
    %v68 = vpop.permute.xlu0 %67
    %vm69 = vcmask 392512
    %70 = vst.msk [vmem:[#allocation0] sm:$0x1] %vm69, %v68
    %s71 = scalar_lea.vmem %s0, 4
    %v72 = vld [vmem:[%s71] sm:$0x1]
    %73 = vrot.lane.b32.xlu0 %v72, 32
    %v74 = vpop.permute.xlu0 %73
    %vm75 = vcmask 326912
    %76 = vst.msk [vmem:[#allocation0] sm:$0x1] %vm75, %v74
    %s77 = scalar_lea.vmem %s0, 3
    %v78 = vld [vmem:[%s77] sm:$0x1]
    %79 = vrot.lane.b32.xlu0 %v78, 24
    %v80 = vpop.permute.xlu0 %79
    %vm81 = vcmask 261312
    %82 = vst.msk [vmem:[#allocation0] sm:$0x1] %vm81, %v80
    %s83 = scalar_lea.vmem %s0, 2
    %v84 = vld [vmem:[%s83] sm:$0x1]
    %85 = vrot.lane.b32.xlu0 %v84, 16
    %v86 = vpop.permute.xlu0 %85
    %vm87 = vcmask 195712
    %88 = vst.msk [vmem:[#allocation0] sm:$0x1] %vm87, %v86
    %s89 = scalar_lea.vmem %s0, 1
    %v90 = vld [vmem:[%s89] sm:$0x1]
    %91 = vrot.lane.b32.xlu0 %v90, 8
    %v92 = vpop.permute.xlu0 %91
    %vm93 = vcmask 130112
    %94 = vst.msk [vmem:[#allocation0] sm:$0x1] %vm93, %v92
    %s96 = ssub.s32 2, 1
    %v97 = vld [vmem:[#allocation0] sm:%s96]
    %s99 = ssub.s32 2, 1
    %100 = vst [vmem:[%s1] sm:%s99] %v97

// kernel: conv3d_bn_relu.3
$region0: #{conv3d_bn_relu.3}
  #allocation0 [shape = 'u32[]', space=smem, size = 0x4, offset = 0x4, fixed_abs, tag = 'smem constant byte address 0x4 - core index']
  #allocation1 [shape = 'u32[72,128]{1,0:T(1,128)}', space=vmem, size = 0x9000, scoped, tag = 'internal scratch']
  %s0 = inlined_call_operand.vmem [shape: bf16[64,128], index: 0, kind: input, shape index: {}]
  %s1 = inlined_call_operand.vmem [shape: f32[1,128], index: 1, kind: input, shape index: {}]
  %s2 = inlined_call_operand.vmem [shape: f32[1,128], index: 2, kind: input, shape index: {}]
  %s3 = inlined_call_operand.vmem [shape: f32[64,128], index: 3, kind: output, shape index: {}]
  %s4 = sld [smem:[#allocation0]]
  $region22: #{conv3d_bn_relu.3} parent=0
    _
  %s6 = ssub.s32 1, %s4
  %s7 = scalar_select 0, %s6, %s4
  // Predicated region
  $region2: #{conv3d_bn_relu.3} parent=0 // pred_check
    _
  $region3: #{conv3d_bn_relu.3} parent=0 // pred_check_branch
    %9 = sbr.rel (0) target = $region5
  $region4: #{conv3d_bn_relu.3} parent=0 // pred_region
    _
  $region5: #{conv3d_bn_relu.3} parent=0 // pred_fallthru
    _
  // Predicated region
  $region6: #{conv3d_bn_relu.3} parent=0 // pred_check
    _
  $region7: #{conv3d_bn_relu.3} parent=0 // pred_check_branch
    %11 = sbr.rel (0) target = $region9
  $region8: #{conv3d_bn_relu.3} parent=0 // pred_region
    _
  $region9: #{conv3d_bn_relu.3} parent=0 // pred_fallthru
    _
  // Predicated region
  $region10: #{conv3d_bn_relu.3} parent=0 // pred_check
    _
  $region11: #{conv3d_bn_relu.3} parent=0 // pred_check_branch
    %13 = sbr.rel (0) target = $region13
  $region12: #{conv3d_bn_relu.3} parent=0 // pred_region
    _
  $region13: #{conv3d_bn_relu.3} parent=0 // pred_fallthru
    _
  %v14 = vld [vmem:[%s0] sm:$0xf]
  %v15 = vld [vmem:[%s0 + $0x4] sm:$0xf]
  %v16 = vld [vmem:[%s0 + $0x8] sm:$0xf]
  %v17 = vld [vmem:[%s0 + $0xc] sm:$0xf]
  %v18 = vld [vmem:[%s0 + $0x10] sm:$0xf]
  %v19 = vld [vmem:[%s0 + $0x14] sm:$0xf]
  %v20 = vld [vmem:[%s0 + $0x18] sm:$0xf]
  %v21 = vld [vmem:[%s0 + $0x1c] sm:$0xf]
  %v22 = vunpack.c.l.bf16 %v14
  %v23 = vunpack.c.l.bf16 %v15
  %v24 = vunpack.c.l.bf16 %v16
  %v25 = vunpack.c.l.bf16 %v17
  %v26 = vunpack.c.l.bf16 %v18
  %v27 = vunpack.c.l.bf16 %v19
  %v28 = vunpack.c.l.bf16 %v20
  %v29 = vunpack.c.l.bf16 %v21
  %v30 = vld [vmem:[%s1] sm:$0x1]
  %v32 = vperm.slane %v30, 0
  %v34 = vmul.f32 %v22, %v32
  %v35 = vmul.f32 %v23, %v32
  %v36 = vmul.f32 %v24, %v32
  %v37 = vmul.f32 %v25, %v32
  %v38 = vmul.f32 %v26, %v32
  %v39 = vmul.f32 %v27, %v32
  %v40 = vmul.f32 %v28, %v32
  %v41 = vmul.f32 %v29, %v32
  %v42 = vld [vmem:[%s2] sm:$0x1]
  %v44 = vperm.slane %v42, 0
  %v46 = vadd.f32 %v34, %v44
  %v47 = vadd.f32 %v35, %v44
  %v48 = vadd.f32 %v36, %v44
  %v49 = vadd.f32 %v37, %v44
  %v50 = vadd.f32 %v38, %v44
  %v51 = vadd.f32 %v39, %v44
  %v52 = vadd.f32 %v40, %v44
  %v53 = vadd.f32 %v41, %v44
  %v54 = vmax.f32 %v46, 0.0
  %v55 = vmax.f32 %v47, 0.0
  %v56 = vmax.f32 %v48, 0.0
  %v57 = vmax.f32 %v49, 0.0
  %v58 = vmax.f32 %v50, 0.0
  %v59 = vmax.f32 %v51, 0.0
  %v60 = vmax.f32 %v52, 0.0
  %v61 = vmax.f32 %v53, 0.0
  %62 = vst [vmem:[%s3] sm:$0xff] %v54
  %63 = vst [vmem:[%s3 + $0x8] sm:$0xff] %v55
  %64 = vst [vmem:[%s3 + $0x10] sm:$0xff] %v56
  %65 = vst [vmem:[%s3 + $0x18] sm:$0xff] %v57
  %66 = vst [vmem:[%s3 + $0x20] sm:$0xff] %v58
  %67 = vst [vmem:[%s3 + $0x28] sm:$0xff] %v59
  %68 = vst [vmem:[%s3 + $0x30] sm:$0xff] %v60
  %69 = vst [vmem:[%s3 + $0x38] sm:$0xff] %v61
  // Predicated region
  $region14: #{conv3d_bn_relu.3} parent=0 // pred_check
    _
  $region15: #{conv3d_bn_relu.3} parent=0 // pred_check_branch
    %71 = sbr.rel (0) target = $region17
  $region16: #{conv3d_bn_relu.3} parent=0 // pred_region
    _
  $region17: #{conv3d_bn_relu.3} parent=0 // pred_fallthru
    _
  // Predicated region
  $region18: #{conv3d_bn_relu.3} parent=0 // pred_check
    _
  $region19: #{conv3d_bn_relu.3} parent=0 // pred_check_branch
    %73 = sbr.rel (0) target = $region21
  $region20: #{conv3d_bn_relu.3} parent=0 // pred_region
    _
  $region21: #{conv3d_bn_relu.3} parent=0 // pred_fallthru
    _

// kernel: conv3d_bn_relu.2
$region0: #{conv3d_bn_relu.2}
  #allocation0 [shape = 'u32[]', space=smem, size = 0x4, offset = 0x4, fixed_abs, tag = 'smem constant byte address 0x4 - core index']
  #allocation1 [shape = 'u32[72,128]{1,0:T(1,128)}', space=vmem, size = 0x9000, scoped, tag = 'internal scratch']
  #allocation2 [shape = 'f32[64,108]{1,0:T(8,128)}', space=vmem, size = 0x8000, scoped, tag = 'scratch operand']
  %s0 = inlined_call_operand.vmem [shape: bf16[2,10,10,10,4], index: 0, kind: input, shape index: {}]
  %s1 = inlined_call_operand.vmem [shape: bf16[108,128], index: 1, kind: input, shape index: {}]
  %s2 = inlined_call_operand.vmem [shape: bf16[2,8,1,64,8], index: 2, kind: output, shape index: {0}]
  %s3 = inlined_call_operand.vmem [shape: f32[2,8,1,2,128], index: 3, kind: output, shape index: {1}]
  %4 = xla_tuple %s2, %s3
  %s5 = sld [smem:[#allocation0]]
  $region49: #{conv3d_bn_relu.2} parent=0
    _
  %s7 = ssub.s32 1, %s5
  %s8 = scalar_select 0, %s7, %s5
  loop: start=0, step=1, limit=18
  $region2: #{conv3d_bn_relu.2} parent=0 // loop_pre_header
    _
  $region3: #{conv3d_bn_relu.2} parent=0 // loop_header
    %s10 = sphi 0, %s14
    %p11 = scmp.ge.s32.totalorder %s10, 18
    %s17 = sphi 0, %s36
    %s18 = sphi 0, %s32
    %s19 = sphi 0, %s28
    %s20 = sphi 0, %s17
    %s21 = sphi 0, %s18
    %s22 = sphi 0, %s19
    %s23 = sphi 0, %s20
    %s24 = sphi 0, %s21
    %s25 = sphi 0, %s22
    %s39 = sphi 0, %s41
    %s42 = sphi 0, %s39
    %s43 = sphi 0, %s42
    %s59 = sphi 0, %s43
    %s63 = sphi 0, %s63
    %s65 = sphi 0, %s63
    %s66 = sphi 0, %s65
    %s80 = sphi 0, %s66
    %s90 = sphi 0, %s92
    %s93 = sphi 0, %s90
    %s94 = sphi 0, %s93
    %s110 = sphi 0, %s94
    %s120 = sphi 0, %s122
    %s123 = sphi 0, %s120
    %s124 = sphi 0, %s123
    %s140 = sphi 0, %s124
  $region4: #{conv3d_bn_relu.2} parent=0 // loop_header_branch
    %13 = sbr.rel (%p11) target = $region8
  $region5: #{conv3d_bn_relu.2} parent=0 // loop_body
    %s15 = ssub.s32 %s10, 1
    %s16 = ssub.s32 %s10, 2
    %s26 = sadd.s32 1, %s19
    %p27 = scmp.ge.s32.totalorder %s26, 1
    %s28 = scalar_select %p27, 0, %s26
    %s29 = sadd.s32 1, %s18
    %s30 = scalar_select %p27, %s29, %s18
    %p31 = scmp.ge.s32.totalorder %s30, 8
    %s32 = scalar_select %p31, 0, %s30
    %s33 = sadd.s32 1, %s17
    %s34 = scalar_select %p31, %s33, %s17
    %p35 = scmp.ge.s32.totalorder %s34, 2
    %s36 = scalar_select %p35, 0, %s34
    %s37 = ssub.s32 %s17, %s36
    %p38 = scmp.eq.s32.totalorder %s37, 0
    %s40 = sadd.s32 %s39, 1
    %s41 = scalar_select %p38, %s39, %s40
    %p44 = pneg %p38
    %p45 = scmp.eq.s32.totalorder %s10, 15
    %p46 = por %p44, %p45
    %p47 = scmp.ne.s32.totalorder %s39, %s42
    %p48 = scmp.eq.s32.totalorder %s10, 0
    %p49 = por %p47, %p48
    %p50 = scmp.ne.s32.totalorder %s39, %s42
    %p51 = scmp.eq.s32.totalorder %s15, 15
    %p52 = por %p50, %p51
    %p53 = scmp.ne.s32.totalorder %s42, %s43
    %p54 = scmp.eq.s32.totalorder %s15, 0
    %p55 = por %p53, %p54
    %p56 = scmp.ne.s32.totalorder %s42, %s43
    %p57 = scmp.eq.s32.totalorder %s16, 15
    %p58 = por %p56, %p57
    %p60 = scmp.ne.s32.totalorder %s43, %s59
    %p61 = scmp.eq.s32.totalorder %s16, 0
    %p62 = por %p60, %p61
    %s64 = sadd.s32 %s63, 1
    %p67 = scmp.eq.s32.totalorder %s10, 15
    %p68 = scmp.ne.s32.totalorder %s63, %s65
    %p69 = scmp.eq.s32.totalorder %s10, 0
    %p70 = por %p68, %p69
    %p71 = scmp.ne.s32.totalorder %s63, %s65
    %p72 = scmp.eq.s32.totalorder %s15, 15
    %p73 = por %p71, %p72
    %p74 = scmp.ne.s32.totalorder %s65, %s66
    %p75 = scmp.eq.s32.totalorder %s15, 0
    %p76 = por %p74, %p75
    %p77 = scmp.ne.s32.totalorder %s65, %s66
    %p78 = scmp.eq.s32.totalorder %s16, 15
    %p79 = por %p77, %p78
    %p81 = scmp.ne.s32.totalorder %s66, %s80
    %p82 = scmp.eq.s32.totalorder %s16, 0
    %p83 = por %p81, %p82
    %s84 = ssub.s32 %s17, %s36
    %s85 = ssub.s32 %s18, %s32
    %s86 = sor.u32 %s84, %s85
    %s87 = ssub.s32 %s19, %s28
    %s88 = sor.u32 %s86, %s87
    %p89 = scmp.eq.s32.totalorder %s88, 0
    %s91 = sadd.s32 %s90, 1
    %s92 = scalar_select %p89, %s90, %s91
    %p95 = pneg %p89
    %p96 = scmp.eq.s32.totalorder %s10, 15
    %p97 = por %p95, %p96
    %p98 = scmp.ne.s32.totalorder %s90, %s93
    %p99 = scmp.eq.s32.totalorder %s10, 0
    %p100 = por %p98, %p99
    %p101 = scmp.ne.s32.totalorder %s90, %s93
    %p102 = scmp.eq.s32.totalorder %s15, 15
    %p103 = por %p101, %p102
    %p104 = scmp.ne.s32.totalorder %s93, %s94
    %p105 = scmp.eq.s32.totalorder %s15, 0
    %p106 = por %p104, %p105
    %p107 = scmp.ne.s32.totalorder %s93, %s94
    %p108 = scmp.eq.s32.totalorder %s16, 15
    %p109 = por %p107, %p108
    %p111 = scmp.ne.s32.totalorder %s94, %s110
    %p112 = scmp.eq.s32.totalorder %s16, 0
    %p113 = por %p111, %p112
    %s114 = ssub.s32 %s17, %s36
    %s115 = ssub.s32 %s18, %s32
    %s116 = sor.u32 %s114, %s115
    %s117 = ssub.s32 %s19, %s28
    %s118 = sor.u32 %s116, %s117
    %p119 = scmp.eq.s32.totalorder %s118, 0
    %s121 = sadd.s32 %s120, 1
    %s122 = scalar_select %p119, %s120, %s121
    %p125 = pneg %p119
    %p126 = scmp.eq.s32.totalorder %s10, 15
    %p127 = por %p125, %p126
    %p128 = scmp.ne.s32.totalorder %s120, %s123
    %p129 = scmp.eq.s32.totalorder %s10, 0
    %p130 = por %p128, %p129
    %p131 = scmp.ne.s32.totalorder %s120, %s123
    %p132 = scmp.eq.s32.totalorder %s15, 15
    %p133 = por %p131, %p132
    %p134 = scmp.ne.s32.totalorder %s123, %s124
    %p135 = scmp.eq.s32.totalorder %s15, 0
    %p136 = por %p134, %p135
    %p137 = scmp.ne.s32.totalorder %s123, %s124
    %p138 = scmp.eq.s32.totalorder %s16, 15
    %p139 = por %p137, %p138
    %p141 = scmp.ne.s32.totalorder %s124, %s140
    %p142 = scmp.eq.s32.totalorder %s16, 0
    %p143 = por %p141, %p142
    %p144 = scmp.le.s32.totalorder 1, %s10
    %p145 = scmp.lt.s32.totalorder %s10, 17
    %p146 = pnand %p144, %p145
    %p147 = pneg %p146
    // Predicated region
    $region9: #{conv3d_bn_relu.2} parent=5 // pred_check
      _
    $region10: #{conv3d_bn_relu.2} parent=5 // pred_check_branch
      %149 = sbr.rel (%p146) target = $region12
    $region11: #{conv3d_bn_relu.2} parent=5 // pred_region
      %s150 = ssub.s32 %s10, 1
      // Predicated region
      $region13: #{conv3d_bn_relu.2} parent=11 // pred_check
        %p151 = pneg %p76
      $region14: #{conv3d_bn_relu.2} parent=11 // pred_check_branch
        %153 = sbr.rel (%p151) target = $region16
      $region15: #{conv3d_bn_relu.2} parent=11 // pred_region
        _
      $region16: #{conv3d_bn_relu.2} parent=11 // pred_fallthru
        _
    $region12: #{conv3d_bn_relu.2} parent=5 // pred_fallthru
      _
    %p154 = scmp.lt.s32.totalorder %s10, 16
    // Predicated region
    $region17: #{conv3d_bn_relu.2} parent=5 // pred_check
      %p155 = pneg %p154
    $region18: #{conv3d_bn_relu.2} parent=5 // pred_check_branch
      %157 = sbr.rel (%p155) target = $region20
    $region19: #{conv3d_bn_relu.2} parent=5 // pred_region
      // Predicated region
      $region21: #{conv3d_bn_relu.2} parent=19 // pred_check
        %p158 = pneg %p49
      $region22: #{conv3d_bn_relu.2} parent=19 // pred_check_branch
        %160 = sbr.rel (%p158) target = $region24
      $region23: #{conv3d_bn_relu.2} parent=19 // pred_region
        %p161 = scmp.lt.s32.totalorder %s17, 1
        %s162 = scalar_select %p161, %s17, 1
        %s163 = smul.addr %s162, 200
        %s164 = smul.addr %s163, 4
        %s165 = scalar_lea.vmem %s0, %s164
      $region24: #{conv3d_bn_relu.2} parent=19 // pred_fallthru
        _
    $region20: #{conv3d_bn_relu.2} parent=5 // pred_fallthru
      _
    %p166 = scmp.le.s32.totalorder 1, %s10
    %p167 = scmp.lt.s32.totalorder %s10, 17
    %p168 = pnand %p166, %p167
    %p169 = pneg %p168
    // Predicated region
    $region25: #{conv3d_bn_relu.2} parent=5 // pred_check
      _
    $region26: #{conv3d_bn_relu.2} parent=5 // pred_check_branch
      %171 = sbr.rel (%p168) target = $region28
    $region27: #{conv3d_bn_relu.2} parent=5 // pred_region
      %s172 = ssub.s32 %s10, 1
      %p173 = scmp.lt.s32.totalorder %s20, 1
      %s174 = scalar_select %p173, %s20, 1
      %s175 = smul.addr %s174, 200
      %s176 = smul.addr %s175, 4
      %s177 = scalar_lea.vmem %s0, %s176
      %p178 = pneg %p55
      %p179 = pneg %p52
      %p180 = pneg %p76
      %p181 = pneg %p73
      %p182 = pneg %p106
      %p183 = pneg %p103
      %p184 = scmp.lt.s32.totalorder %s20, 1
      %s185 = scalar_select %p184, %s20, 1
      %p186 = scmp.lt.s32.totalorder %s21, 7
      %s187 = scalar_select %p186, %s21, 7
      %p188 = scmp.lt.s32.totalorder %s22, 0
      %s189 = scalar_select %p188, %s22, 0
      %s190 = smul.addr %s189, 8
      %s191 = smul.addr %s187, 8
      %s192 = sadd.s32 %s190, %s191
      %s193 = smul.addr %s185, 64
      %s194 = sadd.s32 %s192, %s193
      %s195 = smul.addr %s194, 4
      %s196 = scalar_lea.vmem %s2, %s195
      %p197 = pneg %p136
      %p198 = pneg %p133
      %p199 = scmp.lt.s32.totalorder %s20, 1
      %s200 = scalar_select %p199, %s20, 1
      %p201 = scmp.lt.s32.totalorder %s21, 7
      %s202 = scalar_select %p201, %s21, 7
      %p203 = scmp.lt.s32.totalorder %s22, 0
      %s204 = scalar_select %p203, %s22, 0
      %s205 = sadd.s32 %s204, %s202
      %s206 = smul.addr %s200, 8
      %s207 = sadd.s32 %s205, %s206
      %s208 = smul.addr %s207, 2
      %s209 = scalar_lea.vmem %s3, %s208
      %p210 = scmp.lt.s32.totalorder %s20, 1
      %s211 = scalar_select %p210, %s20, 1
      %s212 = smul.addr %s211, 200
      %s213 = smul.addr %s212, 4
      %s214 = scalar_lea.vmem %s0, %s213
      %p215 = scmp.lt.s32.totalorder %s20, 1
      %s216 = scalar_select %p215, %s20, 1
      %p217 = scmp.lt.s32.totalorder %s21, 7
      %s218 = scalar_select %p217, %s21, 7
      %p219 = scmp.lt.s32.totalorder %s22, 0
      %s220 = scalar_select %p219, %s22, 0
      %s221 = smul.addr %s220, 8
      %s222 = smul.addr %s218, 8
      %s223 = sadd.s32 %s221, %s222
      %s224 = smul.addr %s216, 64
      %s225 = sadd.s32 %s223, %s224
      %s226 = smul.addr %s225, 4
      %s227 = scalar_lea.vmem %s2, %s226
      %p228 = scmp.lt.s32.totalorder %s20, 1
      %s229 = scalar_select %p228, %s20, 1
      %p230 = scmp.lt.s32.totalorder %s21, 7
      %s231 = scalar_select %p230, %s21, 7
      %p232 = scmp.lt.s32.totalorder %s22, 0
      %s233 = scalar_select %p232, %s22, 0
      %s234 = sadd.s32 %s233, %s231
      %s235 = smul.addr %s229, 8
      %s236 = sadd.s32 %s234, %s235
      %s237 = smul.addr %s236, 2
      %s238 = scalar_lea.vmem %s3, %s237
      %s240 = smul.u32 %s22, 8
      %s241 = smul.u32 %s240, 2
      %s242 = smul.u32 %s21, 20
      %s243 = sadd.s32 %s241, %s242
      %s244 = smul.addr %s243, 4
      %s245 = scalar_lea.vmem %s214, %s244
      %v246 = vld [vmem:[%s245] sm:$0xf]
      %v247 = vld [vmem:[%s245 + $0x8] sm:$0xf]
      %v248 = vld [vmem:[%s245 + $0x10] sm:$0xf]
      %v249 = vld [vmem:[%s245 + $0x18] sm:$0xf]
      %v250 = vld [vmem:[%s245 + $0x20] sm:$0xf]
      %v251 = vld [vmem:[%s245 + $0x28] sm:$0xf]
      %v252 = vld [vmem:[%s245 + $0x30] sm:$0xf]
      %v253 = vld [vmem:[%s245 + $0x38] sm:$0xf]
      %v254 = vunpack.c.l.bf16 %v246
      %v255 = vunpack.c.l.bf16 %v247
      %v256 = vunpack.c.l.bf16 %v248
      %v257 = vunpack.c.l.bf16 %v249
      %v258 = vunpack.c.l.bf16 %v250
      %v259 = vunpack.c.l.bf16 %v251
      %v260 = vunpack.c.l.bf16 %v252
      %v261 = vunpack.c.l.bf16 %v253
      %vm262 = vcmask 31744
      %263 = vst.msk [vmem:[#allocation2] sm:$0xff] %vm262, %v254
      %264 = vst.msk [vmem:[#allocation2 + $0x8] sm:$0xff] %vm262, %v255
      %265 = vst.msk [vmem:[#allocation2 + $0x10] sm:$0xff] %vm262, %v256
      %266 = vst.msk [vmem:[#allocation2 + $0x18] sm:$0xff] %vm262, %v257
      %267 = vst.msk [vmem:[#allocation2 + $0x20] sm:$0xff] %vm262, %v258
      %268 = vst.msk [vmem:[#allocation2 + $0x28] sm:$0xff] %vm262, %v259
      %269 = vst.msk [vmem:[#allocation2 + $0x30] sm:$0xff] %vm262, %v260
      %270 = vst.msk [vmem:[#allocation2 + $0x38] sm:$0xff] %vm262, %v261
      %v271 = vld [vmem:[%s245] sm:$0xf]
      %v272 = vld [vmem:[%s245 + $0x4] sm:$0x1]
      %v273 = vld [vmem:[%s245 + $0x8] sm:$0xf]
      %v274 = vld [vmem:[%s245 + $0xc] sm:$0x1]
      %v275 = vld [vmem:[%s245 + $0x10] sm:$0xf]
      %v276 = vld [vmem:[%s245 + $0x14] sm:$0x1]
      %v277 = vld [vmem:[%s245 + $0x18] sm:$0xf]
      %v278 = vld [vmem:[%s245 + $0x1c] sm:$0x1]
      %v279 = vld [vmem:[%s245 + $0x20] sm:$0xf]
      %v280 = vld [vmem:[%s245 + $0x24] sm:$0x1]
      %v281 = vld [vmem:[%s245 + $0x28] sm:$0xf]
      %v282 = vld [vmem:[%s245 + $0x2c] sm:$0x1]
      %v283 = vld [vmem:[%s245 + $0x30] sm:$0xf]
      %v284 = vld [vmem:[%s245 + $0x34] sm:$0x1]
      %v285 = vld [vmem:[%s245 + $0x38] sm:$0xf]
      %v286 = vld [vmem:[%s245 + $0x3c] sm:$0x1]
      %vm287 = vsmask.f32 3328
      %vm288 = vsmask.f32 7440
      %vm289 = vmor %vm287, %vm288
      %v291 = vshrl.u32 %v271, 16
      %v293 = vrot.slane %v291, 4
      %v294 = vshll.u32 %v271, 16
      %v296 = vrot.slane %v294, 5
      %v297 = vor.u32 %v293, %v296
      %v298 = vrot.slane %v297, 4
      %v300 = vshll.u32 %v272, 16
      %v302 = vrot.slane %v300, 5
      %v303 = vsel %vm289, %v298, %v302
      %v305 = vshrl.u32 %v273, 16
      %v307 = vrot.slane %v305, 4
      %v308 = vshll.u32 %v273, 16
      %v310 = vrot.slane %v308, 5
      %v311 = vor.u32 %v307, %v310
      %v312 = vrot.slane %v311, 4
      %v314 = vshll.u32 %v274, 16
      %v316 = vrot.slane %v314, 5
      %v317 = vsel %vm289, %v312, %v316
      %v319 = vshrl.u32 %v275, 16
      %v321 = vrot.slane %v319, 4
      %v322 = vshll.u32 %v275, 16
      %v324 = vrot.slane %v322, 5
      %v325 = vor.u32 %v321, %v324
      %v326 = vrot.slane %v325, 4
      %v328 = vshll.u32 %v276, 16
      %v330 = vrot.slane %v328, 5
      %v331 = vsel %vm289, %v326, %v330
      %v333 = vshrl.u32 %v277, 16
      %v335 = vrot.slane %v333, 4
      %v336 = vshll.u32 %v277, 16
      %v338 = vrot.slane %v336, 5
      %v339 = vor.u32 %v335, %v338
      %v340 = vrot.slane %v339, 4
      %v342 = vshll.u32 %v278, 16
      %v344 = vrot.slane %v342, 5
      %v345 = vsel %vm289, %v340, %v344
      %v347 = vshrl.u32 %v279, 16
      %v349 = vrot.slane %v347, 4
      %v350 = vshll.u32 %v279, 16
      %v352 = vrot.slane %v350, 5
      %v353 = vor.u32 %v349, %v352
      %v354 = vrot.slane %v353, 4
      %v356 = vshll.u32 %v280, 16
      %v358 = vrot.slane %v356, 5
      %v359 = vsel %vm289, %v354, %v358
      %v361 = vshrl.u32 %v281, 16
      %v363 = vrot.slane %v361, 4
      %v364 = vshll.u32 %v281, 16
      %v366 = vrot.slane %v364, 5
      %v367 = vor.u32 %v363, %v366
      %v368 = vrot.slane %v367, 4
      %v370 = vshll.u32 %v282, 16
      %v372 = vrot.slane %v370, 5
      %v373 = vsel %vm289, %v368, %v372
      %v375 = vshrl.u32 %v283, 16
      %v377 = vrot.slane %v375, 4
      %v378 = vshll.u32 %v283, 16
      %v380 = vrot.slane %v378, 5
      %v381 = vor.u32 %v377, %v380
      %v382 = vrot.slane %v381, 4
      %v384 = vshll.u32 %v284, 16
      %v386 = vrot.slane %v384, 5
      %v387 = vsel %vm289, %v382, %v386
      %v389 = vshrl.u32 %v285, 16
      %v391 = vrot.slane %v389, 4
      %v392 = vshll.u32 %v285, 16
      %v394 = vrot.slane %v392, 5
      %v395 = vor.u32 %v391, %v394
      %v396 = vrot.slane %v395, 4
      %v398 = vshll.u32 %v286, 16
      %v400 = vrot.slane %v398, 5
      %v401 = vsel %vm289, %v396, %v400
      %v410 = vunpack.c.l.bf16 %v303
      %v411 = vunpack.c.l.bf16 %v317
      %v412 = vunpack.c.l.bf16 %v331
      %v413 = vunpack.c.l.bf16 %v345
      %v414 = vunpack.c.l.bf16 %v359
      %v415 = vunpack.c.l.bf16 %v373
      %v416 = vunpack.c.l.bf16 %v387
      %v417 = vunpack.c.l.bf16 %v401
      %426 = vrot.lane.b32.xlu0 %v410, 4
      %v427 = vpop.permute.xlu0 %426
      %428 = vrot.lane.b32.xlu0 %v411, 4
      %v429 = vpop.permute.xlu0 %428
      %430 = vrot.lane.b32.xlu0 %v412, 4
      %v431 = vpop.permute.xlu0 %430
      %432 = vrot.lane.b32.xlu0 %v413, 4
      %v433 = vpop.permute.xlu0 %432
      %434 = vrot.lane.b32.xlu0 %v414, 4
      %v435 = vpop.permute.xlu0 %434
      %436 = vrot.lane.b32.xlu0 %v415, 4
      %v437 = vpop.permute.xlu0 %436
      %438 = vrot.lane.b32.xlu0 %v416, 4
      %v439 = vpop.permute.xlu0 %438
      %440 = vrot.lane.b32.xlu0 %v417, 4
      %v441 = vpop.permute.xlu0 %440
      %vm450 = vcmask 64544
      %451 = vst.msk [vmem:[#allocation2] sm:$0xff] %vm450, %v427
      %452 = vst.msk [vmem:[#allocation2 + $0x8] sm:$0xff] %vm450, %v429
      %453 = vst.msk [vmem:[#allocation2 + $0x10] sm:$0xff] %vm450, %v431
      %454 = vst.msk [vmem:[#allocation2 + $0x18] sm:$0xff] %vm450, %v433
      %455 = vst.msk [vmem:[#allocation2 + $0x20] sm:$0xff] %vm450, %v435
      %456 = vst.msk [vmem:[#allocation2 + $0x28] sm:$0xff] %vm450, %v437
      %457 = vst.msk [vmem:[#allocation2 + $0x30] sm:$0xff] %vm450, %v439
      %458 = vst.msk [vmem:[#allocation2 + $0x38] sm:$0xff] %vm450, %v441
      %v459 = vld [vmem:[%s245] sm:$0xe]
      %v460 = vld [vmem:[%s245 + $0x4] sm:$0x1]
      %v461 = vld [vmem:[%s245 + $0x8] sm:$0xe]
      %v462 = vld [vmem:[%s245 + $0xc] sm:$0x1]
      %v463 = vld [vmem:[%s245 + $0x10] sm:$0xe]
      %v464 = vld [vmem:[%s245 + $0x14] sm:$0x1]
      %v465 = vld [vmem:[%s245 + $0x18] sm:$0xe]
      %v466 = vld [vmem:[%s245 + $0x1c] sm:$0x1]
      %v467 = vld [vmem:[%s245 + $0x20] sm:$0xe]
      %v468 = vld [vmem:[%s245 + $0x24] sm:$0x1]
      %v469 = vld [vmem:[%s245 + $0x28] sm:$0xe]
      %v470 = vld [vmem:[%s245 + $0x2c] sm:$0x1]
      %v471 = vld [vmem:[%s245 + $0x30] sm:$0xe]
      %v472 = vld [vmem:[%s245 + $0x34] sm:$0x1]
      %v473 = vld [vmem:[%s245 + $0x38] sm:$0xe]
      %v474 = vld [vmem:[%s245 + $0x3c] sm:$0x1]
      %vm491 = vcmask 1042432
      %vm492 = vcmask 1046532
      %vm493 = vmor %vm491, %vm492
      %v494 = vrot.slane %v459, 5
      %v495 = vrot.slane %v494, 4
      %v496 = vrot.slane %v460, 5
      %v497 = vsel %vm493, %v495, %v496
      %v498 = vrot.slane %v461, 5
      %v499 = vrot.slane %v498, 4
      %v500 = vrot.slane %v462, 5
      %v501 = vsel %vm493, %v499, %v500
      %v502 = vrot.slane %v463, 5
      %v503 = vrot.slane %v502, 4
      %v504 = vrot.slane %v464, 5
      %v505 = vsel %vm493, %v503, %v504
      %v506 = vrot.slane %v465, 5
      %v507 = vrot.slane %v506, 4
      %v508 = vrot.slane %v466, 5
      %v509 = vsel %vm493, %v507, %v508
      %v510 = vrot.slane %v467, 5
      %v511 = vrot.slane %v510, 4
      %v512 = vrot.slane %v468, 5
      %v513 = vsel %vm493, %v511, %v512
      %v514 = vrot.slane %v469, 5
      %v515 = vrot.slane %v514, 4
      %v516 = vrot.slane %v470, 5
      %v517 = vsel %vm493, %v515, %v516
      %v518 = vrot.slane %v471, 5
      %v519 = vrot.slane %v518, 4
      %v520 = vrot.slane %v472, 5
      %v521 = vsel %vm493, %v519, %v520
      %v522 = vrot.slane %v473, 5
      %v523 = vrot.slane %v522, 4
      %v524 = vrot.slane %v474, 5
      %v525 = vsel %vm493, %v523, %v524
      %v534 = vunpack.c.l.bf16 %v497
      %v535 = vunpack.c.l.bf16 %v501
      %v536 = vunpack.c.l.bf16 %v505
      %v537 = vunpack.c.l.bf16 %v509
      %v538 = vunpack.c.l.bf16 %v513
      %v539 = vunpack.c.l.bf16 %v517
      %v540 = vunpack.c.l.bf16 %v521
      %v541 = vunpack.c.l.bf16 %v525
      %550 = vrot.lane.b32.xlu0 %v534, 8
      %v551 = vpop.permute.xlu0 %550
      %552 = vrot.lane.b32.xlu0 %v535, 8
      %v553 = vpop.permute.xlu0 %552
      %554 = vrot.lane.b32.xlu0 %v536, 8
      %v555 = vpop.permute.xlu0 %554
      %556 = vrot.lane.b32.xlu0 %v537, 8
      %v557 = vpop.permute.xlu0 %556
      %558 = vrot.lane.b32.xlu0 %v538, 8
      %v559 = vpop.permute.xlu0 %558
      %560 = vrot.lane.b32.xlu0 %v539, 8
      %v561 = vpop.permute.xlu0 %560
      %562 = vrot.lane.b32.xlu0 %v540, 8
      %v563 = vpop.permute.xlu0 %562
      %564 = vrot.lane.b32.xlu0 %v541, 8
      %v565 = vpop.permute.xlu0 %564
      %vm574 = vcmask 97344
      %575 = vst.msk [vmem:[#allocation2] sm:$0xff] %vm574, %v551
      %576 = vst.msk [vmem:[#allocation2 + $0x8] sm:$0xff] %vm574, %v553
      %577 = vst.msk [vmem:[#allocation2 + $0x10] sm:$0xff] %vm574, %v555
      %578 = vst.msk [vmem:[#allocation2 + $0x18] sm:$0xff] %vm574, %v557
      %579 = vst.msk [vmem:[#allocation2 + $0x20] sm:$0xff] %vm574, %v559
      %580 = vst.msk [vmem:[#allocation2 + $0x28] sm:$0xff] %vm574, %v561
      %581 = vst.msk [vmem:[#allocation2 + $0x30] sm:$0xff] %vm574, %v563
      %582 = vst.msk [vmem:[#allocation2 + $0x38] sm:$0xff] %vm574, %v565
      %s583 = sadd.s32 %s240, 1
      %s584 = smul.u32 %s583, 2
      %s585 = sadd.s32 %s584, %s242
      %s586 = smul.addr %s585, 4
      %s587 = scalar_lea.vmem %s214, %s586
      %v588 = vld [vmem:[%s587] sm:$0xf]
      %v589 = vld [vmem:[%s587 + $0x8] sm:$0xf]
      %v590 = vld [vmem:[%s587 + $0x10] sm:$0xf]
      %v591 = vld [vmem:[%s587 + $0x18] sm:$0xf]
      %v592 = vld [vmem:[%s587 + $0x20] sm:$0xf]
      %v593 = vld [vmem:[%s587 + $0x28] sm:$0xf]
      %v594 = vld [vmem:[%s587 + $0x30] sm:$0xf]
      %v595 = vld [vmem:[%s587 + $0x38] sm:$0xf]
      %v596 = vunpack.c.l.bf16 %v588
      %v597 = vunpack.c.l.bf16 %v589
      %v598 = vunpack.c.l.bf16 %v590
      %v599 = vunpack.c.l.bf16 %v591
      %v600 = vunpack.c.l.bf16 %v592
      %v601 = vunpack.c.l.bf16 %v593
      %v602 = vunpack.c.l.bf16 %v594
      %v603 = vunpack.c.l.bf16 %v595
      %612 = vrot.lane.b32.xlu0 %v596, 12
      %v613 = vpop.permute.xlu0 %612
      %614 = vrot.lane.b32.xlu0 %v597, 12
      %v615 = vpop.permute.xlu0 %614
      %616 = vrot.lane.b32.xlu0 %v598, 12
      %v617 = vpop.permute.xlu0 %616
      %618 = vrot.lane.b32.xlu0 %v599, 12
      %v619 = vpop.permute.xlu0 %618
      %620 = vrot.lane.b32.xlu0 %v600, 12
      %v621 = vpop.permute.xlu0 %620
      %622 = vrot.lane.b32.xlu0 %v601, 12
      %v623 = vpop.permute.xlu0 %622
      %624 = vrot.lane.b32.xlu0 %v602, 12
      %v625 = vpop.permute.xlu0 %624
      %626 = vrot.lane.b32.xlu0 %v603, 12
      %v627 = vpop.permute.xlu0 %626
      %vm636 = vcmask 130144
      %637 = vst.msk [vmem:[#allocation2] sm:$0xff] %vm636, %v613
      %638 = vst.msk [vmem:[#allocation2 + $0x8] sm:$0xff] %vm636, %v615
      %639 = vst.msk [vmem:[#allocation2 + $0x10] sm:$0xff] %vm636, %v617
      %640 = vst.msk [vmem:[#allocation2 + $0x18] sm:$0xff] %vm636, %v619
      %641 = vst.msk [vmem:[#allocation2 + $0x20] sm:$0xff] %vm636, %v621
      %642 = vst.msk [vmem:[#allocation2 + $0x28] sm:$0xff] %vm636, %v623
      %643 = vst.msk [vmem:[#allocation2 + $0x30] sm:$0xff] %vm636, %v625
      %644 = vst.msk [vmem:[#allocation2 + $0x38] sm:$0xff] %vm636, %v627
      %v645 = vld [vmem:[%s587] sm:$0xf]
      %v646 = vld [vmem:[%s587 + $0x4] sm:$0x1]
      %v647 = vld [vmem:[%s587 + $0x8] sm:$0xf]
      %v648 = vld [vmem:[%s587 + $0xc] sm:$0x1]
      %v649 = vld [vmem:[%s587 + $0x10] sm:$0xf]
      %v650 = vld [vmem:[%s587 + $0x14] sm:$0x1]
      %v651 = vld [vmem:[%s587 + $0x18] sm:$0xf]
      %v652 = vld [vmem:[%s587 + $0x1c] sm:$0x1]
      %v653 = vld [vmem:[%s587 + $0x20] sm:$0xf]
      %v654 = vld [vmem:[%s587 + $0x24] sm:$0x1]
      %v655 = vld [vmem:[%s587 + $0x28] sm:$0xf]
      %v656 = vld [vmem:[%s587 + $0x2c] sm:$0x1]
      %v657 = vld [vmem:[%s587 + $0x30] sm:$0xf]
      %v658 = vld [vmem:[%s587 + $0x34] sm:$0x1]
      %v659 = vld [vmem:[%s587 + $0x38] sm:$0xf]
      %v660 = vld [vmem:[%s587 + $0x3c] sm:$0x1]
      %v662 = vshrl.u32 %v645, 16
      %v664 = vrot.slane %v662, 4
      %v665 = vshll.u32 %v645, 16
      %v667 = vrot.slane %v665, 5
      %v668 = vor.u32 %v664, %v667
      %v669 = vrot.slane %v668, 4
      %v671 = vshll.u32 %v646, 16
      %v673 = vrot.slane %v671, 5
      %v674 = vsel %vm289, %v669, %v673
      %v676 = vshrl.u32 %v647, 16
      %v678 = vrot.slane %v676, 4
      %v679 = vshll.u32 %v647, 16
      %v681 = vrot.slane %v679, 5
      %v682 = vor.u32 %v678, %v681
      %v683 = vrot.slane %v682, 4
      %v685 = vshll.u32 %v648, 16
      %v687 = vrot.slane %v685, 5
      %v688 = vsel %vm289, %v683, %v687
      %v690 = vshrl.u32 %v649, 16
      %v692 = vrot.slane %v690, 4
      %v693 = vshll.u32 %v649, 16
      %v695 = vrot.slane %v693, 5
      %v696 = vor.u32 %v692, %v695
      %v697 = vrot.slane %v696, 4
      %v699 = vshll.u32 %v650, 16
      %v701 = vrot.slane %v699, 5
      %v702 = vsel %vm289, %v697, %v701
      %v704 = vshrl.u32 %v651, 16
      %v706 = vrot.slane %v704, 4
      %v707 = vshll.u32 %v651, 16
      %v709 = vrot.slane %v707, 5
      %v710 = vor.u32 %v706, %v709
      %v711 = vrot.slane %v710, 4
      %v713 = vshll.u32 %v652, 16
      %v715 = vrot.slane %v713, 5
      %v716 = vsel %vm289, %v711, %v715
      %v718 = vshrl.u32 %v653, 16
      %v720 = vrot.slane %v718, 4
      %v721 = vshll.u32 %v653, 16
      %v723 = vrot.slane %v721, 5
      %v724 = vor.u32 %v720, %v723
      %v725 = vrot.slane %v724, 4
      %v727 = vshll.u32 %v654, 16
      %v729 = vrot.slane %v727, 5
      %v730 = vsel %vm289, %v725, %v729
      %v732 = vshrl.u32 %v655, 16
      %v734 = vrot.slane %v732, 4
      %v735 = vshll.u32 %v655, 16
      %v737 = vrot.slane %v735, 5
      %v738 = vor.u32 %v734, %v737
      %v739 = vrot.slane %v738, 4
      %v741 = vshll.u32 %v656, 16
      %v743 = vrot.slane %v741, 5
      %v744 = vsel %vm289, %v739, %v743
      %v746 = vshrl.u32 %v657, 16
      %v748 = vrot.slane %v746, 4
      %v749 = vshll.u32 %v657, 16
      %v751 = vrot.slane %v749, 5
      %v752 = vor.u32 %v748, %v751
      %v753 = vrot.slane %v752, 4
      %v755 = vshll.u32 %v658, 16
      %v757 = vrot.slane %v755, 5
      %v758 = vsel %vm289, %v753, %v757
      %v760 = vshrl.u32 %v659, 16
      %v762 = vrot.slane %v760, 4
      %v763 = vshll.u32 %v659, 16
      %v765 = vrot.slane %v763, 5
      %v766 = vor.u32 %v762, %v765
      %v767 = vrot.slane %v766, 4
      %v769 = vshll.u32 %v660, 16
      %v771 = vrot.slane %v769, 5
      %v772 = vsel %vm289, %v767, %v771
      %v781 = vunpack.c.l.bf16 %v674
      %v782 = vunpack.c.l.bf16 %v688
      %v783 = vunpack.c.l.bf16 %v702
      %v784 = vunpack.c.l.bf16 %v716
      %v785 = vunpack.c.l.bf16 %v730
      %v786 = vunpack.c.l.bf16 %v744
      %v787 = vunpack.c.l.bf16 %v758
      %v788 = vunpack.c.l.bf16 %v772
      %797 = vrot.lane.b32.xlu0 %v781, 16
      %v798 = vpop.permute.xlu0 %797
      %799 = vrot.lane.b32.xlu0 %v782, 16
      %v800 = vpop.permute.xlu0 %799
      %801 = vrot.lane.b32.xlu0 %v783, 16
      %v802 = vpop.permute.xlu0 %801
      %803 = vrot.lane.b32.xlu0 %v784, 16
      %v804 = vpop.permute.xlu0 %803
      %805 = vrot.lane.b32.xlu0 %v785, 16
      %v806 = vpop.permute.xlu0 %805
      %807 = vrot.lane.b32.xlu0 %v786, 16
      %v808 = vpop.permute.xlu0 %807
      %809 = vrot.lane.b32.xlu0 %v787, 16
      %v810 = vpop.permute.xlu0 %809
      %811 = vrot.lane.b32.xlu0 %v788, 16
      %v812 = vpop.permute.xlu0 %811
      %vm821 = vcmask 162944
      %822 = vst.msk [vmem:[#allocation2] sm:$0xff] %vm821, %v798
      %823 = vst.msk [vmem:[#allocation2 + $0x8] sm:$0xff] %vm821, %v800
      %824 = vst.msk [vmem:[#allocation2 + $0x10] sm:$0xff] %vm821, %v802
      %825 = vst.msk [vmem:[#allocation2 + $0x18] sm:$0xff] %vm821, %v804
      %826 = vst.msk [vmem:[#allocation2 + $0x20] sm:$0xff] %vm821, %v806
      %827 = vst.msk [vmem:[#allocation2 + $0x28] sm:$0xff] %vm821, %v808
      %828 = vst.msk [vmem:[#allocation2 + $0x30] sm:$0xff] %vm821, %v810
      %829 = vst.msk [vmem:[#allocation2 + $0x38] sm:$0xff] %vm821, %v812
      %v830 = vld [vmem:[%s587] sm:$0xe]
      %v831 = vld [vmem:[%s587 + $0x4] sm:$0x1]
      %v832 = vld [vmem:[%s587 + $0x8] sm:$0xe]
      %v833 = vld [vmem:[%s587 + $0xc] sm:$0x1]
      %v834 = vld [vmem:[%s587 + $0x10] sm:$0xe]
      %v835 = vld [vmem:[%s587 + $0x14] sm:$0x1]
      %v836 = vld [vmem:[%s587 + $0x18] sm:$0xe]
      %v837 = vld [vmem:[%s587 + $0x1c] sm:$0x1]
      %v838 = vld [vmem:[%s587 + $0x20] sm:$0xe]
      %v839 = vld [vmem:[%s587 + $0x24] sm:$0x1]
      %v840 = vld [vmem:[%s587 + $0x28] sm:$0xe]
      %v841 = vld [vmem:[%s587 + $0x2c] sm:$0x1]
      %v842 = vld [vmem:[%s587 + $0x30] sm:$0xe]
      %v843 = vld [vmem:[%s587 + $0x34] sm:$0x1]
      %v844 = vld [vmem:[%s587 + $0x38] sm:$0xe]
      %v845 = vld [vmem:[%s587 + $0x3c] sm:$0x1]
      %v862 = vrot.slane %v830, 5
      %v863 = vrot.slane %v862, 4
      %v864 = vrot.slane %v831, 5
      %v865 = vsel %vm493, %v863, %v864
      %v866 = vrot.slane %v832, 5
      %v867 = vrot.slane %v866, 4
      %v868 = vrot.slane %v833, 5
      %v869 = vsel %vm493, %v867, %v868
      %v870 = vrot.slane %v834, 5
      %v871 = vrot.slane %v870, 4
      %v872 = vrot.slane %v835, 5
      %v873 = vsel %vm493, %v871, %v872
      %v874 = vrot.slane %v836, 5
      %v875 = vrot.slane %v874, 4
      %v876 = vrot.slane %v837, 5
      %v877 = vsel %vm493, %v875, %v876
      %v878 = vrot.slane %v838, 5
      %v879 = vrot.slane %v878, 4
      %v880 = vrot.slane %v839, 5
      %v881 = vsel %vm493, %v879, %v880
      %v882 = vrot.slane %v840, 5
      %v883 = vrot.slane %v882, 4
      %v884 = vrot.slane %v841, 5
      %v885 = vsel %vm493, %v883, %v884
      %v886 = vrot.slane %v842, 5
      %v887 = vrot.slane %v886, 4
      %v888 = vrot.slane %v843, 5
      %v889 = vsel %vm493, %v887, %v888
      %v890 = vrot.slane %v844, 5
      %v891 = vrot.slane %v890, 4
      %v892 = vrot.slane %v845, 5
      %v893 = vsel %vm493, %v891, %v892
      %v902 = vunpack.c.l.bf16 %v865
      %v903 = vunpack.c.l.bf16 %v869
      %v904 = vunpack.c.l.bf16 %v873
      %v905 = vunpack.c.l.bf16 %v877
      %v906 = vunpack.c.l.bf16 %v881
      %v907 = vunpack.c.l.bf16 %v885
      %v908 = vunpack.c.l.bf16 %v889
      %v909 = vunpack.c.l.bf16 %v893
      %918 = vrot.lane.b32.xlu0 %v902, 20
      %v919 = vpop.permute.xlu0 %918
      %920 = vrot.lane.b32.xlu0 %v903, 20
      %v921 = vpop.permute.xlu0 %920
      %922 = vrot.lane.b32.xlu0 %v904, 20
      %v923 = vpop.permute.xlu0 %922
      %924 = vrot.lane.b32.xlu0 %v905, 20
      %v925 = vpop.permute.xlu0 %924
      %926 = vrot.lane.b32.xlu0 %v906, 20
      %v927 = vpop.permute.xlu0 %926
      %928 = vrot.lane.b32.xlu0 %v907, 20
      %v929 = vpop.permute.xlu0 %928
      %930 = vrot.lane.b32.xlu0 %v908, 20
      %v931 = vpop.permute.xlu0 %930
      %932 = vrot.lane.b32.xlu0 %v909, 20
      %v933 = vpop.permute.xlu0 %932
      %vm942 = vcmask 195744
      %943 = vst.msk [vmem:[#allocation2] sm:$0xff] %vm942, %v919
      %944 = vst.msk [vmem:[#allocation2 + $0x8] sm:$0xff] %vm942, %v921
      %945 = vst.msk [vmem:[#allocation2 + $0x10] sm:$0xff] %vm942, %v923
      %946 = vst.msk [vmem:[#allocation2 + $0x18] sm:$0xff] %vm942, %v925
      %947 = vst.msk [vmem:[#allocation2 + $0x20] sm:$0xff] %vm942, %v927
      %948 = vst.msk [vmem:[#allocation2 + $0x28] sm:$0xff] %vm942, %v929
      %949 = vst.msk [vmem:[#allocation2 + $0x30] sm:$0xff] %vm942, %v931
      %950 = vst.msk [vmem:[#allocation2 + $0x38] sm:$0xff] %vm942, %v933
      %s951 = sadd.s32 %s240, 2
      %s952 = smul.u32 %s951, 2
      %s953 = sadd.s32 %s952, %s242
      %s954 = smul.addr %s953, 4
      %s955 = scalar_lea.vmem %s214, %s954
      %v956 = vld [vmem:[%s955] sm:$0xf]
      %v957 = vld [vmem:[%s955 + $0x8] sm:$0xf]
      %v958 = vld [vmem:[%s955 + $0x10] sm:$0xf]
      %v959 = vld [vmem:[%s955 + $0x18] sm:$0xf]
      %v960 = vld [vmem:[%s955 + $0x20] sm:$0xf]
      %v961 = vld [vmem:[%s955 + $0x28] sm:$0xf]
      %v962 = vld [vmem:[%s955 + $0x30] sm:$0xf]
      %v963 = vld [vmem:[%s955 + $0x38] sm:$0xf]
      %v964 = vunpack.c.l.bf16 %v956
      %v965 = vunpack.c.l.bf16 %v957
      %v966 = vunpack.c.l.bf16 %v958
      %v967 = vunpack.c.l.bf16 %v959
      %v968 = vunpack.c.l.bf16 %v960
      %v969 = vunpack.c.l.bf16 %v961
      %v970 = vunpack.c.l.bf16 %v962
      %v971 = vunpack.c.l.bf16 %v963
      %980 = vrot.lane.b32.xlu0 %v964, 24
      %v981 = vpop.permute.xlu0 %980
      %982 = vrot.lane.b32.xlu0 %v965, 24
      %v983 = vpop.permute.xlu0 %982
      %984 = vrot.lane.b32.xlu0 %v966, 24
      %v985 = vpop.permute.xlu0 %984
      %986 = vrot.lane.b32.xlu0 %v967, 24
      %v987 = vpop.permute.xlu0 %986
      %988 = vrot.lane.b32.xlu0 %v968, 24
      %v989 = vpop.permute.xlu0 %988
      %990 = vrot.lane.b32.xlu0 %v969, 24
      %v991 = vpop.permute.xlu0 %990
      %992 = vrot.lane.b32.xlu0 %v970, 24
      %v993 = vpop.permute.xlu0 %992
      %994 = vrot.lane.b32.xlu0 %v971, 24
      %v995 = vpop.permute.xlu0 %994
      %vm1004 = vcmask 228544
      %1005 = vst.msk [vmem:[#allocation2] sm:$0xff] %vm1004, %v981
      %1006 = vst.msk [vmem:[#allocation2 + $0x8] sm:$0xff] %vm1004, %v983
      %1007 = vst.msk [vmem:[#allocation2 + $0x10] sm:$0xff] %vm1004, %v985
      %1008 = vst.msk [vmem:[#allocation2 + $0x18] sm:$0xff] %vm1004, %v987
      %1009 = vst.msk [vmem:[#allocation2 + $0x20] sm:$0xff] %vm1004, %v989
      %1010 = vst.msk [vmem:[#allocation2 + $0x28] sm:$0xff] %vm1004, %v991
      %1011 = vst.msk [vmem:[#allocation2 + $0x30] sm:$0xff] %vm1004, %v993
      %1012 = vst.msk [vmem:[#allocation2 + $0x38] sm:$0xff] %vm1004, %v995
      %v1013 = vld [vmem:[%s955] sm:$0xf]
      %v1014 = vld [vmem:[%s955 + $0x4] sm:$0x1]
      %v1015 = vld [vmem:[%s955 + $0x8] sm:$0xf]
      %v1016 = vld [vmem:[%s955 + $0xc] sm:$0x1]
      %v1017 = vld [vmem:[%s955 + $0x10] sm:$0xf]
      %v1018 = vld [vmem:[%s955 + $0x14] sm:$0x1]
      %v1019 = vld [vmem:[%s955 + $0x18] sm:$0xf]
      %v1020 = vld [vmem:[%s955 + $0x1c] sm:$0x1]
      %v1021 = vld [vmem:[%s955 + $0x20] sm:$0xf]
      %v1022 = vld [vmem:[%s955 + $0x24] sm:$0x1]
      %v1023 = vld [vmem:[%s955 + $0x28] sm:$0xf]
      %v1024 = vld [vmem:[%s955 + $0x2c] sm:$0x1]
      %v1025 = vld [vmem:[%s955 + $0x30] sm:$0xf]
      %v1026 = vld [vmem:[%s955 + $0x34] sm:$0x1]
      %v1027 = vld [vmem:[%s955 + $0x38] sm:$0xf]
      %v1028 = vld [vmem:[%s955 + $0x3c] sm:$0x1]
      %v1030 = vshrl.u32 %v1013, 16
      %v1032 = vrot.slane %v1030, 4
      %v1033 = vshll.u32 %v1013, 16
      %v1035 = vrot.slane %v1033, 5
      %v1036 = vor.u32 %v1032, %v1035
      %v1037 = vrot.slane %v1036, 4
      %v1039 = vshll.u32 %v1014, 16
      %v1041 = vrot.slane %v1039, 5
      %v1042 = vsel %vm289, %v1037, %v1041
      %v1044 = vshrl.u32 %v1015, 16
      %v1046 = vrot.slane %v1044, 4
      %v1047 = vshll.u32 %v1015, 16
      %v1049 = vrot.slane %v1047, 5
      %v1050 = vor.u32 %v1046, %v1049
      %v1051 = vrot.slane %v1050, 4
      %v1053 = vshll.u32 %v1016, 16
      %v1055 = vrot.slane %v1053, 5
      %v1056 = vsel %vm289, %v1051, %v1055
      %v1058 = vshrl.u32 %v1017, 16
      %v1060 = vrot.slane %v1058, 4
      %v1061 = vshll.u32 %v1017, 16
      %v1063 = vrot.slane %v1061, 5
      %v1064 = vor.u32 %v1060, %v1063
      %v1065 = vrot.slane %v1064, 4
      %v1067 = vshll.u32 %v1018, 16
      %v1069 = vrot.slane %v1067, 5
      %v1070 = vsel %vm289, %v1065, %v1069
      %v1072 = vshrl.u32 %v1019, 16
      %v1074 = vrot.slane %v1072, 4
      %v1075 = vshll.u32 %v1019, 16
      %v1077 = vrot.slane %v1075, 5
      %v1078 = vor.u32 %v1074, %v1077
      %v1079 = vrot.slane %v1078, 4
      %v1081 = vshll.u32 %v1020, 16
      %v1083 = vrot.slane %v1081, 5
      %v1084 = vsel %vm289, %v1079, %v1083
      %v1086 = vshrl.u32 %v1021, 16
      %v1088 = vrot.slane %v1086, 4
      %v1089 = vshll.u32 %v1021, 16
      %v1091 = vrot.slane %v1089, 5
      %v1092 = vor.u32 %v1088, %v1091
      %v1093 = vrot.slane %v1092, 4
      %v1095 = vshll.u32 %v1022, 16
      %v1097 = vrot.slane %v1095, 5
      %v1098 = vsel %vm289, %v1093, %v1097
      %v1100 = vshrl.u32 %v1023, 16
      %v1102 = vrot.slane %v1100, 4
      %v1103 = vshll.u32 %v1023, 16
      %v1105 = vrot.slane %v1103, 5
      %v1106 = vor.u32 %v1102, %v1105
      %v1107 = vrot.slane %v1106, 4
      %v1109 = vshll.u32 %v1024, 16
      %v1111 = vrot.slane %v1109, 5
      %v1112 = vsel %vm289, %v1107, %v1111
      %v1114 = vshrl.u32 %v1025, 16
      %v1116 = vrot.slane %v1114, 4
      %v1117 = vshll.u32 %v1025, 16
      %v1119 = vrot.slane %v1117, 5
      %v1120 = vor.u32 %v1116, %v1119
      %v1121 = vrot.slane %v1120, 4
      %v1123 = vshll.u32 %v1026, 16
      %v1125 = vrot.slane %v1123, 5
      %v1126 = vsel %vm289, %v1121, %v1125
      %v1128 = vshrl.u32 %v1027, 16
      %v1130 = vrot.slane %v1128, 4
      %v1131 = vshll.u32 %v1027, 16
      %v1133 = vrot.slane %v1131, 5
      %v1134 = vor.u32 %v1130, %v1133
      %v1135 = vrot.slane %v1134, 4
      %v1137 = vshll.u32 %v1028, 16
      %v1139 = vrot.slane %v1137, 5
      %v1140 = vsel %vm289, %v1135, %v1139
      %v1149 = vunpack.c.l.bf16 %v1042
      %v1150 = vunpack.c.l.bf16 %v1056
      %v1151 = vunpack.c.l.bf16 %v1070
      %v1152 = vunpack.c.l.bf16 %v1084
      %v1153 = vunpack.c.l.bf16 %v1098
      %v1154 = vunpack.c.l.bf16 %v1112
      %v1155 = vunpack.c.l.bf16 %v1126
      %v1156 = vunpack.c.l.bf16 %v1140
      %1165 = vrot.lane.b32.xlu0 %v1149, 28
      %v1166 = vpop.permute.xlu0 %1165
      %1167 = vrot.lane.b32.xlu0 %v1150, 28
      %v1168 = vpop.permute.xlu0 %1167
      %1169 = vrot.lane.b32.xlu0 %v1151, 28
      %v1170 = vpop.permute.xlu0 %1169
      %1171 = vrot.lane.b32.xlu0 %v1152, 28
      %v1172 = vpop.permute.xlu0 %1171
      %1173 = vrot.lane.b32.xlu0 %v1153, 28
      %v1174 = vpop.permute.xlu0 %1173
      %1175 = vrot.lane.b32.xlu0 %v1154, 28
      %v1176 = vpop.permute.xlu0 %1175
      %1177 = vrot.lane.b32.xlu0 %v1155, 28
      %v1178 = vpop.permute.xlu0 %1177
      %1179 = vrot.lane.b32.xlu0 %v1156, 28
      %v1180 = vpop.permute.xlu0 %1179
      %vm1189 = vcmask 261344
      %1190 = vst.msk [vmem:[#allocation2] sm:$0xff] %vm1189, %v1166
      %1191 = vst.msk [vmem:[#allocation2 + $0x8] sm:$0xff] %vm1189, %v1168
      %1192 = vst.msk [vmem:[#allocation2 + $0x10] sm:$0xff] %vm1189, %v1170
      %1193 = vst.msk [vmem:[#allocation2 + $0x18] sm:$0xff] %vm1189, %v1172
      %1194 = vst.msk [vmem:[#allocation2 + $0x20] sm:$0xff] %vm1189, %v1174
      %1195 = vst.msk [vmem:[#allocation2 + $0x28] sm:$0xff] %vm1189, %v1176
      %1196 = vst.msk [vmem:[#allocation2 + $0x30] sm:$0xff] %vm1189, %v1178
      %1197 = vst.msk [vmem:[#allocation2 + $0x38] sm:$0xff] %vm1189, %v1180
      %v1198 = vld [vmem:[%s955] sm:$0xe]
      %v1199 = vld [vmem:[%s955 + $0x4] sm:$0x1]
      %v1200 = vld [vmem:[%s955 + $0x8] sm:$0xe]
      %v1201 = vld [vmem:[%s955 + $0xc] sm:$0x1]
      %v1202 = vld [vmem:[%s955 + $0x10] sm:$0xe]
      %v1203 = vld [vmem:[%s955 + $0x14] sm:$0x1]
      %v1204 = vld [vmem:[%s955 + $0x18] sm:$0xe]
      %v1205 = vld [vmem:[%s955 + $0x1c] sm:$0x1]
      %v1206 = vld [vmem:[%s955 + $0x20] sm:$0xe]
      %v1207 = vld [vmem:[%s955 + $0x24] sm:$0x1]
      %v1208 = vld [vmem:[%s955 + $0x28] sm:$0xe]
      %v1209 = vld [vmem:[%s955 + $0x2c] sm:$0x1]
      %v1210 = vld [vmem:[%s955 + $0x30] sm:$0xe]
      %v1211 = vld [vmem:[%s955 + $0x34] sm:$0x1]
      %v1212 = vld [vmem:[%s955 + $0x38] sm:$0xe]
      %v1213 = vld [vmem:[%s955 + $0x3c] sm:$0x1]
      %v1230 = vrot.slane %v1198, 5
      %v1231 = vrot.slane %v1230, 4
      %v1232 = vrot.slane %v1199, 5
      %v1233 = vsel %vm493, %v1231, %v1232
      %v1234 = vrot.slane %v1200, 5
      %v1235 = vrot.slane %v1234, 4
      %v1236 = vrot.slane %v1201, 5
      %v1237 = vsel %vm493, %v1235, %v1236
      %v1238 = vrot.slane %v1202, 5
      %v1239 = vrot.slane %v1238, 4
      %v1240 = vrot.slane %v1203, 5
      %v1241 = vsel %vm493, %v1239, %v1240
      %v1242 = vrot.slane %v1204, 5
      %v1243 = vrot.slane %v1242, 4
      %v1244 = vrot.slane %v1205, 5
      %v1245 = vsel %vm493, %v1243, %v1244
      %v1246 = vrot.slane %v1206, 5
      %v1247 = vrot.slane %v1246, 4
      %v1248 = vrot.slane %v1207, 5
      %v1249 = vsel %vm493, %v1247, %v1248
      %v1250 = vrot.slane %v1208, 5
      %v1251 = vrot.slane %v1250, 4
      %v1252 = vrot.slane %v1209, 5
      %v1253 = vsel %vm493, %v1251, %v1252
      %v1254 = vrot.slane %v1210, 5
      %v1255 = vrot.slane %v1254, 4
      %v1256 = vrot.slane %v1211, 5
      %v1257 = vsel %vm493, %v1255, %v1256
      %v1258 = vrot.slane %v1212, 5
      %v1259 = vrot.slane %v1258, 4
      %v1260 = vrot.slane %v1213, 5
      %v1261 = vsel %vm493, %v1259, %v1260
      %v1270 = vunpack.c.l.bf16 %v1233
      %v1271 = vunpack.c.l.bf16 %v1237
      %v1272 = vunpack.c.l.bf16 %v1241
      %v1273 = vunpack.c.l.bf16 %v1245
      %v1274 = vunpack.c.l.bf16 %v1249
      %v1275 = vunpack.c.l.bf16 %v1253
      %v1276 = vunpack.c.l.bf16 %v1257
      %v1277 = vunpack.c.l.bf16 %v1261
      %1286 = vrot.lane.b32.xlu0 %v1270, 32
      %v1287 = vpop.permute.xlu0 %1286
      %1288 = vrot.lane.b32.xlu0 %v1271, 32
      %v1289 = vpop.permute.xlu0 %1288
      %1290 = vrot.lane.b32.xlu0 %v1272, 32
      %v1291 = vpop.permute.xlu0 %1290
      %1292 = vrot.lane.b32.xlu0 %v1273, 32
      %v1293 = vpop.permute.xlu0 %1292
      %1294 = vrot.lane.b32.xlu0 %v1274, 32
      %v1295 = vpop.permute.xlu0 %1294
      %1296 = vrot.lane.b32.xlu0 %v1275, 32
      %v1297 = vpop.permute.xlu0 %1296
      %1298 = vrot.lane.b32.xlu0 %v1276, 32
      %v1299 = vpop.permute.xlu0 %1298
      %1300 = vrot.lane.b32.xlu0 %v1277, 32
      %v1301 = vpop.permute.xlu0 %1300
      %vm1310 = vcmask 294144
      %1311 = vst.msk [vmem:[#allocation2] sm:$0xff] %vm1310, %v1287
      %1312 = vst.msk [vmem:[#allocation2 + $0x8] sm:$0xff] %vm1310, %v1289
      %1313 = vst.msk [vmem:[#allocation2 + $0x10] sm:$0xff] %vm1310, %v1291
      %1314 = vst.msk [vmem:[#allocation2 + $0x18] sm:$0xff] %vm1310, %v1293
      %1315 = vst.msk [vmem:[#allocation2 + $0x20] sm:$0xff] %vm1310, %v1295
      %1316 = vst.msk [vmem:[#allocation2 + $0x28] sm:$0xff] %vm1310, %v1297
      %1317 = vst.msk [vmem:[#allocation2 + $0x30] sm:$0xff] %vm1310, %v1299
      %1318 = vst.msk [vmem:[#allocation2 + $0x38] sm:$0xff] %vm1310, %v1301
      %s1319 = sadd.s32 %s21, 1
      %s1320 = smul.u32 %s1319, 20
      %s1321 = sadd.s32 %s241, %s1320
      %s1322 = smul.addr %s1321, 4
      %s1323 = scalar_lea.vmem %s214, %s1322
      %v1324 = vld [vmem:[%s1323] sm:$0xf]
      %v1325 = vld [vmem:[%s1323 + $0x8] sm:$0xf]
      %v1326 = vld [vmem:[%s1323 + $0x10] sm:$0xf]
      %v1327 = vld [vmem:[%s1323 + $0x18] sm:$0xf]
      %v1328 = vld [vmem:[%s1323 + $0x20] sm:$0xf]
      %v1329 = vld [vmem:[%s1323 + $0x28] sm:$0xf]
      %v1330 = vld [vmem:[%s1323 + $0x30] sm:$0xf]
      %v1331 = vld [vmem:[%s1323 + $0x38] sm:$0xf]
      %v1332 = vunpack.c.l.bf16 %v1324
      %v1333 = vunpack.c.l.bf16 %v1325
      %v1334 = vunpack.c.l.bf16 %v1326
      %v1335 = vunpack.c.l.bf16 %v1327
      %v1336 = vunpack.c.l.bf16 %v1328
      %v1337 = vunpack.c.l.bf16 %v1329
      %v1338 = vunpack.c.l.bf16 %v1330
      %v1339 = vunpack.c.l.bf16 %v1331
      %1348 = vrot.lane.b32.xlu0 %v1332, 36
      %v1349 = vpop.permute.xlu0 %1348
      %1350 = vrot.lane.b32.xlu0 %v1333, 36
      %v1351 = vpop.permute.xlu0 %1350
      %1352 = vrot.lane.b32.xlu0 %v1334, 36
      %v1353 = vpop.permute.xlu0 %1352
      %1354 = vrot.lane.b32.xlu0 %v1335, 36
      %v1355 = vpop.permute.xlu0 %1354
      %1356 = vrot.lane.b32.xlu0 %v1336, 36
      %v1357 = vpop.permute.xlu0 %1356
      %1358 = vrot.lane.b32.xlu0 %v1337, 36
      %v1359 = vpop.permute.xlu0 %1358
      %1360 = vrot.lane.b32.xlu0 %v1338, 36
      %v1361 = vpop.permute.xlu0 %1360
      %1362 = vrot.lane.b32.xlu0 %v1339, 36
      %v1363 = vpop.permute.xlu0 %1362
      %vm1372 = vcmask 326944
      %1373 = vst.msk [vmem:[#allocation2] sm:$0xff] %vm1372, %v1349
      %1374 = vst.msk [vmem:[#allocation2 + $0x8] sm:$0xff] %vm1372, %v1351
      %1375 = vst.msk [vmem:[#allocation2 + $0x10] sm:$0xff] %vm1372, %v1353
      %1376 = vst.msk [vmem:[#allocation2 + $0x18] sm:$0xff] %vm1372, %v1355
      %1377 = vst.msk [vmem:[#allocation2 + $0x20] sm:$0xff] %vm1372, %v1357
      %1378 = vst.msk [vmem:[#allocation2 + $0x28] sm:$0xff] %vm1372, %v1359
      %1379 = vst.msk [vmem:[#allocation2 + $0x30] sm:$0xff] %vm1372, %v1361
      %1380 = vst.msk [vmem:[#allocation2 + $0x38] sm:$0xff] %vm1372, %v1363
      %v1381 = vld [vmem:[%s1323] sm:$0xf]
      %v1382 = vld [vmem:[%s1323 + $0x4] sm:$0x1]
      %v1383 = vld [vmem:[%s1323 + $0x8] sm:$0xf]
      %v1384 = vld [vmem:[%s1323 + $0xc] sm:$0x1]
      %v1385 = vld [vmem:[%s1323 + $0x10] sm:$0xf]
      %v1386 = vld [vmem:[%s1323 + $0x14] sm:$0x1]
      %v1387 = vld [vmem:[%s1323 + $0x18] sm:$0xf]
      %v1388 = vld [vmem:[%s1323 + $0x1c] sm:$0x1]
      %v1389 = vld [vmem:[%s1323 + $0x20] sm:$0xf]
      %v1390 = vld [vmem:[%s1323 + $0x24] sm:$0x1]
      %v1391 = vld [vmem:[%s1323 + $0x28] sm:$0xf]
      %v1392 = vld [vmem:[%s1323 + $0x2c] sm:$0x1]
      %v1393 = vld [vmem:[%s1323 + $0x30] sm:$0xf]
      %v1394 = vld [vmem:[%s1323 + $0x34] sm:$0x1]
      %v1395 = vld [vmem:[%s1323 + $0x38] sm:$0xf]
      %v1396 = vld [vmem:[%s1323 + $0x3c] sm:$0x1]
      %v1398 = vshrl.u32 %v1381, 16
      %v1400 = vrot.slane %v1398, 4
      %v1401 = vshll.u32 %v1381, 16
      %v1403 = vrot.slane %v1401, 5
      %v1404 = vor.u32 %v1400, %v1403
      %v1405 = vrot.slane %v1404, 4
      %v1407 = vshll.u32 %v1382, 16
      %v1409 = vrot.slane %v1407, 5
      %v1410 = vsel %vm289, %v1405, %v1409
      %v1412 = vshrl.u32 %v1383, 16
      %v1414 = vrot.slane %v1412, 4
      %v1415 = vshll.u32 %v1383, 16
      %v1417 = vrot.slane %v1415, 5
      %v1418 = vor.u32 %v1414, %v1417
      %v1419 = vrot.slane %v1418, 4
      %v1421 = vshll.u32 %v1384, 16
      %v1423 = vrot.slane %v1421, 5
      %v1424 = vsel %vm289, %v1419, %v1423
      %v1426 = vshrl.u32 %v1385, 16
      %v1428 = vrot.slane %v1426, 4
      %v1429 = vshll.u32 %v1385, 16
      %v1431 = vrot.slane %v1429, 5
      %v1432 = vor.u32 %v1428, %v1431
      %v1433 = vrot.slane %v1432, 4
      %v1435 = vshll.u32 %v1386, 16
      %v1437 = vrot.slane %v1435, 5
      %v1438 = vsel %vm289, %v1433, %v1437
      %v1440 = vshrl.u32 %v1387, 16
      %v1442 = vrot.slane %v1440, 4
      %v1443 = vshll.u32 %v1387, 16
      %v1445 = vrot.slane %v1443, 5
      %v1446 = vor.u32 %v1442, %v1445
      %v1447 = vrot.slane %v1446, 4
      %v1449 = vshll.u32 %v1388, 16
      %v1451 = vrot.slane %v1449, 5
      %v1452 = vsel %vm289, %v1447, %v1451
      %v1454 = vshrl.u32 %v1389, 16
      %v1456 = vrot.slane %v1454, 4
      %v1457 = vshll.u32 %v1389, 16
      %v1459 = vrot.slane %v1457, 5
      %v1460 = vor.u32 %v1456, %v1459
      %v1461 = vrot.slane %v1460, 4
      %v1463 = vshll.u32 %v1390, 16
      %v1465 = vrot.slane %v1463, 5
      %v1466 = vsel %vm289, %v1461, %v1465
      %v1468 = vshrl.u32 %v1391, 16
      %v1470 = vrot.slane %v1468, 4
      %v1471 = vshll.u32 %v1391, 16
      %v1473 = vrot.slane %v1471, 5
      %v1474 = vor.u32 %v1470, %v1473
      %v1475 = vrot.slane %v1474, 4
      %v1477 = vshll.u32 %v1392, 16
      %v1479 = vrot.slane %v1477, 5
      %v1480 = vsel %vm289, %v1475, %v1479
      %v1482 = vshrl.u32 %v1393, 16
      %v1484 = vrot.slane %v1482, 4
      %v1485 = vshll.u32 %v1393, 16
      %v1487 = vrot.slane %v1485, 5
      %v1488 = vor.u32 %v1484, %v1487
      %v1489 = vrot.slane %v1488, 4
      %v1491 = vshll.u32 %v1394, 16
      %v1493 = vrot.slane %v1491, 5
      %v1494 = vsel %vm289, %v1489, %v1493
      %v1496 = vshrl.u32 %v1395, 16
      %v1498 = vrot.slane %v1496, 4
      %v1499 = vshll.u32 %v1395, 16
      %v1501 = vrot.slane %v1499, 5
      %v1502 = vor.u32 %v1498, %v1501
      %v1503 = vrot.slane %v1502, 4
      %v1505 = vshll.u32 %v1396, 16
      %v1507 = vrot.slane %v1505, 5
      %v1508 = vsel %vm289, %v1503, %v1507
      %v1517 = vunpack.c.l.bf16 %v1410
      %v1518 = vunpack.c.l.bf16 %v1424
      %v1519 = vunpack.c.l.bf16 %v1438
      %v1520 = vunpack.c.l.bf16 %v1452
      %v1521 = vunpack.c.l.bf16 %v1466
      %v1522 = vunpack.c.l.bf16 %v1480
      %v1523 = vunpack.c.l.bf16 %v1494
      %v1524 = vunpack.c.l.bf16 %v1508
      %1533 = vrot.lane.b32.xlu0 %v1517, 40
      %v1534 = vpop.permute.xlu0 %1533
      %1535 = vrot.lane.b32.xlu0 %v1518, 40
      %v1536 = vpop.permute.xlu0 %1535
      %1537 = vrot.lane.b32.xlu0 %v1519, 40
      %v1538 = vpop.permute.xlu0 %1537
      %1539 = vrot.lane.b32.xlu0 %v1520, 40
      %v1540 = vpop.permute.xlu0 %1539
      %1541 = vrot.lane.b32.xlu0 %v1521, 40
      %v1542 = vpop.permute.xlu0 %1541
      %1543 = vrot.lane.b32.xlu0 %v1522, 40
      %v1544 = vpop.permute.xlu0 %1543
      %1545 = vrot.lane.b32.xlu0 %v1523, 40
      %v1546 = vpop.permute.xlu0 %1545
      %1547 = vrot.lane.b32.xlu0 %v1524, 40
      %v1548 = vpop.permute.xlu0 %1547
      %vm1557 = vcmask 359744
      %1558 = vst.msk [vmem:[#allocation2] sm:$0xff] %vm1557, %v1534
      %1559 = vst.msk [vmem:[#allocation2 + $0x8] sm:$0xff] %vm1557, %v1536
      %1560 = vst.msk [vmem:[#allocation2 + $0x10] sm:$0xff] %vm1557, %v1538
      %1561 = vst.msk [vmem:[#allocation2 + $0x18] sm:$0xff] %vm1557, %v1540
      %1562 = vst.msk [vmem:[#allocation2 + $0x20] sm:$0xff] %vm1557, %v1542
      %1563 = vst.msk [vmem:[#allocation2 + $0x28] sm:$0xff] %vm1557, %v1544
      %1564 = vst.msk [vmem:[#allocation2 + $0x30] sm:$0xff] %vm1557, %v1546
      %1565 = vst.msk [vmem:[#allocation2 + $0x38] sm:$0xff] %vm1557, %v1548
      %v1566 = vld [vmem:[%s1323] sm:$0xe]
      %v1567 = vld [vmem:[%s1323 + $0x4] sm:$0x1]
      %v1568 = vld [vmem:[%s1323 + $0x8] sm:$0xe]
      %v1569 = vld [vmem:[%s1323 + $0xc] sm:$0x1]
      %v1570 = vld [vmem:[%s1323 + $0x10] sm:$0xe]
      %v1571 = vld [vmem:[%s1323 + $0x14] sm:$0x1]
      %v1572 = vld [vmem:[%s1323 + $0x18] sm:$0xe]
      %v1573 = vld [vmem:[%s1323 + $0x1c] sm:$0x1]
      %v1574 = vld [vmem:[%s1323 + $0x20] sm:$0xe]
      %v1575 = vld [vmem:[%s1323 + $0x24] sm:$0x1]
      %v1576 = vld [vmem:[%s1323 + $0x28] sm:$0xe]
      %v1577 = vld [vmem:[%s1323 + $0x2c] sm:$0x1]
      %v1578 = vld [vmem:[%s1323 + $0x30] sm:$0xe]
      %v1579 = vld [vmem:[%s1323 + $0x34] sm:$0x1]
      %v1580 = vld [vmem:[%s1323 + $0x38] sm:$0xe]
      %v1581 = vld [vmem:[%s1323 + $0x3c] sm:$0x1]
      %v1598 = vrot.slane %v1566, 5
      %v1599 = vrot.slane %v1598, 4
      %v1600 = vrot.slane %v1567, 5
      %v1601 = vsel %vm493, %v1599, %v1600
      %v1602 = vrot.slane %v1568, 5
      %v1603 = vrot.slane %v1602, 4
      %v1604 = vrot.slane %v1569, 5
      %v1605 = vsel %vm493, %v1603, %v1604
      %v1606 = vrot.slane %v1570, 5
      %v1607 = vrot.slane %v1606, 4
      %v1608 = vrot.slane %v1571, 5
      %v1609 = vsel %vm493, %v1607, %v1608
      %v1610 = vrot.slane %v1572, 5
      %v1611 = vrot.slane %v1610, 4
      %v1612 = vrot.slane %v1573, 5
      %v1613 = vsel %vm493, %v1611, %v1612
      %v1614 = vrot.slane %v1574, 5
      %v1615 = vrot.slane %v1614, 4
      %v1616 = vrot.slane %v1575, 5
      %v1617 = vsel %vm493, %v1615, %v1616
      %v1618 = vrot.slane %v1576, 5
      %v1619 = vrot.slane %v1618, 4
      %v1620 = vrot.slane %v1577, 5
      %v1621 = vsel %vm493, %v1619, %v1620
      %v1622 = vrot.slane %v1578, 5
      %v1623 = vrot.slane %v1622, 4
      %v1624 = vrot.slane %v1579, 5
      %v1625 = vsel %vm493, %v1623, %v1624
      %v1626 = vrot.slane %v1580, 5
      %v1627 = vrot.slane %v1626, 4
      %v1628 = vrot.slane %v1581, 5
      %v1629 = vsel %vm493, %v1627, %v1628
      %v1638 = vunpack.c.l.bf16 %v1601
      %v1639 = vunpack.c.l.bf16 %v1605
      %v1640 = vunpack.c.l.bf16 %v1609
      %v1641 = vunpack.c.l.bf16 %v1613
      %v1642 = vunpack.c.l.bf16 %v1617
      %v1643 = vunpack.c.l.bf16 %v1621
      %v1644 = vunpack.c.l.bf16 %v1625
      %v1645 = vunpack.c.l.bf16 %v1629
      %1654 = vrot.lane.b32.xlu0 %v1638, 44
      %v1655 = vpop.permute.xlu0 %1654
      %1656 = vrot.lane.b32.xlu0 %v1639, 44
      %v1657 = vpop.permute.xlu0 %1656
      %1658 = vrot.lane.b32.xlu0 %v1640, 44
      %v1659 = vpop.permute.xlu0 %1658
      %1660 = vrot.lane.b32.xlu0 %v1641, 44
      %v1661 = vpop.permute.xlu0 %1660
      %1662 = vrot.lane.b32.xlu0 %v1642, 44
      %v1663 = vpop.permute.xlu0 %1662
      %1664 = vrot.lane.b32.xlu0 %v1643, 44
      %v1665 = vpop.permute.xlu0 %1664
      %1666 = vrot.lane.b32.xlu0 %v1644, 44
      %v1667 = vpop.permute.xlu0 %1666
      %1668 = vrot.lane.b32.xlu0 %v1645, 44
      %v1669 = vpop.permute.xlu0 %1668
      %vm1678 = vcmask 392544
      %1679 = vst.msk [vmem:[#allocation2] sm:$0xff] %vm1678, %v1655
      %1680 = vst.msk [vmem:[#allocation2 + $0x8] sm:$0xff] %vm1678, %v1657
      %1681 = vst.msk [vmem:[#allocation2 + $0x10] sm:$0xff] %vm1678, %v1659
      %1682 = vst.msk [vmem:[#allocation2 + $0x18] sm:$0xff] %vm1678, %v1661
      %1683 = vst.msk [vmem:[#allocation2 + $0x20] sm:$0xff] %vm1678, %v1663
      %1684 = vst.msk [vmem:[#allocation2 + $0x28] sm:$0xff] %vm1678, %v1665
      %1685 = vst.msk [vmem:[#allocation2 + $0x30] sm:$0xff] %vm1678, %v1667
      %1686 = vst.msk [vmem:[#allocation2 + $0x38] sm:$0xff] %vm1678, %v1669
      %s1687 = sadd.s32 %s584, %s1320
      %s1688 = smul.addr %s1687, 4
      %s1689 = scalar_lea.vmem %s214, %s1688
      %v1690 = vld [vmem:[%s1689] sm:$0xf]
      %v1691 = vld [vmem:[%s1689 + $0x8] sm:$0xf]
      %v1692 = vld [vmem:[%s1689 + $0x10] sm:$0xf]
      %v1693 = vld [vmem:[%s1689 + $0x18] sm:$0xf]
      %v1694 = vld [vmem:[%s1689 + $0x20] sm:$0xf]
      %v1695 = vld [vmem:[%s1689 + $0x28] sm:$0xf]
      %v1696 = vld [vmem:[%s1689 + $0x30] sm:$0xf]
      %v1697 = vld [vmem:[%s1689 + $0x38] sm:$0xf]
      %v1698 = vunpack.c.l.bf16 %v1690
      %v1699 = vunpack.c.l.bf16 %v1691
      %v1700 = vunpack.c.l.bf16 %v1692
      %v1701 = vunpack.c.l.bf16 %v1693
      %v1702 = vunpack.c.l.bf16 %v1694
      %v1703 = vunpack.c.l.bf16 %v1695
      %v1704 = vunpack.c.l.bf16 %v1696
      %v1705 = vunpack.c.l.bf16 %v1697
      %1714 = vrot.lane.b32.xlu0 %v1698, 48
      %v1715 = vpop.permute.xlu0 %1714
      %1716 = vrot.lane.b32.xlu0 %v1699, 48
      %v1717 = vpop.permute.xlu0 %1716
      %1718 = vrot.lane.b32.xlu0 %v1700, 48
      %v1719 = vpop.permute.xlu0 %1718
      %1720 = vrot.lane.b32.xlu0 %v1701, 48
      %v1721 = vpop.permute.xlu0 %1720
      %1722 = vrot.lane.b32.xlu0 %v1702, 48
      %v1723 = vpop.permute.xlu0 %1722
      %1724 = vrot.lane.b32.xlu0 %v1703, 48
      %v1725 = vpop.permute.xlu0 %1724
      %1726 = vrot.lane.b32.xlu0 %v1704, 48
      %v1727 = vpop.permute.xlu0 %1726
      %1728 = vrot.lane.b32.xlu0 %v1705, 48
      %v1729 = vpop.permute.xlu0 %1728
      %vm1738 = vcmask 425344
      %1739 = vst.msk [vmem:[#allocation2] sm:$0xff] %vm1738, %v1715
      %1740 = vst.msk [vmem:[#allocation2 + $0x8] sm:$0xff] %vm1738, %v1717
      %1741 = vst.msk [vmem:[#allocation2 + $0x10] sm:$0xff] %vm1738, %v1719
      %1742 = vst.msk [vmem:[#allocation2 + $0x18] sm:$0xff] %vm1738, %v1721
      %1743 = vst.msk [vmem:[#allocation2 + $0x20] sm:$0xff] %vm1738, %v1723
      %1744 = vst.msk [vmem:[#allocation2 + $0x28] sm:$0xff] %vm1738, %v1725
      %1745 = vst.msk [vmem:[#allocation2 + $0x30] sm:$0xff] %vm1738, %v1727
      %1746 = vst.msk [vmem:[#allocation2 + $0x38] sm:$0xff] %vm1738, %v1729
      %v1747 = vld [vmem:[%s1689] sm:$0xf]
      %v1748 = vld [vmem:[%s1689 + $0x4] sm:$0x1]
      %v1749 = vld [vmem:[%s1689 + $0x8] sm:$0xf]
      %v1750 = vld [vmem:[%s1689 + $0xc] sm:$0x1]
      %v1751 = vld [vmem:[%s1689 + $0x10] sm:$0xf]
      %v1752 = vld [vmem:[%s1689 + $0x14] sm:$0x1]
      %v1753 = vld [vmem:[%s1689 + $0x18] sm:$0xf]
      %v1754 = vld [vmem:[%s1689 + $0x1c] sm:$0x1]
      %v1755 = vld [vmem:[%s1689 + $0x20] sm:$0xf]
      %v1756 = vld [vmem:[%s1689 + $0x24] sm:$0x1]
      %v1757 = vld [vmem:[%s1689 + $0x28] sm:$0xf]
      %v1758 = vld [vmem:[%s1689 + $0x2c] sm:$0x1]
      %v1759 = vld [vmem:[%s1689 + $0x30] sm:$0xf]
      %v1760 = vld [vmem:[%s1689 + $0x34] sm:$0x1]
      %v1761 = vld [vmem:[%s1689 + $0x38] sm:$0xf]
      %v1762 = vld [vmem:[%s1689 + $0x3c] sm:$0x1]
      %v1764 = vshrl.u32 %v1747, 16
      %v1766 = vrot.slane %v1764, 4
      %v1767 = vshll.u32 %v1747, 16
      %v1769 = vrot.slane %v1767, 5
      %v1770 = vor.u32 %v1766, %v1769
      %v1771 = vrot.slane %v1770, 4
      %v1773 = vshll.u32 %v1748, 16
      %v1775 = vrot.slane %v1773, 5
      %v1776 = vsel %vm289, %v1771, %v1775
      %v1778 = vshrl.u32 %v1749, 16
      %v1780 = vrot.slane %v1778, 4
      %v1781 = vshll.u32 %v1749, 16
      %v1783 = vrot.slane %v1781, 5
      %v1784 = vor.u32 %v1780, %v1783
      %v1785 = vrot.slane %v1784, 4
      %v1787 = vshll.u32 %v1750, 16
      %v1789 = vrot.slane %v1787, 5
      %v1790 = vsel %vm289, %v1785, %v1789
      %v1792 = vshrl.u32 %v1751, 16
      %v1794 = vrot.slane %v1792, 4
      %v1795 = vshll.u32 %v1751, 16
      %v1797 = vrot.slane %v1795, 5
      %v1798 = vor.u32 %v1794, %v1797
      %v1799 = vrot.slane %v1798, 4
      %v1801 = vshll.u32 %v1752, 16
      %v1803 = vrot.slane %v1801, 5
      %v1804 = vsel %vm289, %v1799, %v1803
      %v1806 = vshrl.u32 %v1753, 16
      %v1808 = vrot.slane %v1806, 4
      %v1809 = vshll.u32 %v1753, 16
      %v1811 = vrot.slane %v1809, 5
      %v1812 = vor.u32 %v1808, %v1811
      %v1813 = vrot.slane %v1812, 4
      %v1815 = vshll.u32 %v1754, 16
      %v1817 = vrot.slane %v1815, 5
      %v1818 = vsel %vm289, %v1813, %v1817
      %v1820 = vshrl.u32 %v1755, 16
      %v1822 = vrot.slane %v1820, 4
      %v1823 = vshll.u32 %v1755, 16
      %v1825 = vrot.slane %v1823, 5
      %v1826 = vor.u32 %v1822, %v1825
      %v1827 = vrot.slane %v1826, 4
      %v1829 = vshll.u32 %v1756, 16
      %v1831 = vrot.slane %v1829, 5
      %v1832 = vsel %vm289, %v1827, %v1831
      %v1834 = vshrl.u32 %v1757, 16
      %v1836 = vrot.slane %v1834, 4
      %v1837 = vshll.u32 %v1757, 16
      %v1839 = vrot.slane %v1837, 5
      %v1840 = vor.u32 %v1836, %v1839
      %v1841 = vrot.slane %v1840, 4
      %v1843 = vshll.u32 %v1758, 16
      %v1845 = vrot.slane %v1843, 5
      %v1846 = vsel %vm289, %v1841, %v1845
      %v1848 = vshrl.u32 %v1759, 16
      %v1850 = vrot.slane %v1848, 4
      %v1851 = vshll.u32 %v1759, 16
      %v1853 = vrot.slane %v1851, 5
      %v1854 = vor.u32 %v1850, %v1853
      %v1855 = vrot.slane %v1854, 4
      %v1857 = vshll.u32 %v1760, 16
      %v1859 = vrot.slane %v1857, 5
      %v1860 = vsel %vm289, %v1855, %v1859
      %v1862 = vshrl.u32 %v1761, 16
      %v1864 = vrot.slane %v1862, 4
      %v1865 = vshll.u32 %v1761, 16
      %v1867 = vrot.slane %v1865, 5
      %v1868 = vor.u32 %v1864, %v1867
      %v1869 = vrot.slane %v1868, 4
      %v1871 = vshll.u32 %v1762, 16
      %v1873 = vrot.slane %v1871, 5
      %v1874 = vsel %vm289, %v1869, %v1873
      %v1883 = vunpack.c.l.bf16 %v1776
      %v1884 = vunpack.c.l.bf16 %v1790
      %v1885 = vunpack.c.l.bf16 %v1804
      %v1886 = vunpack.c.l.bf16 %v1818
      %v1887 = vunpack.c.l.bf16 %v1832
      %v1888 = vunpack.c.l.bf16 %v1846
      %v1889 = vunpack.c.l.bf16 %v1860
      %v1890 = vunpack.c.l.bf16 %v1874
      %1899 = vrot.lane.b32.xlu0 %v1883, 52
      %v1900 = vpop.permute.xlu0 %1899
      %1901 = vrot.lane.b32.xlu0 %v1884, 52
      %v1902 = vpop.permute.xlu0 %1901
      %1903 = vrot.lane.b32.xlu0 %v1885, 52
      %v1904 = vpop.permute.xlu0 %1903
      %1905 = vrot.lane.b32.xlu0 %v1886, 52
      %v1906 = vpop.permute.xlu0 %1905
      %1907 = vrot.lane.b32.xlu0 %v1887, 52
      %v1908 = vpop.permute.xlu0 %1907
      %1909 = vrot.lane.b32.xlu0 %v1888, 52
      %v1910 = vpop.permute.xlu0 %1909
      %1911 = vrot.lane.b32.xlu0 %v1889, 52
      %v1912 = vpop.permute.xlu0 %1911
      %1913 = vrot.lane.b32.xlu0 %v1890, 52
      %v1914 = vpop.permute.xlu0 %1913
      %vm1923 = vcmask 458144
      %1924 = vst.msk [vmem:[#allocation2] sm:$0xff] %vm1923, %v1900
      %1925 = vst.msk [vmem:[#allocation2 + $0x8] sm:$0xff] %vm1923, %v1902
      %1926 = vst.msk [vmem:[#allocation2 + $0x10] sm:$0xff] %vm1923, %v1904
      %1927 = vst.msk [vmem:[#allocation2 + $0x18] sm:$0xff] %vm1923, %v1906
      %1928 = vst.msk [vmem:[#allocation2 + $0x20] sm:$0xff] %vm1923, %v1908
      %1929 = vst.msk [vmem:[#allocation2 + $0x28] sm:$0xff] %vm1923, %v1910
      %1930 = vst.msk [vmem:[#allocation2 + $0x30] sm:$0xff] %vm1923, %v1912
      %1931 = vst.msk [vmem:[#allocation2 + $0x38] sm:$0xff] %vm1923, %v1914
      %v1932 = vld [vmem:[%s1689] sm:$0xe]
      %v1933 = vld [vmem:[%s1689 + $0x4] sm:$0x1]
      %v1934 = vld [vmem:[%s1689 + $0x8] sm:$0xe]
      %v1935 = vld [vmem:[%s1689 + $0xc] sm:$0x1]
      %v1936 = vld [vmem:[%s1689 + $0x10] sm:$0xe]
      %v1937 = vld [vmem:[%s1689 + $0x14] sm:$0x1]
      %v1938 = vld [vmem:[%s1689 + $0x18] sm:$0xe]
      %v1939 = vld [vmem:[%s1689 + $0x1c] sm:$0x1]
      %v1940 = vld [vmem:[%s1689 + $0x20] sm:$0xe]
      %v1941 = vld [vmem:[%s1689 + $0x24] sm:$0x1]
      %v1942 = vld [vmem:[%s1689 + $0x28] sm:$0xe]
      %v1943 = vld [vmem:[%s1689 + $0x2c] sm:$0x1]
      %v1944 = vld [vmem:[%s1689 + $0x30] sm:$0xe]
      %v1945 = vld [vmem:[%s1689 + $0x34] sm:$0x1]
      %v1946 = vld [vmem:[%s1689 + $0x38] sm:$0xe]
      %v1947 = vld [vmem:[%s1689 + $0x3c] sm:$0x1]
      %v1964 = vrot.slane %v1932, 5
      %v1965 = vrot.slane %v1964, 4
      %v1966 = vrot.slane %v1933, 5
      %v1967 = vsel %vm493, %v1965, %v1966
      %v1968 = vrot.slane %v1934, 5
      %v1969 = vrot.slane %v1968, 4
      %v1970 = vrot.slane %v1935, 5
      %v1971 = vsel %vm493, %v1969, %v1970
      %v1972 = vrot.slane %v1936, 5
      %v1973 = vrot.slane %v1972, 4
      %v1974 = vrot.slane %v1937, 5
      %v1975 = vsel %vm493, %v1973, %v1974
      %v1976 = vrot.slane %v1938, 5
      %v1977 = vrot.slane %v1976, 4
      %v1978 = vrot.slane %v1939, 5
      %v1979 = vsel %vm493, %v1977, %v1978
      %v1980 = vrot.slane %v1940, 5
      %v1981 = vrot.slane %v1980, 4
      %v1982 = vrot.slane %v1941, 5
      %v1983 = vsel %vm493, %v1981, %v1982
      %v1984 = vrot.slane %v1942, 5
      %v1985 = vrot.slane %v1984, 4
      %v1986 = vrot.slane %v1943, 5
      %v1987 = vsel %vm493, %v1985, %v1986
      %v1988 = vrot.slane %v1944, 5
      %v1989 = vrot.slane %v1988, 4
      %v1990 = vrot.slane %v1945, 5
      %v1991 = vsel %vm493, %v1989, %v1990
      %v1992 = vrot.slane %v1946, 5
      %v1993 = vrot.slane %v1992, 4
      %v1994 = vrot.slane %v1947, 5
      %v1995 = vsel %vm493, %v1993, %v1994
      %v2004 = vunpack.c.l.bf16 %v1967
      %v2005 = vunpack.c.l.bf16 %v1971
      %v2006 = vunpack.c.l.bf16 %v1975
      %v2007 = vunpack.c.l.bf16 %v1979
      %v2008 = vunpack.c.l.bf16 %v1983
      %v2009 = vunpack.c.l.bf16 %v1987
      %v2010 = vunpack.c.l.bf16 %v1991
      %v2011 = vunpack.c.l.bf16 %v1995
      %2020 = vrot.lane.b32.xlu0 %v2004, 56
      %v2021 = vpop.permute.xlu0 %2020
      %2022 = vrot.lane.b32.xlu0 %v2005, 56
      %v2023 = vpop.permute.xlu0 %2022
      %2024 = vrot.lane.b32.xlu0 %v2006, 56
      %v2025 = vpop.permute.xlu0 %2024
      %2026 = vrot.lane.b32.xlu0 %v2007, 56
      %v2027 = vpop.permute.xlu0 %2026
      %2028 = vrot.lane.b32.xlu0 %v2008, 56
      %v2029 = vpop.permute.xlu0 %2028
      %2030 = vrot.lane.b32.xlu0 %v2009, 56
      %v2031 = vpop.permute.xlu0 %2030
      %2032 = vrot.lane.b32.xlu0 %v2010, 56
      %v2033 = vpop.permute.xlu0 %2032
      %2034 = vrot.lane.b32.xlu0 %v2011, 56
      %v2035 = vpop.permute.xlu0 %2034
      %vm2044 = vcmask 490944
      %2045 = vst.msk [vmem:[#allocation2] sm:$0xff] %vm2044, %v2021
      %2046 = vst.msk [vmem:[#allocation2 + $0x8] sm:$0xff] %vm2044, %v2023
      %2047 = vst.msk [vmem:[#allocation2 + $0x10] sm:$0xff] %vm2044, %v2025
      %2048 = vst.msk [vmem:[#allocation2 + $0x18] sm:$0xff] %vm2044, %v2027
      %2049 = vst.msk [vmem:[#allocation2 + $0x20] sm:$0xff] %vm2044, %v2029
      %2050 = vst.msk [vmem:[#allocation2 + $0x28] sm:$0xff] %vm2044, %v2031
      %2051 = vst.msk [vmem:[#allocation2 + $0x30] sm:$0xff] %vm2044, %v2033
      %2052 = vst.msk [vmem:[#allocation2 + $0x38] sm:$0xff] %vm2044, %v2035
      %s2053 = sadd.s32 %s952, %s1320
      %s2054 = smul.addr %s2053, 4
      %s2055 = scalar_lea.vmem %s214, %s2054
      %v2056 = vld [vmem:[%s2055] sm:$0xf]
      %v2057 = vld [vmem:[%s2055 + $0x8] sm:$0xf]
      %v2058 = vld [vmem:[%s2055 + $0x10] sm:$0xf]
      %v2059 = vld [vmem:[%s2055 + $0x18] sm:$0xf]
      %v2060 = vld [vmem:[%s2055 + $0x20] sm:$0xf]
      %v2061 = vld [vmem:[%s2055 + $0x28] sm:$0xf]
      %v2062 = vld [vmem:[%s2055 + $0x30] sm:$0xf]
      %v2063 = vld [vmem:[%s2055 + $0x38] sm:$0xf]
      %v2064 = vunpack.c.l.bf16 %v2056
      %v2065 = vunpack.c.l.bf16 %v2057
      %v2066 = vunpack.c.l.bf16 %v2058
      %v2067 = vunpack.c.l.bf16 %v2059
      %v2068 = vunpack.c.l.bf16 %v2060
      %v2069 = vunpack.c.l.bf16 %v2061
      %v2070 = vunpack.c.l.bf16 %v2062
      %v2071 = vunpack.c.l.bf16 %v2063
      %2080 = vrot.lane.b32.xlu0 %v2064, 60
      %v2081 = vpop.permute.xlu0 %2080
      %2082 = vrot.lane.b32.xlu0 %v2065, 60
      %v2083 = vpop.permute.xlu0 %2082
      %2084 = vrot.lane.b32.xlu0 %v2066, 60
      %v2085 = vpop.permute.xlu0 %2084
      %2086 = vrot.lane.b32.xlu0 %v2067, 60
      %v2087 = vpop.permute.xlu0 %2086
      %2088 = vrot.lane.b32.xlu0 %v2068, 60
      %v2089 = vpop.permute.xlu0 %2088
      %2090 = vrot.lane.b32.xlu0 %v2069, 60
      %v2091 = vpop.permute.xlu0 %2090
      %2092 = vrot.lane.b32.xlu0 %v2070, 60
      %v2093 = vpop.permute.xlu0 %2092
      %2094 = vrot.lane.b32.xlu0 %v2071, 60
      %v2095 = vpop.permute.xlu0 %2094
      %vm2104 = vcmask 523744
      %2105 = vst.msk [vmem:[#allocation2] sm:$0xff] %vm2104, %v2081
      %2106 = vst.msk [vmem:[#allocation2 + $0x8] sm:$0xff] %vm2104, %v2083
      %2107 = vst.msk [vmem:[#allocation2 + $0x10] sm:$0xff] %vm2104, %v2085
      %2108 = vst.msk [vmem:[#allocation2 + $0x18] sm:$0xff] %vm2104, %v2087
      %2109 = vst.msk [vmem:[#allocation2 + $0x20] sm:$0xff] %vm2104, %v2089
      %2110 = vst.msk [vmem:[#allocation2 + $0x28] sm:$0xff] %vm2104, %v2091
      %2111 = vst.msk [vmem:[#allocation2 + $0x30] sm:$0xff] %vm2104, %v2093
      %2112 = vst.msk [vmem:[#allocation2 + $0x38] sm:$0xff] %vm2104, %v2095
      %v2113 = vld [vmem:[%s2055] sm:$0xf]
      %v2114 = vld [vmem:[%s2055 + $0x4] sm:$0x1]
      %v2115 = vld [vmem:[%s2055 + $0x8] sm:$0xf]
      %v2116 = vld [vmem:[%s2055 + $0xc] sm:$0x1]
      %v2117 = vld [vmem:[%s2055 + $0x10] sm:$0xf]
      %v2118 = vld [vmem:[%s2055 + $0x14] sm:$0x1]
      %v2119 = vld [vmem:[%s2055 + $0x18] sm:$0xf]
      %v2120 = vld [vmem:[%s2055 + $0x1c] sm:$0x1]
      %v2121 = vld [vmem:[%s2055 + $0x20] sm:$0xf]
      %v2122 = vld [vmem:[%s2055 + $0x24] sm:$0x1]
      %v2123 = vld [vmem:[%s2055 + $0x28] sm:$0xf]
      %v2124 = vld [vmem:[%s2055 + $0x2c] sm:$0x1]
      %v2125 = vld [vmem:[%s2055 + $0x30] sm:$0xf]
      %v2126 = vld [vmem:[%s2055 + $0x34] sm:$0x1]
      %v2127 = vld [vmem:[%s2055 + $0x38] sm:$0xf]
      %v2128 = vld [vmem:[%s2055 + $0x3c] sm:$0x1]
      %v2130 = vshrl.u32 %v2113, 16
      %v2132 = vrot.slane %v2130, 4
      %v2133 = vshll.u32 %v2113, 16
      %v2135 = vrot.slane %v2133, 5
      %v2136 = vor.u32 %v2132, %v2135
      %v2137 = vrot.slane %v2136, 4
      %v2139 = vshll.u32 %v2114, 16
      %v2141 = vrot.slane %v2139, 5
      %v2142 = vsel %vm289, %v2137, %v2141
      %v2144 = vshrl.u32 %v2115, 16
      %v2146 = vrot.slane %v2144, 4
      %v2147 = vshll.u32 %v2115, 16
      %v2149 = vrot.slane %v2147, 5
      %v2150 = vor.u32 %v2146, %v2149
      %v2151 = vrot.slane %v2150, 4
      %v2153 = vshll.u32 %v2116, 16
      %v2155 = vrot.slane %v2153, 5
      %v2156 = vsel %vm289, %v2151, %v2155
      %v2158 = vshrl.u32 %v2117, 16
      %v2160 = vrot.slane %v2158, 4
      %v2161 = vshll.u32 %v2117, 16
      %v2163 = vrot.slane %v2161, 5
      %v2164 = vor.u32 %v2160, %v2163
      %v2165 = vrot.slane %v2164, 4
      %v2167 = vshll.u32 %v2118, 16
      %v2169 = vrot.slane %v2167, 5
      %v2170 = vsel %vm289, %v2165, %v2169
      %v2172 = vshrl.u32 %v2119, 16
      %v2174 = vrot.slane %v2172, 4
      %v2175 = vshll.u32 %v2119, 16
      %v2177 = vrot.slane %v2175, 5
      %v2178 = vor.u32 %v2174, %v2177
      %v2179 = vrot.slane %v2178, 4
      %v2181 = vshll.u32 %v2120, 16
      %v2183 = vrot.slane %v2181, 5
      %v2184 = vsel %vm289, %v2179, %v2183
      %v2186 = vshrl.u32 %v2121, 16
      %v2188 = vrot.slane %v2186, 4
      %v2189 = vshll.u32 %v2121, 16
      %v2191 = vrot.slane %v2189, 5
      %v2192 = vor.u32 %v2188, %v2191
      %v2193 = vrot.slane %v2192, 4
      %v2195 = vshll.u32 %v2122, 16
      %v2197 = vrot.slane %v2195, 5
      %v2198 = vsel %vm289, %v2193, %v2197
      %v2200 = vshrl.u32 %v2123, 16
      %v2202 = vrot.slane %v2200, 4
      %v2203 = vshll.u32 %v2123, 16
      %v2205 = vrot.slane %v2203, 5
      %v2206 = vor.u32 %v2202, %v2205
      %v2207 = vrot.slane %v2206, 4
      %v2209 = vshll.u32 %v2124, 16
      %v2211 = vrot.slane %v2209, 5
      %v2212 = vsel %vm289, %v2207, %v2211
      %v2214 = vshrl.u32 %v2125, 16
      %v2216 = vrot.slane %v2214, 4
      %v2217 = vshll.u32 %v2125, 16
      %v2219 = vrot.slane %v2217, 5
      %v2220 = vor.u32 %v2216, %v2219
      %v2221 = vrot.slane %v2220, 4
      %v2223 = vshll.u32 %v2126, 16
      %v2225 = vrot.slane %v2223, 5
      %v2226 = vsel %vm289, %v2221, %v2225
      %v2228 = vshrl.u32 %v2127, 16
      %v2230 = vrot.slane %v2228, 4
      %v2231 = vshll.u32 %v2127, 16
      %v2233 = vrot.slane %v2231, 5
      %v2234 = vor.u32 %v2230, %v2233
      %v2235 = vrot.slane %v2234, 4
      %v2237 = vshll.u32 %v2128, 16
      %v2239 = vrot.slane %v2237, 5
      %v2240 = vsel %vm289, %v2235, %v2239
      %v2249 = vunpack.c.l.bf16 %v2142
      %v2250 = vunpack.c.l.bf16 %v2156
      %v2251 = vunpack.c.l.bf16 %v2170
      %v2252 = vunpack.c.l.bf16 %v2184
      %v2253 = vunpack.c.l.bf16 %v2198
      %v2254 = vunpack.c.l.bf16 %v2212
      %v2255 = vunpack.c.l.bf16 %v2226
      %v2256 = vunpack.c.l.bf16 %v2240
      %2265 = vrot.lane.b32.xlu0 %v2249, 64
      %v2266 = vpop.permute.xlu0 %2265
      %2267 = vrot.lane.b32.xlu0 %v2250, 64
      %v2268 = vpop.permute.xlu0 %2267
      %2269 = vrot.lane.b32.xlu0 %v2251, 64
      %v2270 = vpop.permute.xlu0 %2269
      %2271 = vrot.lane.b32.xlu0 %v2252, 64
      %v2272 = vpop.permute.xlu0 %2271
      %2273 = vrot.lane.b32.xlu0 %v2253, 64
      %v2274 = vpop.permute.xlu0 %2273
      %2275 = vrot.lane.b32.xlu0 %v2254, 64
      %v2276 = vpop.permute.xlu0 %2275
      %2277 = vrot.lane.b32.xlu0 %v2255, 64
      %v2278 = vpop.permute.xlu0 %2277
      %2279 = vrot.lane.b32.xlu0 %v2256, 64
      %v2280 = vpop.permute.xlu0 %2279
      %vm2289 = vcmask 556544
      %2290 = vst.msk [vmem:[#allocation2] sm:$0xff] %vm2289, %v2266
      %2291 = vst.msk [vmem:[#allocation2 + $0x8] sm:$0xff] %vm2289, %v2268
      %2292 = vst.msk [vmem:[#allocation2 + $0x10] sm:$0xff] %vm2289, %v2270
      %2293 = vst.msk [vmem:[#allocation2 + $0x18] sm:$0xff] %vm2289, %v2272
      %2294 = vst.msk [vmem:[#allocation2 + $0x20] sm:$0xff] %vm2289, %v2274
      %2295 = vst.msk [vmem:[#allocation2 + $0x28] sm:$0xff] %vm2289, %v2276
      %2296 = vst.msk [vmem:[#allocation2 + $0x30] sm:$0xff] %vm2289, %v2278
      %2297 = vst.msk [vmem:[#allocation2 + $0x38] sm:$0xff] %vm2289, %v2280
      %v2298 = vld [vmem:[%s2055] sm:$0xe]
      %v2299 = vld [vmem:[%s2055 + $0x4] sm:$0x1]
      %v2300 = vld [vmem:[%s2055 + $0x8] sm:$0xe]
      %v2301 = vld [vmem:[%s2055 + $0xc] sm:$0x1]
      %v2302 = vld [vmem:[%s2055 + $0x10] sm:$0xe]
      %v2303 = vld [vmem:[%s2055 + $0x14] sm:$0x1]
      %v2304 = vld [vmem:[%s2055 + $0x18] sm:$0xe]
      %v2305 = vld [vmem:[%s2055 + $0x1c] sm:$0x1]
      %v2306 = vld [vmem:[%s2055 + $0x20] sm:$0xe]
      %v2307 = vld [vmem:[%s2055 + $0x24] sm:$0x1]
      %v2308 = vld [vmem:[%s2055 + $0x28] sm:$0xe]
      %v2309 = vld [vmem:[%s2055 + $0x2c] sm:$0x1]
      %v2310 = vld [vmem:[%s2055 + $0x30] sm:$0xe]
      %v2311 = vld [vmem:[%s2055 + $0x34] sm:$0x1]
      %v2312 = vld [vmem:[%s2055 + $0x38] sm:$0xe]
      %v2313 = vld [vmem:[%s2055 + $0x3c] sm:$0x1]
      %v2330 = vrot.slane %v2298, 5
      %v2331 = vrot.slane %v2330, 4
      %v2332 = vrot.slane %v2299, 5
      %v2333 = vsel %vm493, %v2331, %v2332
      %v2334 = vrot.slane %v2300, 5
      %v2335 = vrot.slane %v2334, 4
      %v2336 = vrot.slane %v2301, 5
      %v2337 = vsel %vm493, %v2335, %v2336
      %v2338 = vrot.slane %v2302, 5
      %v2339 = vrot.slane %v2338, 4
      %v2340 = vrot.slane %v2303, 5
      %v2341 = vsel %vm493, %v2339, %v2340
      %v2342 = vrot.slane %v2304, 5
      %v2343 = vrot.slane %v2342, 4
      %v2344 = vrot.slane %v2305, 5
      %v2345 = vsel %vm493, %v2343, %v2344
      %v2346 = vrot.slane %v2306, 5
      %v2347 = vrot.slane %v2346, 4
      %v2348 = vrot.slane %v2307, 5
      %v2349 = vsel %vm493, %v2347, %v2348
      %v2350 = vrot.slane %v2308, 5
      %v2351 = vrot.slane %v2350, 4
      %v2352 = vrot.slane %v2309, 5
      %v2353 = vsel %vm493, %v2351, %v2352
      %v2354 = vrot.slane %v2310, 5
      %v2355 = vrot.slane %v2354, 4
      %v2356 = vrot.slane %v2311, 5
      %v2357 = vsel %vm493, %v2355, %v2356
      %v2358 = vrot.slane %v2312, 5
      %v2359 = vrot.slane %v2358, 4
      %v2360 = vrot.slane %v2313, 5
      %v2361 = vsel %vm493, %v2359, %v2360
      %v2370 = vunpack.c.l.bf16 %v2333
      %v2371 = vunpack.c.l.bf16 %v2337
      %v2372 = vunpack.c.l.bf16 %v2341
      %v2373 = vunpack.c.l.bf16 %v2345
      %v2374 = vunpack.c.l.bf16 %v2349
      %v2375 = vunpack.c.l.bf16 %v2353
      %v2376 = vunpack.c.l.bf16 %v2357
      %v2377 = vunpack.c.l.bf16 %v2361
      %2386 = vrot.lane.b32.xlu0 %v2370, 68
      %v2387 = vpop.permute.xlu0 %2386
      %2388 = vrot.lane.b32.xlu0 %v2371, 68
      %v2389 = vpop.permute.xlu0 %2388
      %2390 = vrot.lane.b32.xlu0 %v2372, 68
      %v2391 = vpop.permute.xlu0 %2390
      %2392 = vrot.lane.b32.xlu0 %v2373, 68
      %v2393 = vpop.permute.xlu0 %2392
      %2394 = vrot.lane.b32.xlu0 %v2374, 68
      %v2395 = vpop.permute.xlu0 %2394
      %2396 = vrot.lane.b32.xlu0 %v2375, 68
      %v2397 = vpop.permute.xlu0 %2396
      %2398 = vrot.lane.b32.xlu0 %v2376, 68
      %v2399 = vpop.permute.xlu0 %2398
      %2400 = vrot.lane.b32.xlu0 %v2377, 68
      %v2401 = vpop.permute.xlu0 %2400
      %vm2410 = vcmask 589344
      %2411 = vst.msk [vmem:[#allocation2] sm:$0xff] %vm2410, %v2387
      %2412 = vst.msk [vmem:[#allocation2 + $0x8] sm:$0xff] %vm2410, %v2389
      %2413 = vst.msk [vmem:[#allocation2 + $0x10] sm:$0xff] %vm2410, %v2391
      %2414 = vst.msk [vmem:[#allocation2 + $0x18] sm:$0xff] %vm2410, %v2393
      %2415 = vst.msk [vmem:[#allocation2 + $0x20] sm:$0xff] %vm2410, %v2395
      %2416 = vst.msk [vmem:[#allocation2 + $0x28] sm:$0xff] %vm2410, %v2397
      %2417 = vst.msk [vmem:[#allocation2 + $0x30] sm:$0xff] %vm2410, %v2399
      %2418 = vst.msk [vmem:[#allocation2 + $0x38] sm:$0xff] %vm2410, %v2401
      %s2419 = sadd.s32 %s21, 2
      %s2420 = smul.u32 %s2419, 20
      %s2421 = sadd.s32 %s241, %s2420
      %s2422 = smul.addr %s2421, 4
      %s2423 = scalar_lea.vmem %s214, %s2422
      %v2424 = vld [vmem:[%s2423] sm:$0xf]
      %v2425 = vld [vmem:[%s2423 + $0x8] sm:$0xf]
      %v2426 = vld [vmem:[%s2423 + $0x10] sm:$0xf]
      %v2427 = vld [vmem:[%s2423 + $0x18] sm:$0xf]
      %v2428 = vld [vmem:[%s2423 + $0x20] sm:$0xf]
      %v2429 = vld [vmem:[%s2423 + $0x28] sm:$0xf]
      %v2430 = vld [vmem:[%s2423 + $0x30] sm:$0xf]
      %v2431 = vld [vmem:[%s2423 + $0x38] sm:$0xf]
      %v2432 = vunpack.c.l.bf16 %v2424
      %v2433 = vunpack.c.l.bf16 %v2425
      %v2434 = vunpack.c.l.bf16 %v2426
      %v2435 = vunpack.c.l.bf16 %v2427
      %v2436 = vunpack.c.l.bf16 %v2428
      %v2437 = vunpack.c.l.bf16 %v2429
      %v2438 = vunpack.c.l.bf16 %v2430
      %v2439 = vunpack.c.l.bf16 %v2431
      %2448 = vrot.lane.b32.xlu0 %v2432, 72
      %v2449 = vpop.permute.xlu0 %2448
      %2450 = vrot.lane.b32.xlu0 %v2433, 72
      %v2451 = vpop.permute.xlu0 %2450
      %2452 = vrot.lane.b32.xlu0 %v2434, 72
      %v2453 = vpop.permute.xlu0 %2452
      %2454 = vrot.lane.b32.xlu0 %v2435, 72
      %v2455 = vpop.permute.xlu0 %2454
      %2456 = vrot.lane.b32.xlu0 %v2436, 72
      %v2457 = vpop.permute.xlu0 %2456
      %2458 = vrot.lane.b32.xlu0 %v2437, 72
      %v2459 = vpop.permute.xlu0 %2458
      %2460 = vrot.lane.b32.xlu0 %v2438, 72
      %v2461 = vpop.permute.xlu0 %2460
      %2462 = vrot.lane.b32.xlu0 %v2439, 72
      %v2463 = vpop.permute.xlu0 %2462
      %vm2472 = vcmask 622144
      %2473 = vst.msk [vmem:[#allocation2] sm:$0xff] %vm2472, %v2449
      %2474 = vst.msk [vmem:[#allocation2 + $0x8] sm:$0xff] %vm2472, %v2451
      %2475 = vst.msk [vmem:[#allocation2 + $0x10] sm:$0xff] %vm2472, %v2453
      %2476 = vst.msk [vmem:[#allocation2 + $0x18] sm:$0xff] %vm2472, %v2455
      %2477 = vst.msk [vmem:[#allocation2 + $0x20] sm:$0xff] %vm2472, %v2457
      %2478 = vst.msk [vmem:[#allocation2 + $0x28] sm:$0xff] %vm2472, %v2459
      %2479 = vst.msk [vmem:[#allocation2 + $0x30] sm:$0xff] %vm2472, %v2461
      %2480 = vst.msk [vmem:[#allocation2 + $0x38] sm:$0xff] %vm2472, %v2463
      %v2481 = vld [vmem:[%s2423] sm:$0xf]
      %v2482 = vld [vmem:[%s2423 + $0x4] sm:$0x1]
      %v2483 = vld [vmem:[%s2423 + $0x8] sm:$0xf]
      %v2484 = vld [vmem:[%s2423 + $0xc] sm:$0x1]
      %v2485 = vld [vmem:[%s2423 + $0x10] sm:$0xf]
      %v2486 = vld [vmem:[%s2423 + $0x14] sm:$0x1]
      %v2487 = vld [vmem:[%s2423 + $0x18] sm:$0xf]
      %v2488 = vld [vmem:[%s2423 + $0x1c] sm:$0x1]
      %v2489 = vld [vmem:[%s2423 + $0x20] sm:$0xf]
      %v2490 = vld [vmem:[%s2423 + $0x24] sm:$0x1]
      %v2491 = vld [vmem:[%s2423 + $0x28] sm:$0xf]
      %v2492 = vld [vmem:[%s2423 + $0x2c] sm:$0x1]
      %v2493 = vld [vmem:[%s2423 + $0x30] sm:$0xf]
      %v2494 = vld [vmem:[%s2423 + $0x34] sm:$0x1]
      %v2495 = vld [vmem:[%s2423 + $0x38] sm:$0xf]
      %v2496 = vld [vmem:[%s2423 + $0x3c] sm:$0x1]
      %v2498 = vshrl.u32 %v2481, 16
      %v2500 = vrot.slane %v2498, 4
      %v2501 = vshll.u32 %v2481, 16
      %v2503 = vrot.slane %v2501, 5
      %v2504 = vor.u32 %v2500, %v2503
      %v2505 = vrot.slane %v2504, 4
      %v2507 = vshll.u32 %v2482, 16
      %v2509 = vrot.slane %v2507, 5
      %v2510 = vsel %vm289, %v2505, %v2509
      %v2512 = vshrl.u32 %v2483, 16
      %v2514 = vrot.slane %v2512, 4
      %v2515 = vshll.u32 %v2483, 16
      %v2517 = vrot.slane %v2515, 5
      %v2518 = vor.u32 %v2514, %v2517
      %v2519 = vrot.slane %v2518, 4
      %v2521 = vshll.u32 %v2484, 16
      %v2523 = vrot.slane %v2521, 5
      %v2524 = vsel %vm289, %v2519, %v2523
      %v2526 = vshrl.u32 %v2485, 16
      %v2528 = vrot.slane %v2526, 4
      %v2529 = vshll.u32 %v2485, 16
      %v2531 = vrot.slane %v2529, 5
      %v2532 = vor.u32 %v2528, %v2531
      %v2533 = vrot.slane %v2532, 4
      %v2535 = vshll.u32 %v2486, 16
      %v2537 = vrot.slane %v2535, 5
      %v2538 = vsel %vm289, %v2533, %v2537
      %v2540 = vshrl.u32 %v2487, 16
      %v2542 = vrot.slane %v2540, 4
      %v2543 = vshll.u32 %v2487, 16
      %v2545 = vrot.slane %v2543, 5
      %v2546 = vor.u32 %v2542, %v2545
      %v2547 = vrot.slane %v2546, 4
      %v2549 = vshll.u32 %v2488, 16
      %v2551 = vrot.slane %v2549, 5
      %v2552 = vsel %vm289, %v2547, %v2551
      %v2554 = vshrl.u32 %v2489, 16
      %v2556 = vrot.slane %v2554, 4
      %v2557 = vshll.u32 %v2489, 16
      %v2559 = vrot.slane %v2557, 5
      %v2560 = vor.u32 %v2556, %v2559
      %v2561 = vrot.slane %v2560, 4
      %v2563 = vshll.u32 %v2490, 16
      %v2565 = vrot.slane %v2563, 5
      %v2566 = vsel %vm289, %v2561, %v2565
      %v2568 = vshrl.u32 %v2491, 16
      %v2570 = vrot.slane %v2568, 4
      %v2571 = vshll.u32 %v2491, 16
      %v2573 = vrot.slane %v2571, 5
      %v2574 = vor.u32 %v2570, %v2573
      %v2575 = vrot.slane %v2574, 4
      %v2577 = vshll.u32 %v2492, 16
      %v2579 = vrot.slane %v2577, 5
      %v2580 = vsel %vm289, %v2575, %v2579
      %v2582 = vshrl.u32 %v2493, 16
      %v2584 = vrot.slane %v2582, 4
      %v2585 = vshll.u32 %v2493, 16
      %v2587 = vrot.slane %v2585, 5
      %v2588 = vor.u32 %v2584, %v2587
      %v2589 = vrot.slane %v2588, 4
      %v2591 = vshll.u32 %v2494, 16
      %v2593 = vrot.slane %v2591, 5
      %v2594 = vsel %vm289, %v2589, %v2593
      %v2596 = vshrl.u32 %v2495, 16
      %v2598 = vrot.slane %v2596, 4
      %v2599 = vshll.u32 %v2495, 16
      %v2601 = vrot.slane %v2599, 5
      %v2602 = vor.u32 %v2598, %v2601
      %v2603 = vrot.slane %v2602, 4
      %v2605 = vshll.u32 %v2496, 16
      %v2607 = vrot.slane %v2605, 5
      %v2608 = vsel %vm289, %v2603, %v2607
      %v2617 = vunpack.c.l.bf16 %v2510
      %v2618 = vunpack.c.l.bf16 %v2524
      %v2619 = vunpack.c.l.bf16 %v2538
      %v2620 = vunpack.c.l.bf16 %v2552
      %v2621 = vunpack.c.l.bf16 %v2566
      %v2622 = vunpack.c.l.bf16 %v2580
      %v2623 = vunpack.c.l.bf16 %v2594
      %v2624 = vunpack.c.l.bf16 %v2608
      %2633 = vrot.lane.b32.xlu0 %v2617, 76
      %v2634 = vpop.permute.xlu0 %2633
      %2635 = vrot.lane.b32.xlu0 %v2618, 76
      %v2636 = vpop.permute.xlu0 %2635
      %2637 = vrot.lane.b32.xlu0 %v2619, 76
      %v2638 = vpop.permute.xlu0 %2637
      %2639 = vrot.lane.b32.xlu0 %v2620, 76
      %v2640 = vpop.permute.xlu0 %2639
      %2641 = vrot.lane.b32.xlu0 %v2621, 76
      %v2642 = vpop.permute.xlu0 %2641
      %2643 = vrot.lane.b32.xlu0 %v2622, 76
      %v2644 = vpop.permute.xlu0 %2643
      %2645 = vrot.lane.b32.xlu0 %v2623, 76
      %v2646 = vpop.permute.xlu0 %2645
      %2647 = vrot.lane.b32.xlu0 %v2624, 76
      %v2648 = vpop.permute.xlu0 %2647
      %vm2657 = vcmask 654944
      %2658 = vst.msk [vmem:[#allocation2] sm:$0xff] %vm2657, %v2634
      %2659 = vst.msk [vmem:[#allocation2 + $0x8] sm:$0xff] %vm2657, %v2636
      %2660 = vst.msk [vmem:[#allocation2 + $0x10] sm:$0xff] %vm2657, %v2638
      %2661 = vst.msk [vmem:[#allocation2 + $0x18] sm:$0xff] %vm2657, %v2640
      %2662 = vst.msk [vmem:[#allocation2 + $0x20] sm:$0xff] %vm2657, %v2642
      %2663 = vst.msk [vmem:[#allocation2 + $0x28] sm:$0xff] %vm2657, %v2644
      %2664 = vst.msk [vmem:[#allocation2 + $0x30] sm:$0xff] %vm2657, %v2646
      %2665 = vst.msk [vmem:[#allocation2 + $0x38] sm:$0xff] %vm2657, %v2648
      %v2666 = vld [vmem:[%s2423] sm:$0xe]
      %v2667 = vld [vmem:[%s2423 + $0x4] sm:$0x1]
      %v2668 = vld [vmem:[%s2423 + $0x8] sm:$0xe]
      %v2669 = vld [vmem:[%s2423 + $0xc] sm:$0x1]
      %v2670 = vld [vmem:[%s2423 + $0x10] sm:$0xe]
      %v2671 = vld [vmem:[%s2423 + $0x14] sm:$0x1]
      %v2672 = vld [vmem:[%s2423 + $0x18] sm:$0xe]
      %v2673 = vld [vmem:[%s2423 + $0x1c] sm:$0x1]
      %v2674 = vld [vmem:[%s2423 + $0x20] sm:$0xe]
      %v2675 = vld [vmem:[%s2423 + $0x24] sm:$0x1]
      %v2676 = vld [vmem:[%s2423 + $0x28] sm:$0xe]
      %v2677 = vld [vmem:[%s2423 + $0x2c] sm:$0x1]
      %v2678 = vld [vmem:[%s2423 + $0x30] sm:$0xe]
      %v2679 = vld [vmem:[%s2423 + $0x34] sm:$0x1]
      %v2680 = vld [vmem:[%s2423 + $0x38] sm:$0xe]
      %v2681 = vld [vmem:[%s2423 + $0x3c] sm:$0x1]
      %v2698 = vrot.slane %v2666, 5
      %v2699 = vrot.slane %v2698, 4
      %v2700 = vrot.slane %v2667, 5
      %v2701 = vsel %vm493, %v2699, %v2700
      %v2702 = vrot.slane %v2668, 5
      %v2703 = vrot.slane %v2702, 4
      %v2704 = vrot.slane %v2669, 5
      %v2705 = vsel %vm493, %v2703, %v2704
      %v2706 = vrot.slane %v2670, 5
      %v2707 = vrot.slane %v2706, 4
      %v2708 = vrot.slane %v2671, 5
      %v2709 = vsel %vm493, %v2707, %v2708
      %v2710 = vrot.slane %v2672, 5
      %v2711 = vrot.slane %v2710, 4
      %v2712 = vrot.slane %v2673, 5
      %v2713 = vsel %vm493, %v2711, %v2712
      %v2714 = vrot.slane %v2674, 5
      %v2715 = vrot.slane %v2714, 4
      %v2716 = vrot.slane %v2675, 5
      %v2717 = vsel %vm493, %v2715, %v2716
      %v2718 = vrot.slane %v2676, 5
      %v2719 = vrot.slane %v2718, 4
      %v2720 = vrot.slane %v2677, 5
      %v2721 = vsel %vm493, %v2719, %v2720
      %v2722 = vrot.slane %v2678, 5
      %v2723 = vrot.slane %v2722, 4
      %v2724 = vrot.slane %v2679, 5
      %v2725 = vsel %vm493, %v2723, %v2724
      %v2726 = vrot.slane %v2680, 5
      %v2727 = vrot.slane %v2726, 4
      %v2728 = vrot.slane %v2681, 5
      %v2729 = vsel %vm493, %v2727, %v2728
      %v2738 = vunpack.c.l.bf16 %v2701
      %v2739 = vunpack.c.l.bf16 %v2705
      %v2740 = vunpack.c.l.bf16 %v2709
      %v2741 = vunpack.c.l.bf16 %v2713
      %v2742 = vunpack.c.l.bf16 %v2717
      %v2743 = vunpack.c.l.bf16 %v2721
      %v2744 = vunpack.c.l.bf16 %v2725
      %v2745 = vunpack.c.l.bf16 %v2729
      %2754 = vrot.lane.b32.xlu0 %v2738, 80
      %v2755 = vpop.permute.xlu0 %2754
      %2756 = vrot.lane.b32.xlu0 %v2739, 80
      %v2757 = vpop.permute.xlu0 %2756
      %2758 = vrot.lane.b32.xlu0 %v2740, 80
      %v2759 = vpop.permute.xlu0 %2758
      %2760 = vrot.lane.b32.xlu0 %v2741, 80
      %v2761 = vpop.permute.xlu0 %2760
      %2762 = vrot.lane.b32.xlu0 %v2742, 80
      %v2763 = vpop.permute.xlu0 %2762
      %2764 = vrot.lane.b32.xlu0 %v2743, 80
      %v2765 = vpop.permute.xlu0 %2764
      %2766 = vrot.lane.b32.xlu0 %v2744, 80
      %v2767 = vpop.permute.xlu0 %2766
      %2768 = vrot.lane.b32.xlu0 %v2745, 80
      %v2769 = vpop.permute.xlu0 %2768
      %vm2778 = vcmask 687744
      %2779 = vst.msk [vmem:[#allocation2] sm:$0xff] %vm2778, %v2755
      %2780 = vst.msk [vmem:[#allocation2 + $0x8] sm:$0xff] %vm2778, %v2757
      %2781 = vst.msk [vmem:[#allocation2 + $0x10] sm:$0xff] %vm2778, %v2759
      %2782 = vst.msk [vmem:[#allocation2 + $0x18] sm:$0xff] %vm2778, %v2761
      %2783 = vst.msk [vmem:[#allocation2 + $0x20] sm:$0xff] %vm2778, %v2763
      %2784 = vst.msk [vmem:[#allocation2 + $0x28] sm:$0xff] %vm2778, %v2765
      %2785 = vst.msk [vmem:[#allocation2 + $0x30] sm:$0xff] %vm2778, %v2767
      %2786 = vst.msk [vmem:[#allocation2 + $0x38] sm:$0xff] %vm2778, %v2769
      %s2787 = sadd.s32 %s584, %s2420
      %s2788 = smul.addr %s2787, 4
      %s2789 = scalar_lea.vmem %s214, %s2788
      %v2790 = vld [vmem:[%s2789] sm:$0xf]
      %v2791 = vld [vmem:[%s2789 + $0x8] sm:$0xf]
      %v2792 = vld [vmem:[%s2789 + $0x10] sm:$0xf]
      %v2793 = vld [vmem:[%s2789 + $0x18] sm:$0xf]
      %v2794 = vld [vmem:[%s2789 + $0x20] sm:$0xf]
      %v2795 = vld [vmem:[%s2789 + $0x28] sm:$0xf]
      %v2796 = vld [vmem:[%s2789 + $0x30] sm:$0xf]
      %v2797 = vld [vmem:[%s2789 + $0x38] sm:$0xf]
      %v2798 = vunpack.c.l.bf16 %v2790
      %v2799 = vunpack.c.l.bf16 %v2791
      %v2800 = vunpack.c.l.bf16 %v2792
      %v2801 = vunpack.c.l.bf16 %v2793
      %v2802 = vunpack.c.l.bf16 %v2794
      %v2803 = vunpack.c.l.bf16 %v2795
      %v2804 = vunpack.c.l.bf16 %v2796
      %v2805 = vunpack.c.l.bf16 %v2797
      %2814 = vrot.lane.b32.xlu0 %v2798, 84
      %v2815 = vpop.permute.xlu0 %2814
      %2816 = vrot.lane.b32.xlu0 %v2799, 84
      %v2817 = vpop.permute.xlu0 %2816
      %2818 = vrot.lane.b32.xlu0 %v2800, 84
      %v2819 = vpop.permute.xlu0 %2818
      %2820 = vrot.lane.b32.xlu0 %v2801, 84
      %v2821 = vpop.permute.xlu0 %2820
      %2822 = vrot.lane.b32.xlu0 %v2802, 84
      %v2823 = vpop.permute.xlu0 %2822
      %2824 = vrot.lane.b32.xlu0 %v2803, 84
      %v2825 = vpop.permute.xlu0 %2824
      %2826 = vrot.lane.b32.xlu0 %v2804, 84
      %v2827 = vpop.permute.xlu0 %2826
      %2828 = vrot.lane.b32.xlu0 %v2805, 84
      %v2829 = vpop.permute.xlu0 %2828
      %vm2838 = vcmask 720544
      %2839 = vst.msk [vmem:[#allocation2] sm:$0xff] %vm2838, %v2815
      %2840 = vst.msk [vmem:[#allocation2 + $0x8] sm:$0xff] %vm2838, %v2817
      %2841 = vst.msk [vmem:[#allocation2 + $0x10] sm:$0xff] %vm2838, %v2819
      %2842 = vst.msk [vmem:[#allocation2 + $0x18] sm:$0xff] %vm2838, %v2821
      %2843 = vst.msk [vmem:[#allocation2 + $0x20] sm:$0xff] %vm2838, %v2823
      %2844 = vst.msk [vmem:[#allocation2 + $0x28] sm:$0xff] %vm2838, %v2825
      %2845 = vst.msk [vmem:[#allocation2 + $0x30] sm:$0xff] %vm2838, %v2827
      %2846 = vst.msk [vmem:[#allocation2 + $0x38] sm:$0xff] %vm2838, %v2829
      %v2847 = vld [vmem:[%s2789] sm:$0xf]
      %v2848 = vld [vmem:[%s2789 + $0x4] sm:$0x1]
      %v2849 = vld [vmem:[%s2789 + $0x8] sm:$0xf]
      %v2850 = vld [vmem:[%s2789 + $0xc] sm:$0x1]
      %v2851 = vld [vmem:[%s2789 + $0x10] sm:$0xf]
      %v2852 = vld [vmem:[%s2789 + $0x14] sm:$0x1]
      %v2853 = vld [vmem:[%s2789 + $0x18] sm:$0xf]
      %v2854 = vld [vmem:[%s2789 + $0x1c] sm:$0x1]
      %v2855 = vld [vmem:[%s2789 + $0x20] sm:$0xf]
      %v2856 = vld [vmem:[%s2789 + $0x24] sm:$0x1]
      %v2857 = vld [vmem:[%s2789 + $0x28] sm:$0xf]
      %v2858 = vld [vmem:[%s2789 + $0x2c] sm:$0x1]
      %v2859 = vld [vmem:[%s2789 + $0x30] sm:$0xf]
      %v2860 = vld [vmem:[%s2789 + $0x34] sm:$0x1]
      %v2861 = vld [vmem:[%s2789 + $0x38] sm:$0xf]
      %v2862 = vld [vmem:[%s2789 + $0x3c] sm:$0x1]
      %v2864 = vshrl.u32 %v2847, 16
      %v2866 = vrot.slane %v2864, 4
      %v2867 = vshll.u32 %v2847, 16
      %v2869 = vrot.slane %v2867, 5
      %v2870 = vor.u32 %v2866, %v2869
      %v2871 = vrot.slane %v2870, 4
      %v2873 = vshll.u32 %v2848, 16
      %v2875 = vrot.slane %v2873, 5
      %v2876 = vsel %vm289, %v2871, %v2875
      %v2878 = vshrl.u32 %v2849, 16
      %v2880 = vrot.slane %v2878, 4
      %v2881 = vshll.u32 %v2849, 16
      %v2883 = vrot.slane %v2881, 5
      %v2884 = vor.u32 %v2880, %v2883
      %v2885 = vrot.slane %v2884, 4
      %v2887 = vshll.u32 %v2850, 16
      %v2889 = vrot.slane %v2887, 5
      %v2890 = vsel %vm289, %v2885, %v2889
      %v2892 = vshrl.u32 %v2851, 16
      %v2894 = vrot.slane %v2892, 4
      %v2895 = vshll.u32 %v2851, 16
      %v2897 = vrot.slane %v2895, 5
      %v2898 = vor.u32 %v2894, %v2897
      %v2899 = vrot.slane %v2898, 4
      %v2901 = vshll.u32 %v2852, 16
      %v2903 = vrot.slane %v2901, 5
      %v2904 = vsel %vm289, %v2899, %v2903
      %v2906 = vshrl.u32 %v2853, 16
      %v2908 = vrot.slane %v2906, 4
      %v2909 = vshll.u32 %v2853, 16
      %v2911 = vrot.slane %v2909, 5
      %v2912 = vor.u32 %v2908, %v2911
      %v2913 = vrot.slane %v2912, 4
      %v2915 = vshll.u32 %v2854, 16
      %v2917 = vrot.slane %v2915, 5
      %v2918 = vsel %vm289, %v2913, %v2917
      %v2920 = vshrl.u32 %v2855, 16
      %v2922 = vrot.slane %v2920, 4
      %v2923 = vshll.u32 %v2855, 16
      %v2925 = vrot.slane %v2923, 5
      %v2926 = vor.u32 %v2922, %v2925
      %v2927 = vrot.slane %v2926, 4
      %v2929 = vshll.u32 %v2856, 16
      %v2931 = vrot.slane %v2929, 5
      %v2932 = vsel %vm289, %v2927, %v2931
      %v2934 = vshrl.u32 %v2857, 16
      %v2936 = vrot.slane %v2934, 4
      %v2937 = vshll.u32 %v2857, 16
      %v2939 = vrot.slane %v2937, 5
      %v2940 = vor.u32 %v2936, %v2939
      %v2941 = vrot.slane %v2940, 4
      %v2943 = vshll.u32 %v2858, 16
      %v2945 = vrot.slane %v2943, 5
      %v2946 = vsel %vm289, %v2941, %v2945
      %v2948 = vshrl.u32 %v2859, 16
      %v2950 = vrot.slane %v2948, 4
      %v2951 = vshll.u32 %v2859, 16
      %v2953 = vrot.slane %v2951, 5
      %v2954 = vor.u32 %v2950, %v2953
      %v2955 = vrot.slane %v2954, 4
      %v2957 = vshll.u32 %v2860, 16
      %v2959 = vrot.slane %v2957, 5
      %v2960 = vsel %vm289, %v2955, %v2959
      %v2962 = vshrl.u32 %v2861, 16
      %v2964 = vrot.slane %v2962, 4
      %v2965 = vshll.u32 %v2861, 16
      %v2967 = vrot.slane %v2965, 5
      %v2968 = vor.u32 %v2964, %v2967
      %v2969 = vrot.slane %v2968, 4
      %v2971 = vshll.u32 %v2862, 16
      %v2973 = vrot.slane %v2971, 5
      %v2974 = vsel %vm289, %v2969, %v2973
      %v2983 = vunpack.c.l.bf16 %v2876
      %v2984 = vunpack.c.l.bf16 %v2890
      %v2985 = vunpack.c.l.bf16 %v2904
      %v2986 = vunpack.c.l.bf16 %v2918
      %v2987 = vunpack.c.l.bf16 %v2932
      %v2988 = vunpack.c.l.bf16 %v2946
      %v2989 = vunpack.c.l.bf16 %v2960
      %v2990 = vunpack.c.l.bf16 %v2974
      %2999 = vrot.lane.b32.xlu0 %v2983, 88
      %v3000 = vpop.permute.xlu0 %2999
      %3001 = vrot.lane.b32.xlu0 %v2984, 88
      %v3002 = vpop.permute.xlu0 %3001
      %3003 = vrot.lane.b32.xlu0 %v2985, 88
      %v3004 = vpop.permute.xlu0 %3003
      %3005 = vrot.lane.b32.xlu0 %v2986, 88
      %v3006 = vpop.permute.xlu0 %3005
      %3007 = vrot.lane.b32.xlu0 %v2987, 88
      %v3008 = vpop.permute.xlu0 %3007
      %3009 = vrot.lane.b32.xlu0 %v2988, 88
      %v3010 = vpop.permute.xlu0 %3009
      %3011 = vrot.lane.b32.xlu0 %v2989, 88
      %v3012 = vpop.permute.xlu0 %3011
      %3013 = vrot.lane.b32.xlu0 %v2990, 88
      %v3014 = vpop.permute.xlu0 %3013
      %vm3023 = vcmask 753344
      %3024 = vst.msk [vmem:[#allocation2] sm:$0xff] %vm3023, %v3000
      %3025 = vst.msk [vmem:[#allocation2 + $0x8] sm:$0xff] %vm3023, %v3002
      %3026 = vst.msk [vmem:[#allocation2 + $0x10] sm:$0xff] %vm3023, %v3004
      %3027 = vst.msk [vmem:[#allocation2 + $0x18] sm:$0xff] %vm3023, %v3006
      %3028 = vst.msk [vmem:[#allocation2 + $0x20] sm:$0xff] %vm3023, %v3008
      %3029 = vst.msk [vmem:[#allocation2 + $0x28] sm:$0xff] %vm3023, %v3010
      %3030 = vst.msk [vmem:[#allocation2 + $0x30] sm:$0xff] %vm3023, %v3012
      %3031 = vst.msk [vmem:[#allocation2 + $0x38] sm:$0xff] %vm3023, %v3014
      %v3032 = vld [vmem:[%s2789] sm:$0xe]
      %v3033 = vld [vmem:[%s2789 + $0x4] sm:$0x1]
      %v3034 = vld [vmem:[%s2789 + $0x8] sm:$0xe]
      %v3035 = vld [vmem:[%s2789 + $0xc] sm:$0x1]
      %v3036 = vld [vmem:[%s2789 + $0x10] sm:$0xe]
      %v3037 = vld [vmem:[%s2789 + $0x14] sm:$0x1]
      %v3038 = vld [vmem:[%s2789 + $0x18] sm:$0xe]
      %v3039 = vld [vmem:[%s2789 + $0x1c] sm:$0x1]
      %v3040 = vld [vmem:[%s2789 + $0x20] sm:$0xe]
      %v3041 = vld [vmem:[%s2789 + $0x24] sm:$0x1]
      %v3042 = vld [vmem:[%s2789 + $0x28] sm:$0xe]
      %v3043 = vld [vmem:[%s2789 + $0x2c] sm:$0x1]
      %v3044 = vld [vmem:[%s2789 + $0x30] sm:$0xe]
      %v3045 = vld [vmem:[%s2789 + $0x34] sm:$0x1]
      %v3046 = vld [vmem:[%s2789 + $0x38] sm:$0xe]
      %v3047 = vld [vmem:[%s2789 + $0x3c] sm:$0x1]
      %v3064 = vrot.slane %v3032, 5
      %v3065 = vrot.slane %v3064, 4
      %v3066 = vrot.slane %v3033, 5
      %v3067 = vsel %vm493, %v3065, %v3066
      %v3068 = vrot.slane %v3034, 5
      %v3069 = vrot.slane %v3068, 4
      %v3070 = vrot.slane %v3035, 5
      %v3071 = vsel %vm493, %v3069, %v3070
      %v3072 = vrot.slane %v3036, 5
      %v3073 = vrot.slane %v3072, 4
      %v3074 = vrot.slane %v3037, 5
      %v3075 = vsel %vm493, %v3073, %v3074
      %v3076 = vrot.slane %v3038, 5
      %v3077 = vrot.slane %v3076, 4
      %v3078 = vrot.slane %v3039, 5
      %v3079 = vsel %vm493, %v3077, %v3078
      %v3080 = vrot.slane %v3040, 5
      %v3081 = vrot.slane %v3080, 4
      %v3082 = vrot.slane %v3041, 5
      %v3083 = vsel %vm493, %v3081, %v3082
      %v3084 = vrot.slane %v3042, 5
      %v3085 = vrot.slane %v3084, 4
      %v3086 = vrot.slane %v3043, 5
      %v3087 = vsel %vm493, %v3085, %v3086
      %v3088 = vrot.slane %v3044, 5
      %v3089 = vrot.slane %v3088, 4
      %v3090 = vrot.slane %v3045, 5
      %v3091 = vsel %vm493, %v3089, %v3090
      %v3092 = vrot.slane %v3046, 5
      %v3093 = vrot.slane %v3092, 4
      %v3094 = vrot.slane %v3047, 5
      %v3095 = vsel %vm493, %v3093, %v3094
      %v3104 = vunpack.c.l.bf16 %v3067
      %v3105 = vunpack.c.l.bf16 %v3071
      %v3106 = vunpack.c.l.bf16 %v3075
      %v3107 = vunpack.c.l.bf16 %v3079
      %v3108 = vunpack.c.l.bf16 %v3083
      %v3109 = vunpack.c.l.bf16 %v3087
      %v3110 = vunpack.c.l.bf16 %v3091
      %v3111 = vunpack.c.l.bf16 %v3095
      %3120 = vrot.lane.b32.xlu0 %v3104, 92
      %v3121 = vpop.permute.xlu0 %3120
      %3122 = vrot.lane.b32.xlu0 %v3105, 92
      %v3123 = vpop.permute.xlu0 %3122
      %3124 = vrot.lane.b32.xlu0 %v3106, 92
      %v3125 = vpop.permute.xlu0 %3124
      %3126 = vrot.lane.b32.xlu0 %v3107, 92
      %v3127 = vpop.permute.xlu0 %3126
      %3128 = vrot.lane.b32.xlu0 %v3108, 92
      %v3129 = vpop.permute.xlu0 %3128
      %3130 = vrot.lane.b32.xlu0 %v3109, 92
      %v3131 = vpop.permute.xlu0 %3130
      %3132 = vrot.lane.b32.xlu0 %v3110, 92
      %v3133 = vpop.permute.xlu0 %3132
      %3134 = vrot.lane.b32.xlu0 %v3111, 92
      %v3135 = vpop.permute.xlu0 %3134
      %vm3144 = vcmask 786144
      %3145 = vst.msk [vmem:[#allocation2] sm:$0xff] %vm3144, %v3121
      %3146 = vst.msk [vmem:[#allocation2 + $0x8] sm:$0xff] %vm3144, %v3123
      %3147 = vst.msk [vmem:[#allocation2 + $0x10] sm:$0xff] %vm3144, %v3125
      %3148 = vst.msk [vmem:[#allocation2 + $0x18] sm:$0xff] %vm3144, %v3127
      %3149 = vst.msk [vmem:[#allocation2 + $0x20] sm:$0xff] %vm3144, %v3129
      %3150 = vst.msk [vmem:[#allocation2 + $0x28] sm:$0xff] %vm3144, %v3131
      %3151 = vst.msk [vmem:[#allocation2 + $0x30] sm:$0xff] %vm3144, %v3133
      %3152 = vst.msk [vmem:[#allocation2 + $0x38] sm:$0xff] %vm3144, %v3135
      %s3153 = sadd.s32 %s952, %s2420
      %s3154 = smul.addr %s3153, 4
      %s3155 = scalar_lea.vmem %s214, %s3154
      %v3156 = vld [vmem:[%s3155] sm:$0xf]
      %v3157 = vld [vmem:[%s3155 + $0x8] sm:$0xf]
      %v3158 = vld [vmem:[%s3155 + $0x10] sm:$0xf]
      %v3159 = vld [vmem:[%s3155 + $0x18] sm:$0xf]
      %v3160 = vld [vmem:[%s3155 + $0x20] sm:$0xf]
      %v3161 = vld [vmem:[%s3155 + $0x28] sm:$0xf]
      %v3162 = vld [vmem:[%s3155 + $0x30] sm:$0xf]
      %v3163 = vld [vmem:[%s3155 + $0x38] sm:$0xf]
      %v3164 = vunpack.c.l.bf16 %v3156
      %v3165 = vunpack.c.l.bf16 %v3157
      %v3166 = vunpack.c.l.bf16 %v3158
      %v3167 = vunpack.c.l.bf16 %v3159
      %v3168 = vunpack.c.l.bf16 %v3160
      %v3169 = vunpack.c.l.bf16 %v3161
      %v3170 = vunpack.c.l.bf16 %v3162
      %v3171 = vunpack.c.l.bf16 %v3163
      %3180 = vrot.lane.b32.xlu0 %v3164, 96
      %v3181 = vpop.permute.xlu0 %3180
      %3182 = vrot.lane.b32.xlu0 %v3165, 96
      %v3183 = vpop.permute.xlu0 %3182
      %3184 = vrot.lane.b32.xlu0 %v3166, 96
      %v3185 = vpop.permute.xlu0 %3184
      %3186 = vrot.lane.b32.xlu0 %v3167, 96
      %v3187 = vpop.permute.xlu0 %3186
      %3188 = vrot.lane.b32.xlu0 %v3168, 96
      %v3189 = vpop.permute.xlu0 %3188
      %3190 = vrot.lane.b32.xlu0 %v3169, 96
      %v3191 = vpop.permute.xlu0 %3190
      %3192 = vrot.lane.b32.xlu0 %v3170, 96
      %v3193 = vpop.permute.xlu0 %3192
      %3194 = vrot.lane.b32.xlu0 %v3171, 96
      %v3195 = vpop.permute.xlu0 %3194
      %vm3204 = vcmask 818944
      %3205 = vst.msk [vmem:[#allocation2] sm:$0xff] %vm3204, %v3181
      %3206 = vst.msk [vmem:[#allocation2 + $0x8] sm:$0xff] %vm3204, %v3183
      %3207 = vst.msk [vmem:[#allocation2 + $0x10] sm:$0xff] %vm3204, %v3185
      %3208 = vst.msk [vmem:[#allocation2 + $0x18] sm:$0xff] %vm3204, %v3187
      %3209 = vst.msk [vmem:[#allocation2 + $0x20] sm:$0xff] %vm3204, %v3189
      %3210 = vst.msk [vmem:[#allocation2 + $0x28] sm:$0xff] %vm3204, %v3191
      %3211 = vst.msk [vmem:[#allocation2 + $0x30] sm:$0xff] %vm3204, %v3193
      %3212 = vst.msk [vmem:[#allocation2 + $0x38] sm:$0xff] %vm3204, %v3195
      %v3213 = vld [vmem:[%s3155] sm:$0xf]
      %v3214 = vld [vmem:[%s3155 + $0x4] sm:$0x1]
      %v3215 = vld [vmem:[%s3155 + $0x8] sm:$0xf]
      %v3216 = vld [vmem:[%s3155 + $0xc] sm:$0x1]
      %v3217 = vld [vmem:[%s3155 + $0x10] sm:$0xf]
      %v3218 = vld [vmem:[%s3155 + $0x14] sm:$0x1]
      %v3219 = vld [vmem:[%s3155 + $0x18] sm:$0xf]
      %v3220 = vld [vmem:[%s3155 + $0x1c] sm:$0x1]
      %v3221 = vld [vmem:[%s3155 + $0x20] sm:$0xf]
      %v3222 = vld [vmem:[%s3155 + $0x24] sm:$0x1]
      %v3223 = vld [vmem:[%s3155 + $0x28] sm:$0xf]
      %v3224 = vld [vmem:[%s3155 + $0x2c] sm:$0x1]
      %v3225 = vld [vmem:[%s3155 + $0x30] sm:$0xf]
      %v3226 = vld [vmem:[%s3155 + $0x34] sm:$0x1]
      %v3227 = vld [vmem:[%s3155 + $0x38] sm:$0xf]
      %v3228 = vld [vmem:[%s3155 + $0x3c] sm:$0x1]
      %v3230 = vshrl.u32 %v3213, 16
      %v3232 = vrot.slane %v3230, 4
      %v3233 = vshll.u32 %v3213, 16
      %v3235 = vrot.slane %v3233, 5
      %v3236 = vor.u32 %v3232, %v3235
      %v3237 = vrot.slane %v3236, 4
      %v3239 = vshll.u32 %v3214, 16
      %v3241 = vrot.slane %v3239, 5
      %v3242 = vsel %vm289, %v3237, %v3241
      %v3244 = vshrl.u32 %v3215, 16
      %v3246 = vrot.slane %v3244, 4
      %v3247 = vshll.u32 %v3215, 16
      %v3249 = vrot.slane %v3247, 5
      %v3250 = vor.u32 %v3246, %v3249
      %v3251 = vrot.slane %v3250, 4
      %v3253 = vshll.u32 %v3216, 16
      %v3255 = vrot.slane %v3253, 5
      %v3256 = vsel %vm289, %v3251, %v3255
      %v3258 = vshrl.u32 %v3217, 16
      %v3260 = vrot.slane %v3258, 4
      %v3261 = vshll.u32 %v3217, 16
      %v3263 = vrot.slane %v3261, 5
      %v3264 = vor.u32 %v3260, %v3263
      %v3265 = vrot.slane %v3264, 4
      %v3267 = vshll.u32 %v3218, 16
      %v3269 = vrot.slane %v3267, 5
      %v3270 = vsel %vm289, %v3265, %v3269
      %v3272 = vshrl.u32 %v3219, 16
      %v3274 = vrot.slane %v3272, 4
      %v3275 = vshll.u32 %v3219, 16
      %v3277 = vrot.slane %v3275, 5
      %v3278 = vor.u32 %v3274, %v3277
      %v3279 = vrot.slane %v3278, 4
      %v3281 = vshll.u32 %v3220, 16
      %v3283 = vrot.slane %v3281, 5
      %v3284 = vsel %vm289, %v3279, %v3283
      %v3286 = vshrl.u32 %v3221, 16
      %v3288 = vrot.slane %v3286, 4
      %v3289 = vshll.u32 %v3221, 16
      %v3291 = vrot.slane %v3289, 5
      %v3292 = vor.u32 %v3288, %v3291
      %v3293 = vrot.slane %v3292, 4
      %v3295 = vshll.u32 %v3222, 16
      %v3297 = vrot.slane %v3295, 5
      %v3298 = vsel %vm289, %v3293, %v3297
      %v3300 = vshrl.u32 %v3223, 16
      %v3302 = vrot.slane %v3300, 4
      %v3303 = vshll.u32 %v3223, 16
      %v3305 = vrot.slane %v3303, 5
      %v3306 = vor.u32 %v3302, %v3305
      %v3307 = vrot.slane %v3306, 4
      %v3309 = vshll.u32 %v3224, 16
      %v3311 = vrot.slane %v3309, 5
      %v3312 = vsel %vm289, %v3307, %v3311
      %v3314 = vshrl.u32 %v3225, 16
      %v3316 = vrot.slane %v3314, 4
      %v3317 = vshll.u32 %v3225, 16
      %v3319 = vrot.slane %v3317, 5
      %v3320 = vor.u32 %v3316, %v3319
      %v3321 = vrot.slane %v3320, 4
      %v3323 = vshll.u32 %v3226, 16
      %v3325 = vrot.slane %v3323, 5
      %v3326 = vsel %vm289, %v3321, %v3325
      %v3328 = vshrl.u32 %v3227, 16
      %v3330 = vrot.slane %v3328, 4
      %v3331 = vshll.u32 %v3227, 16
      %v3333 = vrot.slane %v3331, 5
      %v3334 = vor.u32 %v3330, %v3333
      %v3335 = vrot.slane %v3334, 4
      %v3337 = vshll.u32 %v3228, 16
      %v3339 = vrot.slane %v3337, 5
      %v3340 = vsel %vm289, %v3335, %v3339
      %v3349 = vunpack.c.l.bf16 %v3242
      %v3350 = vunpack.c.l.bf16 %v3256
      %v3351 = vunpack.c.l.bf16 %v3270
      %v3352 = vunpack.c.l.bf16 %v3284
      %v3353 = vunpack.c.l.bf16 %v3298
      %v3354 = vunpack.c.l.bf16 %v3312
      %v3355 = vunpack.c.l.bf16 %v3326
      %v3356 = vunpack.c.l.bf16 %v3340
      %3365 = vrot.lane.b32.xlu0 %v3349, 100
      %v3366 = vpop.permute.xlu0 %3365
      %3367 = vrot.lane.b32.xlu0 %v3350, 100
      %v3368 = vpop.permute.xlu0 %3367
      %3369 = vrot.lane.b32.xlu0 %v3351, 100
      %v3370 = vpop.permute.xlu0 %3369
      %3371 = vrot.lane.b32.xlu0 %v3352, 100
      %v3372 = vpop.permute.xlu0 %3371
      %3373 = vrot.lane.b32.xlu0 %v3353, 100
      %v3374 = vpop.permute.xlu0 %3373
      %3375 = vrot.lane.b32.xlu0 %v3354, 100
      %v3376 = vpop.permute.xlu0 %3375
      %3377 = vrot.lane.b32.xlu0 %v3355, 100
      %v3378 = vpop.permute.xlu0 %3377
      %3379 = vrot.lane.b32.xlu0 %v3356, 100
      %v3380 = vpop.permute.xlu0 %3379
      %vm3389 = vcmask 851744
      %3390 = vst.msk [vmem:[#allocation2] sm:$0xff] %vm3389, %v3366
      %3391 = vst.msk [vmem:[#allocation2 + $0x8] sm:$0xff] %vm3389, %v3368
      %3392 = vst.msk [vmem:[#allocation2 + $0x10] sm:$0xff] %vm3389, %v3370
      %3393 = vst.msk [vmem:[#allocation2 + $0x18] sm:$0xff] %vm3389, %v3372
      %3394 = vst.msk [vmem:[#allocation2 + $0x20] sm:$0xff] %vm3389, %v3374
      %3395 = vst.msk [vmem:[#allocation2 + $0x28] sm:$0xff] %vm3389, %v3376
      %3396 = vst.msk [vmem:[#allocation2 + $0x30] sm:$0xff] %vm3389, %v3378
      %3397 = vst.msk [vmem:[#allocation2 + $0x38] sm:$0xff] %vm3389, %v3380
      %v3398 = vld [vmem:[%s3155] sm:$0xe]
      %v3399 = vld [vmem:[%s3155 + $0x4] sm:$0x1]
      %v3400 = vld [vmem:[%s3155 + $0x8] sm:$0xe]
      %v3401 = vld [vmem:[%s3155 + $0xc] sm:$0x1]
      %v3402 = vld [vmem:[%s3155 + $0x10] sm:$0xe]
      %v3403 = vld [vmem:[%s3155 + $0x14] sm:$0x1]
      %v3404 = vld [vmem:[%s3155 + $0x18] sm:$0xe]
      %v3405 = vld [vmem:[%s3155 + $0x1c] sm:$0x1]
      %v3406 = vld [vmem:[%s3155 + $0x20] sm:$0xe]
      %v3407 = vld [vmem:[%s3155 + $0x24] sm:$0x1]
      %v3408 = vld [vmem:[%s3155 + $0x28] sm:$0xe]
      %v3409 = vld [vmem:[%s3155 + $0x2c] sm:$0x1]
      %v3410 = vld [vmem:[%s3155 + $0x30] sm:$0xe]
      %v3411 = vld [vmem:[%s3155 + $0x34] sm:$0x1]
      %v3412 = vld [vmem:[%s3155 + $0x38] sm:$0xe]
      %v3413 = vld [vmem:[%s3155 + $0x3c] sm:$0x1]
      %v3430 = vrot.slane %v3398, 5
      %v3431 = vrot.slane %v3430, 4
      %v3432 = vrot.slane %v3399, 5
      %v3433 = vsel %vm493, %v3431, %v3432
      %v3434 = vrot.slane %v3400, 5
      %v3435 = vrot.slane %v3434, 4
      %v3436 = vrot.slane %v3401, 5
      %v3437 = vsel %vm493, %v3435, %v3436
      %v3438 = vrot.slane %v3402, 5
      %v3439 = vrot.slane %v3438, 4
      %v3440 = vrot.slane %v3403, 5
      %v3441 = vsel %vm493, %v3439, %v3440
      %v3442 = vrot.slane %v3404, 5
      %v3443 = vrot.slane %v3442, 4
      %v3444 = vrot.slane %v3405, 5
      %v3445 = vsel %vm493, %v3443, %v3444
      %v3446 = vrot.slane %v3406, 5
      %v3447 = vrot.slane %v3446, 4
      %v3448 = vrot.slane %v3407, 5
      %v3449 = vsel %vm493, %v3447, %v3448
      %v3450 = vrot.slane %v3408, 5
      %v3451 = vrot.slane %v3450, 4
      %v3452 = vrot.slane %v3409, 5
      %v3453 = vsel %vm493, %v3451, %v3452
      %v3454 = vrot.slane %v3410, 5
      %v3455 = vrot.slane %v3454, 4
      %v3456 = vrot.slane %v3411, 5
      %v3457 = vsel %vm493, %v3455, %v3456
      %v3458 = vrot.slane %v3412, 5
      %v3459 = vrot.slane %v3458, 4
      %v3460 = vrot.slane %v3413, 5
      %v3461 = vsel %vm493, %v3459, %v3460
      %v3470 = vunpack.c.l.bf16 %v3433
      %v3471 = vunpack.c.l.bf16 %v3437
      %v3472 = vunpack.c.l.bf16 %v3441
      %v3473 = vunpack.c.l.bf16 %v3445
      %v3474 = vunpack.c.l.bf16 %v3449
      %v3475 = vunpack.c.l.bf16 %v3453
      %v3476 = vunpack.c.l.bf16 %v3457
      %v3477 = vunpack.c.l.bf16 %v3461
      %3486 = vrot.lane.b32.xlu0 %v3470, 104
      %v3487 = vpop.permute.xlu0 %3486
      %3488 = vrot.lane.b32.xlu0 %v3471, 104
      %v3489 = vpop.permute.xlu0 %3488
      %3490 = vrot.lane.b32.xlu0 %v3472, 104
      %v3491 = vpop.permute.xlu0 %3490
      %3492 = vrot.lane.b32.xlu0 %v3473, 104
      %v3493 = vpop.permute.xlu0 %3492
      %3494 = vrot.lane.b32.xlu0 %v3474, 104
      %v3495 = vpop.permute.xlu0 %3494
      %3496 = vrot.lane.b32.xlu0 %v3475, 104
      %v3497 = vpop.permute.xlu0 %3496
      %3498 = vrot.lane.b32.xlu0 %v3476, 104
      %v3499 = vpop.permute.xlu0 %3498
      %3500 = vrot.lane.b32.xlu0 %v3477, 104
      %v3501 = vpop.permute.xlu0 %3500
      %vm3510 = vcmask 884544
      %3511 = vst.msk [vmem:[#allocation2] sm:$0xff] %vm3510, %v3487
      %3512 = vst.msk [vmem:[#allocation2 + $0x8] sm:$0xff] %vm3510, %v3489
      %3513 = vst.msk [vmem:[#allocation2 + $0x10] sm:$0xff] %vm3510, %v3491
      %3514 = vst.msk [vmem:[#allocation2 + $0x18] sm:$0xff] %vm3510, %v3493
      %3515 = vst.msk [vmem:[#allocation2 + $0x20] sm:$0xff] %vm3510, %v3495
      %3516 = vst.msk [vmem:[#allocation2 + $0x28] sm:$0xff] %vm3510, %v3497
      %3517 = vst.msk [vmem:[#allocation2 + $0x30] sm:$0xff] %vm3510, %v3499
      %3518 = vst.msk [vmem:[#allocation2 + $0x38] sm:$0xff] %vm3510, %v3501
      %v3519 = vld [vmem:[#allocation2] sm:$0xff]
      %v3520 = vld [vmem:[#allocation2 + $0x8] sm:$0xff]
      %v3521 = vld [vmem:[#allocation2 + $0x10] sm:$0xff]
      %v3522 = vld [vmem:[#allocation2 + $0x18] sm:$0xff]
      %v3523 = vld [vmem:[#allocation2 + $0x20] sm:$0xff]
      %v3524 = vld [vmem:[#allocation2 + $0x28] sm:$0xff]
      %v3525 = vld [vmem:[#allocation2 + $0x30] sm:$0xff]
      %v3526 = vld [vmem:[#allocation2 + $0x38] sm:$0xff]
      %v3527 = vpack.c.bf16 %v3520, %v3519
      %v3528 = vpack.c.bf16 %v3522, %v3521
      %v3529 = vpack.c.bf16 %v3524, %v3523
      %v3530 = vpack.c.bf16 %v3526, %v3525
      %v3531 = vld [vmem:[%s1] sm:$0xf]
      %v3532 = vld [vmem:[%s1 + $0x4] sm:$0xf]
      %v3533 = vld [vmem:[%s1 + $0x8] sm:$0xf]
      %v3534 = vld [vmem:[%s1 + $0xc] sm:$0xf]
      %v3535 = vld [vmem:[%s1 + $0x10] sm:$0xf]
      %v3536 = vld [vmem:[%s1 + $0x14] sm:$0xf]
      %v3537 = vld [vmem:[%s1 + $0x18] sm:$0xf]
      %v3538 = vld [vmem:[%s1 + $0x1c] sm:$0xf]
      %v3539 = vld [vmem:[%s1 + $0x20] sm:$0xf]
      %v3540 = vld [vmem:[%s1 + $0x24] sm:$0xf]
      %v3541 = vld [vmem:[%s1 + $0x28] sm:$0xf]
      %v3542 = vld [vmem:[%s1 + $0x2c] sm:$0xf]
      %v3543 = vld [vmem:[%s1 + $0x30] sm:$0xf]
      %v3544 = vld [vmem:[%s1 + $0x34] sm:$0x3]
      %v3559 = vunpack.c.l.b16 %v3531
      %v3560 = vunpack.c.l.b16 %v3532
      %v3561 = vunpack.c.l.b16 %v3533
      %v3562 = vunpack.c.l.b16 %v3534
      %v3563 = vunpack.c.l.b16 %v3535
      %v3564 = vunpack.c.l.b16 %v3536
      %v3565 = vunpack.c.l.b16 %v3537
      %v3566 = vunpack.c.l.b16 %v3538
      %v3567 = vunpack.c.l.b16 %v3539
      %v3568 = vunpack.c.l.b16 %v3540
      %v3569 = vunpack.c.l.b16 %v3541
      %v3570 = vunpack.c.l.b16 %v3542
      %v3571 = vunpack.c.l.b16 %v3543
      %v3572 = vunpack.c.l.b16 %v3544
      %v3573 = vpack.c.b16 %v3560, %v3559
      %v3574 = vpack.c.b16 %v3562, %v3561
      %v3575 = vpack.c.b16 %v3564, %v3563
      %v3576 = vpack.c.b16 %v3566, %v3565
      %v3577 = vpack.c.b16 %v3568, %v3567
      %v3578 = vpack.c.b16 %v3570, %v3569
      %v3579 = vpack.c.b16 %v3572, %v3571
      %vm3586 = vcmask 883712
      %v3588 = vsel %vm3586, %v3527, 0
      %v3591 = vsel %vm3586, %v3528, 0
      %v3594 = vsel %vm3586, %v3529, 0
      %v3597 = vsel %vm3586, %v3530, 0
      %vm3599 = vcmask 1045504
      %v3601 = vsel %vm3599, %v3579, 0
      %3603 = vmatpush.bf16.msra.mxu0 0
      %3604 = vmatpush.bf16.msra.mxu0 %v3601
      %3605 = vmatpush.bf16.msra.mxu0 %v3578
      %3606 = vmatpush.bf16.msra.mxu0 %v3577
      %3607 = vmatpush.bf16.msra.mxu0 %v3576
      %3608 = vmatpush.bf16.msra.mxu0 %v3575
      %3609 = vmatpush.bf16.msra.mxu0 %v3574
      %3610 = vmatpush.bf16.msra.mxu0 %v3573
      %3611 = vmatmul.bf16.gmra.mxu0 %v3588
      %v3612 = vpop.f32.mrf.mxu0
      %v3613 = vadd.f32 0.0, %v3612
      %v3614 = vpop.f32.mrf.mxu0
      %v3615 = vadd.f32 0.0, %v3614
      %3616 = vmatmul.bf16.gmra.mxu0 %v3591
      %v3617 = vpop.f32.mrf.mxu0
      %v3618 = vadd.f32 0.0, %v3617
      %v3619 = vpop.f32.mrf.mxu0
      %v3620 = vadd.f32 0.0, %v3619
      %3621 = vmatmul.bf16.gmra.mxu0 %v3594
      %v3622 = vpop.f32.mrf.mxu0
      %v3623 = vadd.f32 0.0, %v3622
      %v3624 = vpop.f32.mrf.mxu0
      %v3625 = vadd.f32 0.0, %v3624
      %3626 = vmatmul.bf16.gmra.mxu0 %v3597
      %v3627 = vpop.f32.mrf.mxu0
      %v3628 = vadd.f32 0.0, %v3627
      %v3629 = vpop.f32.mrf.mxu0
      %v3630 = vadd.f32 0.0, %v3629
      %3631 = vdwg.mxu0
      %v3632 = vpack.c.bf16 %v3613, %v3613
      %v3633 = vpack.c.bf16 %v3615, %v3615
      %v3634 = vpack.c.bf16 %v3618, %v3618
      %v3635 = vpack.c.bf16 %v3620, %v3620
      %v3636 = vpack.c.bf16 %v3623, %v3623
      %v3637 = vpack.c.bf16 %v3625, %v3625
      %v3638 = vpack.c.bf16 %v3628, %v3628
      %v3639 = vpack.c.bf16 %v3630, %v3630
      %vm3640 = vcmask 60416
      %3641 = vst.msk [vmem:[%s227] sm:$0xf] %vm3640, %v3632
      %3642 = vst.msk [vmem:[%s227 + $0x4] sm:$0xf] %vm3640, %v3633
      %3643 = vst.msk [vmem:[%s227 + $0x8] sm:$0xf] %vm3640, %v3634
      %3644 = vst.msk [vmem:[%s227 + $0xc] sm:$0xf] %vm3640, %v3635
      %3645 = vst.msk [vmem:[%s227 + $0x10] sm:$0xf] %vm3640, %v3636
      %3646 = vst.msk [vmem:[%s227 + $0x14] sm:$0xf] %vm3640, %v3637
      %3647 = vst.msk [vmem:[%s227 + $0x18] sm:$0xf] %vm3640, %v3638
      %3648 = vst.msk [vmem:[%s227 + $0x1c] sm:$0xf] %vm3640, %v3639
      %v3649 = vadd.f32 %v3613, %v3615
      %v3650 = vadd.f32 %v3649, %v3618
      %v3651 = vadd.f32 %v3650, %v3620
      %v3652 = vadd.f32 %v3651, %v3623
      %v3653 = vadd.f32 %v3652, %v3625
      %v3654 = vadd.f32 %v3653, %v3628
      %v3655 = vadd.f32 %v3654, %v3630
      %v3656 = vrot.slane %v3655, 4
      %v3657 = vadd.f32 %v3655, %v3656
      %v3658 = vrot.slane %v3657, 2
      %v3659 = vadd.f32 %v3657, %v3658
      %v3660 = vrot.slane %v3659, 1
      %v3661 = vadd.f32 %v3659, %v3660
      %v3662 = vmul.f32 %v3613, %v3613
      %v3663 = vmul.f32 %v3615, %v3615
      %v3664 = vmul.f32 %v3618, %v3618
      %v3665 = vmul.f32 %v3620, %v3620
      %v3666 = vmul.f32 %v3623, %v3623
      %v3667 = vmul.f32 %v3625, %v3625
      %v3668 = vmul.f32 %v3628, %v3628
      %v3669 = vmul.f32 %v3630, %v3630
      %v3670 = vadd.f32 %v3662, %v3663
      %v3671 = vadd.f32 %v3670, %v3664
      %v3672 = vadd.f32 %v3671, %v3665
      %v3673 = vadd.f32 %v3672, %v3666
      %v3674 = vadd.f32 %v3673, %v3667
      %v3675 = vadd.f32 %v3674, %v3668
      %v3676 = vadd.f32 %v3675, %v3669
      %v3677 = vrot.slane %v3676, 4
      %v3678 = vadd.f32 %v3676, %v3677
      %v3679 = vrot.slane %v3678, 2
      %v3680 = vadd.f32 %v3678, %v3679
      %v3681 = vrot.slane %v3680, 1
      %v3682 = vadd.f32 %v3680, %v3681
      %vm3683 = vcmask 1040384
      %v3684 = vsel %vm3683, %v3661, %v3682
      %3685 = vst [vmem:[%s238] sm:$0x3] %v3684
      %p3686 = scmp.lt.s32.totalorder %s20, 1
      %s3687 = scalar_select %p3686, %s20, 1
      %p3688 = scmp.lt.s32.totalorder %s21, 7
      %s3689 = scalar_select %p3688, %s21, 7
      %p3690 = scmp.lt.s32.totalorder %s22, 0
      %s3691 = scalar_select %p3690, %s22, 0
      %s3692 = smul.addr %s3691, 8
      %s3693 = smul.addr %s3689, 8
      %s3694 = sadd.s32 %s3692, %s3693
      %s3695 = smul.addr %s3687, 64
      %s3696 = sadd.s32 %s3694, %s3695
      %s3697 = smul.addr %s3696, 4
      %s3698 = scalar_lea.vmem %s2, %s3697
      %p3699 = scmp.lt.s32.totalorder %s20, 1
      %s3700 = scalar_select %p3699, %s20, 1
      %p3701 = scmp.lt.s32.totalorder %s21, 7
      %s3702 = scalar_select %p3701, %s21, 7
      %p3703 = scmp.lt.s32.totalorder %s22, 0
      %s3704 = scalar_select %p3703, %s22, 0
      %s3705 = sadd.s32 %s3704, %s3702
      %s3706 = smul.addr %s3700, 8
      %s3707 = sadd.s32 %s3705, %s3706
      %s3708 = smul.addr %s3707, 2
      %s3709 = scalar_lea.vmem %s3, %s3708
      // Predicated region
      $region29: #{conv3d_bn_relu.2} parent=27 // pred_check
        %p3710 = pneg %p103
      $region30: #{conv3d_bn_relu.2} parent=27 // pred_check_branch
        %3712 = sbr.rel (%p3710) target = $region32
      $region31: #{conv3d_bn_relu.2} parent=27 // pred_region
        _
      $region32: #{conv3d_bn_relu.2} parent=27 // pred_fallthru
        _
      // Predicated region
      $region33: #{conv3d_bn_relu.2} parent=27 // pred_check
        %p3713 = pneg %p133
      $region34: #{conv3d_bn_relu.2} parent=27 // pred_check_branch
        %3715 = sbr.rel (%p3713) target = $region36
      $region35: #{conv3d_bn_relu.2} parent=27 // pred_region
        _
      $region36: #{conv3d_bn_relu.2} parent=27 // pred_fallthru
        _
    $region28: #{conv3d_bn_relu.2} parent=5 // pred_fallthru
      _
    %p3716 = scmp.le.s32.totalorder 2, %s10
    // Predicated region
    $region37: #{conv3d_bn_relu.2} parent=5 // pred_check
      %p3717 = pneg %p3716
    $region38: #{conv3d_bn_relu.2} parent=5 // pred_check_branch
      %3719 = sbr.rel (%p3717) target = $region40
    $region39: #{conv3d_bn_relu.2} parent=5 // pred_region
      %s3720 = ssub.s32 %s10, 2
      // Predicated region
      $region41: #{conv3d_bn_relu.2} parent=39 // pred_check
        %p3721 = pneg %p109
      $region42: #{conv3d_bn_relu.2} parent=39 // pred_check_branch
        %3723 = sbr.rel (%p3721) target = $region44
      $region43: #{conv3d_bn_relu.2} parent=39 // pred_region
        %p3724 = scmp.lt.s32.totalorder %s23, 1
        %s3725 = scalar_select %p3724, %s23, 1
        %p3726 = scmp.lt.s32.totalorder %s24, 7
        %s3727 = scalar_select %p3726, %s24, 7
        %p3728 = scmp.lt.s32.totalorder %s25, 0
        %s3729 = scalar_select %p3728, %s25, 0
        %s3730 = smul.addr %s3729, 8
        %s3731 = smul.addr %s3727, 8
        %s3732 = sadd.s32 %s3730, %s3731
        %s3733 = smul.addr %s3725, 64
        %s3734 = sadd.s32 %s3732, %s3733
        %s3735 = smul.addr %s3734, 4
        %s3736 = scalar_lea.vmem %s2, %s3735
      $region44: #{conv3d_bn_relu.2} parent=39 // pred_fallthru
        _
      // Predicated region
      $region45: #{conv3d_bn_relu.2} parent=39 // pred_check
        %p3737 = pneg %p139
      $region46: #{conv3d_bn_relu.2} parent=39 // pred_check_branch
        %3739 = sbr.rel (%p3737) target = $region48
      $region47: #{conv3d_bn_relu.2} parent=39 // pred_region
        %p3740 = scmp.lt.s32.totalorder %s23, 1
        %s3741 = scalar_select %p3740, %s23, 1
        %p3742 = scmp.lt.s32.totalorder %s24, 7
        %s3743 = scalar_select %p3742, %s24, 7
        %p3744 = scmp.lt.s32.totalorder %s25, 0
        %s3745 = scalar_select %p3744, %s25, 0
        %s3746 = sadd.s32 %s3745, %s3743
        %s3747 = smul.addr %s3741, 8
        %s3748 = sadd.s32 %s3746, %s3747
        %s3749 = smul.addr %s3748, 2
        %s3750 = scalar_lea.vmem %s3, %s3749
      $region48: #{conv3d_bn_relu.2} parent=39 // pred_fallthru
        _
    $region40: #{conv3d_bn_relu.2} parent=5 // pred_fallthru
      _
  $region6: #{conv3d_bn_relu.2} parent=0 // loop_footer
    %s14 = sadd.s32 1, %s10
  $region7: #{conv3d_bn_relu.2} parent=0 // loop_footer_branch
    %9 = sbr.rel target = $region3
  $region8: #{conv3d_bn_relu.2} parent=0 // loop_exit
    _

</llo_original>
